<compile_context>
chip_gen: v7x
topology: tpu7x:2x2x1
jax: 0.10.0
libtpu: 0.0.40
codegen_flags: <defaults>
</compile_context>

<pallas_src>
import jax
import jax.numpy as jnp
from jax.experimental import pallas as pl
from jax.experimental.pallas import tpu as pltpu

KS = (3, 4, 5)          # conv kernel heights (hard-coded in CNN_Text)
CO = 100                # conv out-channels (hard-coded in CNN_Text)
NUM_CLASSES = 5         # classifier output size


def _toulmin_kernel(emb_ref, cw_ref, cb_ref, wc_ref, bc_ref, out_ref):
    # emb_ref: (TS, B, W, D) bf16 block of embedded sentences
    # cw_ref:  (sum(KS), D, CO) bf16 packed conv weights
    # cb_ref:  (len(KS), 1, CO) f32 packed conv biases
    # wc_ref:  (len(KS), CO, NUM_CLASSES) f32 classifier weight (per branch)
    # bc_ref:  (1, NUM_CLASSES) f32 classifier bias
    # out_ref: (TS, B, NUM_CLASSES) f32 logits
    TS, B, W, D = emb_ref.shape
    M = TS * B
    # Upcast once; shifted slices / reshapes happen in f32 layout, operands are
    # cast back to bf16 right before the MXU dots (f32 accumulation).
    x = emb_ref[...].astype(jnp.float32).reshape(M, W, D)

    logits = jnp.zeros((M, NUM_CLASSES), jnp.float32)
    off = 0
    for idx, K in enumerate(KS):
        T = W - K + 1                                   # conv output length
        acc = jnp.zeros((M * T, CO), jnp.float32)
        for k in range(K):                              # (K,D) conv == K shifted matmuls
            sl = x[:, k:k + T, :].reshape(M * T, D).astype(jnp.bfloat16)
            acc = acc + jnp.dot(sl, cw_ref[off + k],
                                preferred_element_type=jnp.float32)
        acc = jnp.maximum(acc + cb_ref[idx], 0.0)       # bias + ReLU, one VPU pass
        feat = jnp.max(acc.reshape(M, T, CO), axis=1)   # max-pool over T -> (M, Co)
        logits = logits + jnp.dot(feat, wc_ref[idx],
                                  preferred_element_type=jnp.float32)
        off += K
    logits = logits + bc_ref[...]                       # (1, 5) broadcast
    out_ref[...] = logits.reshape(TS, B, NUM_CLASSES)


def toulmin_cnn_forward(paragraphs, params):
    """paragraphs: int32 (B, S, W) token ids -> (B, S, 5) float32 logits."""
    embed_table = params["embed"]                       # (V, D) f32
    cw, cb = params["conv_packed"]                      # (sum(KS), D, Co), (3, 1, Co)
    wc, bc = params["cls"]                              # (3, Co, 5), (1, 5)

    B, S, W = paragraphs.shape
    D = embed_table.shape[1]

    # Sentence-block size: amortize per-grid-step overhead and fill the MXU M
    # dimension, while keeping >= 2 grid steps for dual-TC chips (v7x).
    if S >= 2:
        n_steps = max(2, -(-S // 32))
    else:
        n_steps = 1
    ts = -(-S // n_steps)
    s_pad = n_steps * ts

    # Gather embeddings directly in (S, B, W, D) order: transpose the *small*
    # int32 id tensor, not the embedded activation. Pad S with token 0.
    ids = jnp.transpose(paragraphs, (1, 0, 2))          # (S, B, W)
    if s_pad != S:
        ids = jnp.pad(ids, ((0, s_pad - S), (0, 0), (0, 0)))
    emb = embed_table[ids].astype(jnp.bfloat16)         # (S_pad, B, W, D)
    cw = cw.astype(jnp.bfloat16)

    out = pl.pallas_call(
        _toulmin_kernel,
        out_shape=jax.ShapeDtypeStruct((s_pad, B, NUM_CLASSES), jnp.float32),
        grid=(n_steps,),
        in_specs=[
            pl.BlockSpec((ts, B, W, D), lambda s: (s, 0, 0, 0)),
            pl.BlockSpec((sum(KS), D, CO), lambda s: (0, 0, 0)),
            pl.BlockSpec((len(KS), 1, CO), lambda s: (0, 0, 0)),
            pl.BlockSpec((len(KS), CO, NUM_CLASSES), lambda s: (0, 0, 0)),
            pl.BlockSpec((1, NUM_CLASSES), lambda s: (0, 0)),
        ],
        out_specs=pl.BlockSpec((ts, B, NUM_CLASSES), lambda s: (s, 0, 0)),
        compiler_params=pltpu.CompilerParams(
            dimension_semantics=("parallel",)),
    )(emb, cw, cb, wc, bc)

    out = out[:S]                                       # drop S padding
    return jnp.transpose(out, (1, 0, 2))                # tiny (S,B,5) -> (B,S,5)


def init_params(key, vocab_size, embed_size):
    # embed_size must equal len(KS)*CO for the classifier matmul to be valid
    assert embed_size == len(KS) * CO
    keys = jax.random.split(key, 8)
    params = {}
    # "pretrained" embedding table (synthetic, deterministic)
    params["embed"] = 0.1 * jax.random.normal(
        keys[0], (vocab_size, embed_size), jnp.float32)
    # Conv2d(1, Co, (K, D)) weights stored as (K, D, Co), packed along K
    ws, bs = [], []
    for i, K in enumerate(KS):
        bound = 1.0 / float(K * embed_size) ** 0.5
        ws.append(jax.random.uniform(keys[1 + i], (K, embed_size, CO),
                                     jnp.float32, -bound, bound))
        bs.append(jax.random.uniform(keys[4 + i], (1, CO),
                                     jnp.float32, -bound, bound))
    params["conv_packed"] = (jnp.concatenate(ws, axis=0),   # (3+4+5, D, Co)
                             jnp.stack(bs, axis=0))         # (3, 1, Co)
    # classifier: Linear(embed_size, 5), weight ~ U(-0.1, 0.1), bias = 0
    wc = jax.random.uniform(keys[7], (len(KS) * CO, NUM_CLASSES),
                            jnp.float32, -0.1, 0.1)          # stored as W^T
    wc = wc.reshape(len(KS), CO, NUM_CLASSES)                # per-branch blocks
    bc = jnp.zeros((1, NUM_CLASSES), jnp.float32)
    params["cls"] = (wc, bc)
    return params


if __name__ == "__main__":
    vocab_size = 50
    embed_size = len(KS) * CO        # 300, required by the module structure
    hidden_size = 32                 # stored by the module but unused in forward
    B, S, W = 2, 3, 8                # batch, max_sent_seq, max_word_seq (W >= 5)

    key = jax.random.PRNGKey(0)
    pkey, ikey = jax.random.split(key)
    params = init_params(pkey, vocab_size, embed_size)
    paragraphs = jax.random.randint(ikey, (B, S, W), 0, vocab_size,
                                    dtype=jnp.int32)

    out = toulmin_cnn_forward(paragraphs, params)
    out = jax.block_until_ready(out)
    assert out.shape == (B, S, NUM_CLASSES) and out.dtype == jnp.float32
    print("KERNEL_OK")
</pallas_src>

<mosaic_0001>
module attributes {stable_mosaic.version = 11 : i64} {
  func.func @_toulmin_kernel(%arg0: i32, %arg1: memref<2x2x8x300xbf16, #tpu.memory_space<vmem>>, %arg2: memref<12x300x100xbf16, #tpu.memory_space<vmem>>, %arg3: memref<3x1x100xf32, #tpu.memory_space<vmem>>, %arg4: memref<3x100x5xf32, #tpu.memory_space<vmem>>, %arg5: memref<1x5xf32, #tpu.memory_space<vmem>>, %arg6: memref<2x2x5xf32, #tpu.memory_space<vmem>>) attributes {dimension_semantics = [#tpu.dimension_semantics<parallel>], iteration_bounds = array<i64: 2>, scalar_prefetch = 0 : i64, scratch_operands = 0 : i64, tpu.core_type = #tpu.core_type<tc>, window_params = [{transform_indices = @transform_0, window_bounds = array<i64: 2, 2, 8, 300>}, {pipeline_mode = #tpu.pipeline_mode<synchronous>, transform_indices = @transform_1, window_bounds = array<i64: 12, 300, 100>}, {pipeline_mode = #tpu.pipeline_mode<synchronous>, transform_indices = @transform_2, window_bounds = array<i64: 3, 1, 100>}, {pipeline_mode = #tpu.pipeline_mode<synchronous>, transform_indices = @transform_3, window_bounds = array<i64: 3, 100, 5>}, {pipeline_mode = #tpu.pipeline_mode<synchronous>, transform_indices = @transform_4, window_bounds = array<i64: 1, 5>}, {transform_indices = @transform_5, window_bounds = array<i64: 2, 2, 5>}]} {
    %c0 = arith.constant 0 : index
    %c0_0 = arith.constant 0 : index
    %c0_1 = arith.constant 0 : index
    %c0_2 = arith.constant 0 : index
    %0 = vector.load %arg1[%c0, %c0_0, %c0_1, %c0_2] : memref<2x2x8x300xbf16, #tpu.memory_space<vmem>>, vector<2x2x8x300xbf16>
    %1 = arith.extf %0 : vector<2x2x8x300xbf16> to vector<2x2x8x300xf32>
    %2 = vector.shape_cast %1 : vector<2x2x8x300xf32> to vector<4x8x300xf32>
    %cst = arith.constant 0.000000e+00 : f32
    %3 = vector.broadcast %cst : f32 to vector<4x5xf32>
    %cst_3 = arith.constant 0.000000e+00 : f32
    %4 = vector.broadcast %cst_3 : f32 to vector<24x100xf32>
    %5 = vector.extract_strided_slice %2 {offsets = [0, 0, 0], sizes = [4, 6, 300], strides = [1, 1, 1]} : vector<4x8x300xf32> to vector<4x6x300xf32>
    %6 = vector.shape_cast %5 : vector<4x6x300xf32> to vector<24x300xf32>
    %7 = arith.truncf %6 : vector<24x300xf32> to vector<24x300xbf16>
    %c0_4 = arith.constant 0 : index
    %c0_5 = arith.constant 0 : index
    %c0_6 = arith.constant 0 : index
    %8 = vector.load %arg2[%c0_4, %c0_5, %c0_6] : memref<12x300x100xbf16, #tpu.memory_space<vmem>>, vector<1x300x100xbf16>
    %9 = vector.shape_cast %8 : vector<1x300x100xbf16> to vector<300x100xbf16>
    %cst_7 = arith.constant dense<0.000000e+00> : vector<24x100xf32>
    %10 = tpu.matmul %7, %9, %cst_7 {dimension_numbers = #tpu.dot_dimension_numbers<[1], [0], [0], [1], [0, 0, 1, 1], [], []>} : vector<24x300xbf16>, vector<300x100xbf16>, vector<24x100xf32> -> vector<24x100xf32>
    %11 = arith.addf %4, %10 : vector<24x100xf32>
    %12 = vector.extract_strided_slice %2 {offsets = [0, 1, 0], sizes = [4, 6, 300], strides = [1, 1, 1]} : vector<4x8x300xf32> to vector<4x6x300xf32>
    %13 = vector.shape_cast %12 : vector<4x6x300xf32> to vector<24x300xf32>
    %14 = arith.truncf %13 : vector<24x300xf32> to vector<24x300xbf16>
    %c1 = arith.constant 1 : index
    %c0_8 = arith.constant 0 : index
    %c0_9 = arith.constant 0 : index
    %15 = vector.load %arg2[%c1, %c0_8, %c0_9] : memref<12x300x100xbf16, #tpu.memory_space<vmem>>, vector<1x300x100xbf16>
    %16 = vector.shape_cast %15 : vector<1x300x100xbf16> to vector<300x100xbf16>
    %cst_10 = arith.constant dense<0.000000e+00> : vector<24x100xf32>
    %17 = tpu.matmul %14, %16, %cst_10 {dimension_numbers = #tpu.dot_dimension_numbers<[1], [0], [0], [1], [0, 0, 1, 1], [], []>} : vector<24x300xbf16>, vector<300x100xbf16>, vector<24x100xf32> -> vector<24x100xf32>
    %18 = arith.addf %11, %17 : vector<24x100xf32>
    %19 = vector.extract_strided_slice %2 {offsets = [0, 2, 0], sizes = [4, 6, 300], strides = [1, 1, 1]} : vector<4x8x300xf32> to vector<4x6x300xf32>
    %20 = vector.shape_cast %19 : vector<4x6x300xf32> to vector<24x300xf32>
    %21 = arith.truncf %20 : vector<24x300xf32> to vector<24x300xbf16>
    %c2 = arith.constant 2 : index
    %c0_11 = arith.constant 0 : index
    %c0_12 = arith.constant 0 : index
    %22 = vector.load %arg2[%c2, %c0_11, %c0_12] : memref<12x300x100xbf16, #tpu.memory_space<vmem>>, vector<1x300x100xbf16>
    %23 = vector.shape_cast %22 : vector<1x300x100xbf16> to vector<300x100xbf16>
    %cst_13 = arith.constant dense<0.000000e+00> : vector<24x100xf32>
    %24 = tpu.matmul %21, %23, %cst_13 {dimension_numbers = #tpu.dot_dimension_numbers<[1], [0], [0], [1], [0, 0, 1, 1], [], []>} : vector<24x300xbf16>, vector<300x100xbf16>, vector<24x100xf32> -> vector<24x100xf32>
    %25 = arith.addf %18, %24 : vector<24x100xf32>
    %c0_14 = arith.constant 0 : index
    %c0_15 = arith.constant 0 : index
    %c0_16 = arith.constant 0 : index
    %26 = vector.load %arg3[%c0_14, %c0_15, %c0_16] : memref<3x1x100xf32, #tpu.memory_space<vmem>>, vector<1x1x100xf32>
    %27 = vector.shape_cast %26 : vector<1x1x100xf32> to vector<1x100xf32>
    %28 = vector.broadcast %27 : vector<1x100xf32> to vector<24x100xf32>
    %29 = arith.addf %25, %28 : vector<24x100xf32>
    %cst_17 = arith.constant 0.000000e+00 : f32
    %30 = vector.broadcast %cst_17 : f32 to vector<24x100xf32>
    %31 = arith.maximumf %29, %30 : vector<24x100xf32>
    %32 = vector.shape_cast %31 : vector<24x100xf32> to vector<4x6x100xf32>
    %cst_18 = arith.constant dense<0xFF800000> : vector<4x100xf32>
    %33 = vector.multi_reduction <maximumf>, %32, %cst_18 [1] : vector<4x6x100xf32> to vector<4x100xf32>
    %c0_19 = arith.constant 0 : index
    %c0_20 = arith.constant 0 : index
    %c0_21 = arith.constant 0 : index
    %34 = vector.load %arg4[%c0_19, %c0_20, %c0_21] : memref<3x100x5xf32, #tpu.memory_space<vmem>>, vector<1x100x5xf32>
    %35 = vector.shape_cast %34 : vector<1x100x5xf32> to vector<100x5xf32>
    %cst_22 = arith.constant dense<0.000000e+00> : vector<4x5xf32>
    %36 = tpu.matmul %33, %35, %cst_22 {dimension_numbers = #tpu.dot_dimension_numbers<[1], [0], [0], [1], [0, 0, 1, 1], [], []>} : vector<4x100xf32>, vector<100x5xf32>, vector<4x5xf32> -> vector<4x5xf32>
    %37 = arith.addf %3, %36 : vector<4x5xf32>
    %cst_23 = arith.constant 0.000000e+00 : f32
    %38 = vector.broadcast %cst_23 : f32 to vector<20x100xf32>
    %39 = vector.extract_strided_slice %2 {offsets = [0, 0, 0], sizes = [4, 5, 300], strides = [1, 1, 1]} : vector<4x8x300xf32> to vector<4x5x300xf32>
    %40 = vector.shape_cast %39 : vector<4x5x300xf32> to vector<20x300xf32>
    %41 = arith.truncf %40 : vector<20x300xf32> to vector<20x300xbf16>
    %c3 = arith.constant 3 : index
    %c0_24 = arith.constant 0 : index
    %c0_25 = arith.constant 0 : index
    %42 = vector.load %arg2[%c3, %c0_24, %c0_25] : memref<12x300x100xbf16, #tpu.memory_space<vmem>>, vector<1x300x100xbf16>
    %43 = vector.shape_cast %42 : vector<1x300x100xbf16> to vector<300x100xbf16>
    %cst_26 = arith.constant dense<0.000000e+00> : vector<20x100xf32>
    %44 = tpu.matmul %41, %43, %cst_26 {dimension_numbers = #tpu.dot_dimension_numbers<[1], [0], [0], [1], [0, 0, 1, 1], [], []>} : vector<20x300xbf16>, vector<300x100xbf16>, vector<20x100xf32> -> vector<20x100xf32>
    %45 = arith.addf %38, %44 : vector<20x100xf32>
    %46 = vector.extract_strided_slice %2 {offsets = [0, 1, 0], sizes = [4, 5, 300], strides = [1, 1, 1]} : vector<4x8x300xf32> to vector<4x5x300xf32>
    %47 = vector.shape_cast %46 : vector<4x5x300xf32> to vector<20x300xf32>
    %48 = arith.truncf %47 : vector<20x300xf32> to vector<20x300xbf16>
    %c4 = arith.constant 4 : index
    %c0_27 = arith.constant 0 : index
    %c0_28 = arith.constant 0 : index
    %49 = vector.load %arg2[%c4, %c0_27, %c0_28] : memref<12x300x100xbf16, #tpu.memory_space<vmem>>, vector<1x300x100xbf16>
    %50 = vector.shape_cast %49 : vector<1x300x100xbf16> to vector<300x100xbf16>
    %cst_29 = arith.constant dense<0.000000e+00> : vector<20x100xf32>
    %51 = tpu.matmul %48, %50, %cst_29 {dimension_numbers = #tpu.dot_dimension_numbers<[1], [0], [0], [1], [0, 0, 1, 1], [], []>} : vector<20x300xbf16>, vector<300x100xbf16>, vector<20x100xf32> -> vector<20x100xf32>
    %52 = arith.addf %45, %51 : vector<20x100xf32>
    %53 = vector.extract_strided_slice %2 {offsets = [0, 2, 0], sizes = [4, 5, 300], strides = [1, 1, 1]} : vector<4x8x300xf32> to vector<4x5x300xf32>
    %54 = vector.shape_cast %53 : vector<4x5x300xf32> to vector<20x300xf32>
    %55 = arith.truncf %54 : vector<20x300xf32> to vector<20x300xbf16>
    %c5 = arith.constant 5 : index
    %c0_30 = arith.constant 0 : index
    %c0_31 = arith.constant 0 : index
    %56 = vector.load %arg2[%c5, %c0_30, %c0_31] : memref<12x300x100xbf16, #tpu.memory_space<vmem>>, vector<1x300x100xbf16>
    %57 = vector.shape_cast %56 : vector<1x300x100xbf16> to vector<300x100xbf16>
    %cst_32 = arith.constant dense<0.000000e+00> : vector<20x100xf32>
    %58 = tpu.matmul %55, %57, %cst_32 {dimension_numbers = #tpu.dot_dimension_numbers<[1], [0], [0], [1], [0, 0, 1, 1], [], []>} : vector<20x300xbf16>, vector<300x100xbf16>, vector<20x100xf32> -> vector<20x100xf32>
    %59 = arith.addf %52, %58 : vector<20x100xf32>
    %60 = vector.extract_strided_slice %2 {offsets = [0, 3, 0], sizes = [4, 5, 300], strides = [1, 1, 1]} : vector<4x8x300xf32> to vector<4x5x300xf32>
    %61 = vector.shape_cast %60 : vector<4x5x300xf32> to vector<20x300xf32>
    %62 = arith.truncf %61 : vector<20x300xf32> to vector<20x300xbf16>
    %c6 = arith.constant 6 : index
    %c0_33 = arith.constant 0 : index
    %c0_34 = arith.constant 0 : index
    %63 = vector.load %arg2[%c6, %c0_33, %c0_34] : memref<12x300x100xbf16, #tpu.memory_space<vmem>>, vector<1x300x100xbf16>
    %64 = vector.shape_cast %63 : vector<1x300x100xbf16> to vector<300x100xbf16>
    %cst_35 = arith.constant dense<0.000000e+00> : vector<20x100xf32>
    %65 = tpu.matmul %62, %64, %cst_35 {dimension_numbers = #tpu.dot_dimension_numbers<[1], [0], [0], [1], [0, 0, 1, 1], [], []>} : vector<20x300xbf16>, vector<300x100xbf16>, vector<20x100xf32> -> vector<20x100xf32>
    %66 = arith.addf %59, %65 : vector<20x100xf32>
    %c1_36 = arith.constant 1 : index
    %c0_37 = arith.constant 0 : index
    %c0_38 = arith.constant 0 : index
    %67 = vector.load %arg3[%c1_36, %c0_37, %c0_38] : memref<3x1x100xf32, #tpu.memory_space<vmem>>, vector<1x1x100xf32>
    %68 = vector.shape_cast %67 : vector<1x1x100xf32> to vector<1x100xf32>
    %69 = vector.broadcast %68 : vector<1x100xf32> to vector<20x100xf32>
    %70 = arith.addf %66, %69 : vector<20x100xf32>
    %cst_39 = arith.constant 0.000000e+00 : f32
    %71 = vector.broadcast %cst_39 : f32 to vector<20x100xf32>
    %72 = arith.maximumf %70, %71 : vector<20x100xf32>
    %73 = vector.shape_cast %72 : vector<20x100xf32> to vector<4x5x100xf32>
    %cst_40 = arith.constant dense<0xFF800000> : vector<4x100xf32>
    %74 = vector.multi_reduction <maximumf>, %73, %cst_40 [1] : vector<4x5x100xf32> to vector<4x100xf32>
    %c1_41 = arith.constant 1 : index
    %c0_42 = arith.constant 0 : index
    %c0_43 = arith.constant 0 : index
    %75 = vector.load %arg4[%c1_41, %c0_42, %c0_43] : memref<3x100x5xf32, #tpu.memory_space<vmem>>, vector<1x100x5xf32>
    %76 = vector.shape_cast %75 : vector<1x100x5xf32> to vector<100x5xf32>
    %cst_44 = arith.constant dense<0.000000e+00> : vector<4x5xf32>
    %77 = tpu.matmul %74, %76, %cst_44 {dimension_numbers = #tpu.dot_dimension_numbers<[1], [0], [0], [1], [0, 0, 1, 1], [], []>} : vector<4x100xf32>, vector<100x5xf32>, vector<4x5xf32> -> vector<4x5xf32>
    %78 = arith.addf %37, %77 : vector<4x5xf32>
    %cst_45 = arith.constant 0.000000e+00 : f32
    %79 = vector.broadcast %cst_45 : f32 to vector<16x100xf32>
    %80 = vector.extract_strided_slice %2 {offsets = [0, 0, 0], sizes = [4, 4, 300], strides = [1, 1, 1]} : vector<4x8x300xf32> to vector<4x4x300xf32>
    %81 = vector.shape_cast %80 : vector<4x4x300xf32> to vector<16x300xf32>
    %82 = arith.truncf %81 : vector<16x300xf32> to vector<16x300xbf16>
    %c7 = arith.constant 7 : index
    %c0_46 = arith.constant 0 : index
    %c0_47 = arith.constant 0 : index
    %83 = vector.load %arg2[%c7, %c0_46, %c0_47] : memref<12x300x100xbf16, #tpu.memory_space<vmem>>, vector<1x300x100xbf16>
    %84 = vector.shape_cast %83 : vector<1x300x100xbf16> to vector<300x100xbf16>
    %cst_48 = arith.constant dense<0.000000e+00> : vector<16x100xf32>
    %85 = tpu.matmul %82, %84, %cst_48 {dimension_numbers = #tpu.dot_dimension_numbers<[1], [0], [0], [1], [0, 0, 1, 1], [], []>} : vector<16x300xbf16>, vector<300x100xbf16>, vector<16x100xf32> -> vector<16x100xf32>
    %86 = arith.addf %79, %85 : vector<16x100xf32>
    %87 = vector.extract_strided_slice %2 {offsets = [0, 1, 0], sizes = [4, 4, 300], strides = [1, 1, 1]} : vector<4x8x300xf32> to vector<4x4x300xf32>
    %88 = vector.shape_cast %87 : vector<4x4x300xf32> to vector<16x300xf32>
    %89 = arith.truncf %88 : vector<16x300xf32> to vector<16x300xbf16>
    %c8 = arith.constant 8 : index
    %c0_49 = arith.constant 0 : index
    %c0_50 = arith.constant 0 : index
    %90 = vector.load %arg2[%c8, %c0_49, %c0_50] : memref<12x300x100xbf16, #tpu.memory_space<vmem>>, vector<1x300x100xbf16>
    %91 = vector.shape_cast %90 : vector<1x300x100xbf16> to vector<300x100xbf16>
    %cst_51 = arith.constant dense<0.000000e+00> : vector<16x100xf32>
    %92 = tpu.matmul %89, %91, %cst_51 {dimension_numbers = #tpu.dot_dimension_numbers<[1], [0], [0], [1], [0, 0, 1, 1], [], []>} : vector<16x300xbf16>, vector<300x100xbf16>, vector<16x100xf32> -> vector<16x100xf32>
    %93 = arith.addf %86, %92 : vector<16x100xf32>
    %94 = vector.extract_strided_slice %2 {offsets = [0, 2, 0], sizes = [4, 4, 300], strides = [1, 1, 1]} : vector<4x8x300xf32> to vector<4x4x300xf32>
    %95 = vector.shape_cast %94 : vector<4x4x300xf32> to vector<16x300xf32>
    %96 = arith.truncf %95 : vector<16x300xf32> to vector<16x300xbf16>
    %c9 = arith.constant 9 : index
    %c0_52 = arith.constant 0 : index
    %c0_53 = arith.constant 0 : index
    %97 = vector.load %arg2[%c9, %c0_52, %c0_53] : memref<12x300x100xbf16, #tpu.memory_space<vmem>>, vector<1x300x100xbf16>
    %98 = vector.shape_cast %97 : vector<1x300x100xbf16> to vector<300x100xbf16>
    %cst_54 = arith.constant dense<0.000000e+00> : vector<16x100xf32>
    %99 = tpu.matmul %96, %98, %cst_54 {dimension_numbers = #tpu.dot_dimension_numbers<[1], [0], [0], [1], [0, 0, 1, 1], [], []>} : vector<16x300xbf16>, vector<300x100xbf16>, vector<16x100xf32> -> vector<16x100xf32>
    %100 = arith.addf %93, %99 : vector<16x100xf32>
    %101 = vector.extract_strided_slice %2 {offsets = [0, 3, 0], sizes = [4, 4, 300], strides = [1, 1, 1]} : vector<4x8x300xf32> to vector<4x4x300xf32>
    %102 = vector.shape_cast %101 : vector<4x4x300xf32> to vector<16x300xf32>
    %103 = arith.truncf %102 : vector<16x300xf32> to vector<16x300xbf16>
    %c10 = arith.constant 10 : index
    %c0_55 = arith.constant 0 : index
    %c0_56 = arith.constant 0 : index
    %104 = vector.load %arg2[%c10, %c0_55, %c0_56] : memref<12x300x100xbf16, #tpu.memory_space<vmem>>, vector<1x300x100xbf16>
    %105 = vector.shape_cast %104 : vector<1x300x100xbf16> to vector<300x100xbf16>
    %cst_57 = arith.constant dense<0.000000e+00> : vector<16x100xf32>
    %106 = tpu.matmul %103, %105, %cst_57 {dimension_numbers = #tpu.dot_dimension_numbers<[1], [0], [0], [1], [0, 0, 1, 1], [], []>} : vector<16x300xbf16>, vector<300x100xbf16>, vector<16x100xf32> -> vector<16x100xf32>
    %107 = arith.addf %100, %106 : vector<16x100xf32>
    %108 = vector.extract_strided_slice %2 {offsets = [0, 4, 0], sizes = [4, 4, 300], strides = [1, 1, 1]} : vector<4x8x300xf32> to vector<4x4x300xf32>
    %109 = vector.shape_cast %108 : vector<4x4x300xf32> to vector<16x300xf32>
    %110 = arith.truncf %109 : vector<16x300xf32> to vector<16x300xbf16>
    %c11 = arith.constant 11 : index
    %c0_58 = arith.constant 0 : index
    %c0_59 = arith.constant 0 : index
    %111 = vector.load %arg2[%c11, %c0_58, %c0_59] : memref<12x300x100xbf16, #tpu.memory_space<vmem>>, vector<1x300x100xbf16>
    %112 = vector.shape_cast %111 : vector<1x300x100xbf16> to vector<300x100xbf16>
    %cst_60 = arith.constant dense<0.000000e+00> : vector<16x100xf32>
    %113 = tpu.matmul %110, %112, %cst_60 {dimension_numbers = #tpu.dot_dimension_numbers<[1], [0], [0], [1], [0, 0, 1, 1], [], []>} : vector<16x300xbf16>, vector<300x100xbf16>, vector<16x100xf32> -> vector<16x100xf32>
    %114 = arith.addf %107, %113 : vector<16x100xf32>
    %c2_61 = arith.constant 2 : index
    %c0_62 = arith.constant 0 : index
    %c0_63 = arith.constant 0 : index
    %115 = vector.load %arg3[%c2_61, %c0_62, %c0_63] : memref<3x1x100xf32, #tpu.memory_space<vmem>>, vector<1x1x100xf32>
    %116 = vector.shape_cast %115 : vector<1x1x100xf32> to vector<1x100xf32>
    %117 = vector.broadcast %116 : vector<1x100xf32> to vector<16x100xf32>
    %118 = arith.addf %114, %117 : vector<16x100xf32>
    %cst_64 = arith.constant 0.000000e+00 : f32
    %119 = vector.broadcast %cst_64 : f32 to vector<16x100xf32>
    %120 = arith.maximumf %118, %119 : vector<16x100xf32>
    %121 = vector.shape_cast %120 : vector<16x100xf32> to vector<4x4x100xf32>
    %cst_65 = arith.constant dense<0xFF800000> : vector<4x100xf32>
    %122 = vector.multi_reduction <maximumf>, %121, %cst_65 [1] : vector<4x4x100xf32> to vector<4x100xf32>
    %c2_66 = arith.constant 2 : index
    %c0_67 = arith.constant 0 : index
    %c0_68 = arith.constant 0 : index
    %123 = vector.load %arg4[%c2_66, %c0_67, %c0_68] : memref<3x100x5xf32, #tpu.memory_space<vmem>>, vector<1x100x5xf32>
    %124 = vector.shape_cast %123 : vector<1x100x5xf32> to vector<100x5xf32>
    %cst_69 = arith.constant dense<0.000000e+00> : vector<4x5xf32>
    %125 = tpu.matmul %122, %124, %cst_69 {dimension_numbers = #tpu.dot_dimension_numbers<[1], [0], [0], [1], [0, 0, 1, 1], [], []>} : vector<4x100xf32>, vector<100x5xf32>, vector<4x5xf32> -> vector<4x5xf32>
    %126 = arith.addf %78, %125 : vector<4x5xf32>
    %c0_70 = arith.constant 0 : index
    %c0_71 = arith.constant 0 : index
    %127 = vector.load %arg5[%c0_70, %c0_71] : memref<1x5xf32, #tpu.memory_space<vmem>>, vector<1x5xf32>
    %128 = vector.broadcast %127 : vector<1x5xf32> to vector<4x5xf32>
    %129 = arith.addf %126, %128 : vector<4x5xf32>
    %130 = vector.shape_cast %129 : vector<4x5xf32> to vector<2x2x5xf32>
    %c0_72 = arith.constant 0 : index
    %c0_73 = arith.constant 0 : index
    %c0_74 = arith.constant 0 : index
    %131 = vector.load %arg6[%c0_72, %c0_73, %c0_74] : memref<2x2x5xf32, #tpu.memory_space<vmem>>, vector<2x2x5xf32>
    tpu.vector_store %arg6[%c0_72, %c0_73, %c0_74], %130 {strides = array<i32>} : memref<2x2x5xf32, #tpu.memory_space<vmem>>, vector<2x2x5xf32>,
    return
  }
  func.func @transform_0(%arg0: i32) -> (i32, i32, i32, i32) {
    %c0_i32 = arith.constant 0 : i32
    %c0_i32_0 = arith.constant 0 : i32
    %c0_i32_1 = arith.constant 0 : i32
    %c0_i32_2 = arith.constant 0 : i32
    return %arg0, %c0_i32, %c0_i32_0, %c0_i32_1 : i32, i32, i32, i32
  }
  func.func @transform_1(%arg0: i32) -> (i32, i32, i32) {
    %c0_i32 = arith.constant 0 : i32
    %c0_i32_0 = arith.constant 0 : i32
    %c0_i32_1 = arith.constant 0 : i32
    %c0_i32_2 = arith.constant 0 : i32
    return %c0_i32, %c0_i32_0, %c0_i32_1 : i32, i32, i32
  }
  func.func @transform_2(%arg0: i32) -> (i32, i32, i32) {
    %c0_i32 = arith.constant 0 : i32
    %c0_i32_0 = arith.constant 0 : i32
    %c0_i32_1 = arith.constant 0 : i32
    %c0_i32_2 = arith.constant 0 : i32
    return %c0_i32, %c0_i32_0, %c0_i32_1 : i32, i32, i32
  }
  func.func @transform_3(%arg0: i32) -> (i32, i32, i32) {
    %c0_i32 = arith.constant 0 : i32
    %c0_i32_0 = arith.constant 0 : i32
    %c0_i32_1 = arith.constant 0 : i32
    %c0_i32_2 = arith.constant 0 : i32
    return %c0_i32, %c0_i32_0, %c0_i32_1 : i32, i32, i32
  }
  func.func @transform_4(%arg0: i32) -> (i32, i32) {
    %c0_i32 = arith.constant 0 : i32
    %c0_i32_0 = arith.constant 0 : i32
    %c0_i32_1 = arith.constant 0 : i32
    return %c0_i32, %c0_i32_0 : i32, i32
  }
  func.func @transform_5(%arg0: i32) -> (i32, i32, i32) {
    %c0_i32 = arith.constant 0 : i32
    %c0_i32_0 = arith.constant 0 : i32
    %c0_i32_1 = arith.constant 0 : i32
    return %arg0, %c0_i32, %c0_i32_0 : i32, i32, i32
  }
}

</mosaic_0001>

<llo_original>
// kernel: tpu_custom_call.1
$region0: #{tpu_custom_call.1}
  #allocation0 [shape = 'u32[]', space=smem, size = 0x4, offset = 0x4, fixed_abs, tag = 'smem constant byte address 0x4 - core index']
  #allocation1 [shape = 'u32[144,128]{1,0:T(1,128)}', space=vmem, size = 0x12000, scoped, tag = 'internal scratch']
  %s0 = inlined_call_operand.vmem [shape: bf16[4,2,8,300], index: 0, kind: input, shape index: {}]
  %s1 = inlined_call_operand.hbm [shape: bf16[12,300,100], index: 1, kind: input, shape index: {}]
  %s2 = inlined_call_operand.vmem [shape: f32[3,1,100], index: 2, kind: input, shape index: {}]
  %s3 = inlined_call_operand.vmem [shape: f32[3,100,5], index: 3, kind: input, shape index: {}]
  %s4 = inlined_call_operand.vmem [shape: f32[1,5], index: 4, kind: input, shape index: {}]
  %s5 = inlined_call_operand.hbm [shape: f32[4,2,5], index: 5, kind: output, shape index: {}]
  %s6 = sld [smem:[#allocation0]]
  $region57: #{tpu_custom_call.1} parent=0
    _
  %s8 = ssub.s32 1, %s6
  %s9 = scalar_select 0, %s8, %s6
  $region1: #{tpu_custom_call.1} parent=0
    #allocation2 [shape = 'u8[933888]{0}', space=vmem, size = 0xe4000, scoped, tag = 'input window, operand 1, single buffered']
    #allocation3 [shape = 's32[2]{0}', space=sflag, size = 0x8, scoped, tag = 'scoped memory for tpu_custom_call.1']
    #allocation4 [shape = 's32[2]{0}', space=sflag, size = 0x8, scoped, tag = 'scoped memory for tpu_custom_call.1']
    #allocation5 [shape = 'u8[4096]{0}', space=vmem, size = 0x1000, scoped, tag = 'output window, operand 0']
    %10 = vsyncpa [#allocation3], 0
    %11 = vsyncpa [#allocation4], 0
    %s12 = scalar_lea.sflag [#allocation4], 1
    %13 = vsyncpa %s12, 0
    loop: start=0, step=1, limit=4
    $region2: #{tpu_custom_call.1} parent=1 // loop_pre_header
      _
    $region3: #{tpu_custom_call.1} parent=1 // loop_header
      %s15 = sphi 0, %s19
      %p16 = scmp.ge.s32.totalorder %s15, 4
      %s25 = sphi 0, %s27
      %s28 = sphi 0, %s25
      %s29 = sphi 0, %s28
      %s45 = sphi 0, %s29
      %s49 = sphi 0, %s49
      %s51 = sphi 0, %s49
      %s52 = sphi 0, %s51
      %s66 = sphi 0, %s52
      %s70 = sphi 0, %s70
      %s72 = sphi 0, %s70
      %s73 = sphi 0, %s72
      %s87 = sphi 0, %s73
      %s91 = sphi 0, %s91
      %s93 = sphi 0, %s91
      %s94 = sphi 0, %s93
      %s108 = sphi 0, %s94
      %s112 = sphi 0, %s112
      %s114 = sphi 0, %s112
      %s115 = sphi 0, %s114
      %s129 = sphi 0, %s115
      %s135 = sphi 0, %s137
      %s138 = sphi 0, %s135
      %s139 = sphi 0, %s138
      %s155 = sphi 0, %s139
    $region4: #{tpu_custom_call.1} parent=1 // loop_header_branch
      %18 = sbr.rel (%p16) target = $region8
    $region5: #{tpu_custom_call.1} parent=1 // loop_body
      %s20 = ssub.s32 %s15, 1
      %s21 = ssub.s32 %s15, 2
      %s22 = sadd.s32 %s15, 1
      %s23 = ssub.s32 %s15, %s22
      %p24 = scmp.eq.s32.totalorder %s23, 0
      %s26 = sadd.s32 %s25, 1
      %s27 = scalar_select %p24, %s25, %s26
      %p30 = pneg %p24
      %p31 = scmp.eq.s32.totalorder %s15, 1
      %p32 = por %p30, %p31
      %p33 = scmp.ne.s32.totalorder %s25, %s28
      %p34 = scmp.eq.s32.totalorder %s15, 0
      %p35 = por %p33, %p34
      %p36 = scmp.ne.s32.totalorder %s25, %s28
      %p37 = scmp.eq.s32.totalorder %s20, 1
      %p38 = por %p36, %p37
      %p39 = scmp.ne.s32.totalorder %s28, %s29
      %p40 = scmp.eq.s32.totalorder %s20, 0
      %p41 = por %p39, %p40
      %p42 = scmp.ne.s32.totalorder %s28, %s29
      %p43 = scmp.eq.s32.totalorder %s21, 1
      %p44 = por %p42, %p43
      %p46 = scmp.ne.s32.totalorder %s29, %s45
      %p47 = scmp.eq.s32.totalorder %s21, 0
      %p48 = por %p46, %p47
      %s50 = sadd.s32 %s49, 1
      %p53 = scmp.eq.s32.totalorder %s15, 1
      %p54 = scmp.ne.s32.totalorder %s49, %s51
      %p55 = scmp.eq.s32.totalorder %s15, 0
      %p56 = por %p54, %p55
      %p57 = scmp.ne.s32.totalorder %s49, %s51
      %p58 = scmp.eq.s32.totalorder %s20, 1
      %p59 = por %p57, %p58
      %p60 = scmp.ne.s32.totalorder %s51, %s52
      %p61 = scmp.eq.s32.totalorder %s20, 0
      %p62 = por %p60, %p61
      %p63 = scmp.ne.s32.totalorder %s51, %s52
      %p64 = scmp.eq.s32.totalorder %s21, 1
      %p65 = por %p63, %p64
      %p67 = scmp.ne.s32.totalorder %s52, %s66
      %p68 = scmp.eq.s32.totalorder %s21, 0
      %p69 = por %p67, %p68
      %s71 = sadd.s32 %s70, 1
      %p74 = scmp.eq.s32.totalorder %s15, 1
      %p75 = scmp.ne.s32.totalorder %s70, %s72
      %p76 = scmp.eq.s32.totalorder %s15, 0
      %p77 = por %p75, %p76
      %p78 = scmp.ne.s32.totalorder %s70, %s72
      %p79 = scmp.eq.s32.totalorder %s20, 1
      %p80 = por %p78, %p79
      %p81 = scmp.ne.s32.totalorder %s72, %s73
      %p82 = scmp.eq.s32.totalorder %s20, 0
      %p83 = por %p81, %p82
      %p84 = scmp.ne.s32.totalorder %s72, %s73
      %p85 = scmp.eq.s32.totalorder %s21, 1
      %p86 = por %p84, %p85
      %p88 = scmp.ne.s32.totalorder %s73, %s87
      %p89 = scmp.eq.s32.totalorder %s21, 0
      %p90 = por %p88, %p89
      %s92 = sadd.s32 %s91, 1
      %p95 = scmp.eq.s32.totalorder %s15, 1
      %p96 = scmp.ne.s32.totalorder %s91, %s93
      %p97 = scmp.eq.s32.totalorder %s15, 0
      %p98 = por %p96, %p97
      %p99 = scmp.ne.s32.totalorder %s91, %s93
      %p100 = scmp.eq.s32.totalorder %s20, 1
      %p101 = por %p99, %p100
      %p102 = scmp.ne.s32.totalorder %s93, %s94
      %p103 = scmp.eq.s32.totalorder %s20, 0
      %p104 = por %p102, %p103
      %p105 = scmp.ne.s32.totalorder %s93, %s94
      %p106 = scmp.eq.s32.totalorder %s21, 1
      %p107 = por %p105, %p106
      %p109 = scmp.ne.s32.totalorder %s94, %s108
      %p110 = scmp.eq.s32.totalorder %s21, 0
      %p111 = por %p109, %p110
      %s113 = sadd.s32 %s112, 1
      %p116 = scmp.eq.s32.totalorder %s15, 1
      %p117 = scmp.ne.s32.totalorder %s112, %s114
      %p118 = scmp.eq.s32.totalorder %s15, 0
      %p119 = por %p117, %p118
      %p120 = scmp.ne.s32.totalorder %s112, %s114
      %p121 = scmp.eq.s32.totalorder %s20, 1
      %p122 = por %p120, %p121
      %p123 = scmp.ne.s32.totalorder %s114, %s115
      %p124 = scmp.eq.s32.totalorder %s20, 0
      %p125 = por %p123, %p124
      %p126 = scmp.ne.s32.totalorder %s114, %s115
      %p127 = scmp.eq.s32.totalorder %s21, 1
      %p128 = por %p126, %p127
      %p130 = scmp.ne.s32.totalorder %s115, %s129
      %p131 = scmp.eq.s32.totalorder %s21, 0
      %p132 = por %p130, %p131
      %s133 = ssub.s32 %s15, %s22
      %p134 = scmp.eq.s32.totalorder %s133, 0
      %s136 = sadd.s32 %s135, 1
      %s137 = scalar_select %p134, %s135, %s136
      %p140 = pneg %p134
      %p141 = scmp.eq.s32.totalorder %s15, 1
      %p142 = por %p140, %p141
      %p143 = scmp.ne.s32.totalorder %s135, %s138
      %p144 = scmp.eq.s32.totalorder %s15, 0
      %p145 = por %p143, %p144
      %p146 = scmp.ne.s32.totalorder %s135, %s138
      %p147 = scmp.eq.s32.totalorder %s20, 1
      %p148 = por %p146, %p147
      %p149 = scmp.ne.s32.totalorder %s138, %s139
      %p150 = scmp.eq.s32.totalorder %s20, 0
      %p151 = por %p149, %p150
      %p152 = scmp.ne.s32.totalorder %s138, %s139
      %p153 = scmp.eq.s32.totalorder %s21, 1
      %p154 = por %p152, %p153
      %p156 = scmp.ne.s32.totalorder %s139, %s155
      %p157 = scmp.eq.s32.totalorder %s21, 0
      %p158 = por %p156, %p157
      %p159 = scmp.le.s32.totalorder 1, %s15
      %p160 = scmp.lt.s32.totalorder %s15, 3
      %p161 = pnand %p159, %p160
      %p162 = pneg %p161
      // Predicated region
      $region9: #{tpu_custom_call.1} parent=5 // pred_check
        _
      $region10: #{tpu_custom_call.1} parent=5 // pred_check_branch
        %164 = sbr.rel (%p161) target = $region12
      $region11: #{tpu_custom_call.1} parent=5 // pred_region
        %s165 = ssub.s32 %s15, 1
        // Predicated region
        $region13: #{tpu_custom_call.1} parent=11 // pred_check
          %p166 = pneg %p62
        $region14: #{tpu_custom_call.1} parent=11 // pred_check_branch
          %168 = sbr.rel (%p166) target = $region16
        $region15: #{tpu_custom_call.1} parent=11 // pred_region
          %s170 = ssub.s32 29184, 29184
          %171 = vsyncadd [#allocation3], %s170
          %s172 = sshll.u32 [#allocation2], 4
          %s173 = int_to_ptr.vmem [resolvable:$true] %s172
          %178 = dma.hbm_to_vmem [thread:$0]  %s1, 29184, %s173, [#allocation3], 64, 64, 4
        $region16: #{tpu_custom_call.1} parent=11 // pred_fallthru
          _
        // Predicated region
        $region17: #{tpu_custom_call.1} parent=11 // pred_check
          %p179 = pneg %p83
        $region18: #{tpu_custom_call.1} parent=11 // pred_check_branch
          %181 = sbr.rel (%p179) target = $region20
        $region19: #{tpu_custom_call.1} parent=11 // pred_region
          _
        $region20: #{tpu_custom_call.1} parent=11 // pred_fallthru
          _
        // Predicated region
        $region21: #{tpu_custom_call.1} parent=11 // pred_check
          %p182 = pneg %p104
        $region22: #{tpu_custom_call.1} parent=11 // pred_check_branch
          %184 = sbr.rel (%p182) target = $region24
        $region23: #{tpu_custom_call.1} parent=11 // pred_region
          _
        $region24: #{tpu_custom_call.1} parent=11 // pred_fallthru
          _
        // Predicated region
        $region25: #{tpu_custom_call.1} parent=11 // pred_check
          %p185 = pneg %p125
        $region26: #{tpu_custom_call.1} parent=11 // pred_check_branch
          %187 = sbr.rel (%p185) target = $region28
        $region27: #{tpu_custom_call.1} parent=11 // pred_region
          _
        $region28: #{tpu_custom_call.1} parent=11 // pred_fallthru
          _
      $region12: #{tpu_custom_call.1} parent=5 // pred_fallthru
        _
      %p188 = scmp.lt.s32.totalorder %s15, 2
      // Predicated region
      $region29: #{tpu_custom_call.1} parent=5 // pred_check
        %p189 = pneg %p188
      $region30: #{tpu_custom_call.1} parent=5 // pred_check_branch
        %191 = sbr.rel (%p189) target = $region32
      $region31: #{tpu_custom_call.1} parent=5 // pred_region
        // Predicated region
        $region33: #{tpu_custom_call.1} parent=31 // pred_check
          %p192 = pneg %p35
        $region34: #{tpu_custom_call.1} parent=31 // pred_check_branch
          %194 = sbr.rel (%p192) target = $region36
        $region35: #{tpu_custom_call.1} parent=31 // pred_region
          %s195 = smul.u32 2, %s15
          %p196 = scmp.lt.s32.totalorder %s195, 3
          %s197 = scalar_select %p196, %s195, 3
          %s198 = smul.addr %s197, 6
          %s199 = smul.addr %s198, 4
          %s200 = scalar_lea.vmem %s0, %s199
          %s201 = smul.u32 2, %s15
        $region36: #{tpu_custom_call.1} parent=31 // pred_fallthru
          _
      $region32: #{tpu_custom_call.1} parent=5 // pred_fallthru
        _
      %p202 = scmp.le.s32.totalorder 1, %s15
      %p203 = scmp.lt.s32.totalorder %s15, 3
      %p204 = pnand %p202, %p203
      %p205 = pneg %p204
      // Predicated region
      $region37: #{tpu_custom_call.1} parent=5 // pred_check
        _
      $region38: #{tpu_custom_call.1} parent=5 // pred_check_branch
        %207 = sbr.rel (%p204) target = $region40
      $region39: #{tpu_custom_call.1} parent=5 // pred_region
        %s208 = ssub.s32 %s15, 1
        // Predicated region
        $region41: #{tpu_custom_call.1} parent=39 // pred_check
          %p209 = pneg %p62
        $region42: #{tpu_custom_call.1} parent=39 // pred_check_branch
          %211 = sbr.rel (%p209) target = $region44
        $region43: #{tpu_custom_call.1} parent=39 // pred_region
          %212 = dma.done [#allocation3], 29184
        $region44: #{tpu_custom_call.1} parent=39 // pred_fallthru
          _
        %s213 = smul.u32 2, %s20
        %p214 = scmp.lt.s32.totalorder %s213, 3
        %s215 = scalar_select %p214, %s213, 3
        %s216 = smul.addr %s215, 6
        %s217 = smul.addr %s216, 4
        %s218 = scalar_lea.vmem %s0, %s217
        %p219 = pneg %p41
        %p220 = pneg %p38
        %p221 = pneg %p62
        %p222 = pneg %p59
        %p223 = pneg %p83
        %p224 = pneg %p80
        %p225 = pneg %p104
        %p226 = pneg %p101
        %p227 = pneg %p125
        %p228 = pneg %p122
        %p229 = pneg %p151
        %p230 = pneg %p148
        %s231 = sand.u32 %s138, 1
        %s232 = scalar_lea.sflag [#allocation4], %s231
        %s233 = sand.u32 %s138, 1
        %s234 = smul.addr %s233, 4
        %s235 = scalar_lea.vmem [#allocation5], %s234
        %s236 = smul.u32 2, %s20
        %p237 = scmp.lt.s32.totalorder %s236, 3
        %s238 = scalar_select %p237, %s236, 3
        %s239 = smul.addr %s238, 6
        %s240 = smul.addr %s239, 4
        %s241 = scalar_lea.vmem %s0, %s240
        %s242 = smul.u32 2, %s20
        %s243 = smul.u32 2, %s20
        %v245 = vld [vmem:[%s241] sm:$0xff]
        %v246 = vld [vmem:[%s241 + $0x8] sm:$0xf]
        %v247 = vld [vmem:[%s241 + $0xc] sm:$0xff]
        %v248 = vld [vmem:[%s241 + $0x14] sm:$0xf]
        %v249 = vld [vmem:[%s241 + $0x18] sm:$0xff]
        %v250 = vld [vmem:[%s241 + $0x20] sm:$0xf]
        %v251 = vld [vmem:[%s241 + $0x24] sm:$0xff]
        %v252 = vld [vmem:[%s241 + $0x2c] sm:$0xf]
        %v253 = vunpack.c.l.bf16 %v245
        %v254 = vunpack.c.h.bf16 %v245
        %v255 = vunpack.c.l.bf16 %v246
        %v256 = vunpack.c.l.bf16 %v247
        %v257 = vunpack.c.h.bf16 %v247
        %v258 = vunpack.c.l.bf16 %v248
        %v259 = vunpack.c.l.bf16 %v249
        %v260 = vunpack.c.h.bf16 %v249
        %v261 = vunpack.c.l.bf16 %v250
        %v262 = vunpack.c.l.bf16 %v251
        %v263 = vunpack.c.h.bf16 %v251
        %v264 = vunpack.c.l.bf16 %v252
        %v277 = vcombine.low %v253, %v254
        %v278 = vcombine.high %v253, %v254
        %v279 = vcombine.high %v255, %v255
        %v281 = vunpack.c.l.s4 1983009808
        %v282 = vunpack.c.0.s8 %v281
        %v283 = vlaneseq
        %v284 = vshrl.u32 %v283, 7
        %v285 = vsub.s32 %v282, %v284
        %v286 = vrot.slane %v277, %v285
        %v288 = vunpack.c.l.s4 1983009808
        %v289 = vunpack.c.0.s8 %v288
        %v290 = vlaneseq
        %v291 = vshrl.u32 %v290, 7
        %v292 = vsub.s32 %v289, %v291
        %v293 = vrot.slane %v278, %v292
        %v295 = vunpack.c.l.s4 1983009808
        %v296 = vunpack.c.0.s8 %v295
        %v297 = vlaneseq
        %v298 = vshrl.u32 %v297, 7
        %v299 = vsub.s32 %v296, %v298
        %v300 = vrot.slane %v255, %v299
        %v302 = vunpack.c.l.s4 1983009808
        %v303 = vunpack.c.0.s8 %v302
        %v304 = vlaneseq
        %v305 = vshrl.u32 %v304, 7
        %v306 = vsub.s32 %v303, %v305
        %v307 = vrot.slane %v279, %v306
        %v308 = vcombine.low %v286, %v300
        %v309 = vcombine.high %v286, %v300
        %v310 = vcombine.low %v293, %v307
        %v311 = vcombine.low %v256, %v257
        %v312 = vcombine.high %v256, %v257
        %v313 = vcombine.high %v258, %v258
        %v315 = vunpack.c.l.s4 1983009808
        %v316 = vunpack.c.0.s8 %v315
        %v317 = vlaneseq
        %v318 = vshrl.u32 %v317, 7
        %v319 = vsub.s32 %v316, %v318
        %v320 = vrot.slane %v311, %v319
        %v322 = vunpack.c.l.s4 1983009808
        %v323 = vunpack.c.0.s8 %v322
        %v324 = vlaneseq
        %v325 = vshrl.u32 %v324, 7
        %v326 = vsub.s32 %v323, %v325
        %v327 = vrot.slane %v312, %v326
        %v329 = vunpack.c.l.s4 1983009808
        %v330 = vunpack.c.0.s8 %v329
        %v331 = vlaneseq
        %v332 = vshrl.u32 %v331, 7
        %v333 = vsub.s32 %v330, %v332
        %v334 = vrot.slane %v258, %v333
        %v336 = vunpack.c.l.s4 1983009808
        %v337 = vunpack.c.0.s8 %v336
        %v338 = vlaneseq
        %v339 = vshrl.u32 %v338, 7
        %v340 = vsub.s32 %v337, %v339
        %v341 = vrot.slane %v313, %v340
        %v342 = vcombine.low %v320, %v334
        %v343 = vcombine.high %v320, %v334
        %v344 = vcombine.low %v327, %v341
        %v345 = vcombine.low %v259, %v260
        %v346 = vcombine.high %v259, %v260
        %v347 = vcombine.high %v261, %v261
        %v349 = vunpack.c.l.s4 1983009808
        %v350 = vunpack.c.0.s8 %v349
        %v351 = vlaneseq
        %v352 = vshrl.u32 %v351, 7
        %v353 = vsub.s32 %v350, %v352
        %v354 = vrot.slane %v345, %v353
        %v356 = vunpack.c.l.s4 1983009808
        %v357 = vunpack.c.0.s8 %v356
        %v358 = vlaneseq
        %v359 = vshrl.u32 %v358, 7
        %v360 = vsub.s32 %v357, %v359
        %v361 = vrot.slane %v346, %v360
        %v363 = vunpack.c.l.s4 1983009808
        %v364 = vunpack.c.0.s8 %v363
        %v365 = vlaneseq
        %v366 = vshrl.u32 %v365, 7
        %v367 = vsub.s32 %v364, %v366
        %v368 = vrot.slane %v261, %v367
        %v370 = vunpack.c.l.s4 1983009808
        %v371 = vunpack.c.0.s8 %v370
        %v372 = vlaneseq
        %v373 = vshrl.u32 %v372, 7
        %v374 = vsub.s32 %v371, %v373
        %v375 = vrot.slane %v347, %v374
        %v376 = vcombine.low %v354, %v368
        %v377 = vcombine.high %v354, %v368
        %v378 = vcombine.low %v361, %v375
        %v379 = vcombine.low %v262, %v263
        %v380 = vcombine.high %v262, %v263
        %v381 = vcombine.high %v264, %v264
        %v383 = vunpack.c.l.s4 1983009808
        %v384 = vunpack.c.0.s8 %v383
        %v385 = vlaneseq
        %v386 = vshrl.u32 %v385, 7
        %v387 = vsub.s32 %v384, %v386
        %v388 = vrot.slane %v379, %v387
        %v390 = vunpack.c.l.s4 1983009808
        %v391 = vunpack.c.0.s8 %v390
        %v392 = vlaneseq
        %v393 = vshrl.u32 %v392, 7
        %v394 = vsub.s32 %v391, %v393
        %v395 = vrot.slane %v380, %v394
        %v397 = vunpack.c.l.s4 1983009808
        %v398 = vunpack.c.0.s8 %v397
        %v399 = vlaneseq
        %v400 = vshrl.u32 %v399, 7
        %v401 = vsub.s32 %v398, %v400
        %v402 = vrot.slane %v264, %v401
        %v404 = vunpack.c.l.s4 1983009808
        %v405 = vunpack.c.0.s8 %v404
        %v406 = vlaneseq
        %v407 = vshrl.u32 %v406, 7
        %v408 = vsub.s32 %v405, %v407
        %v409 = vrot.slane %v381, %v408
        %v410 = vcombine.low %v388, %v402
        %v411 = vcombine.high %v388, %v402
        %v412 = vcombine.low %v395, %v409
        %v413 = vcombine.low %v308, %v309
        %v414 = vcombine.high %v308, %v309
        %v415 = vcombine.low %v310, %v342
        %v416 = vcombine.high %v310, %v342
        %v418 = vunpack.c.l.s4 1983009808
        %v419 = vunpack.c.0.s8 %v418
        %v420 = vlaneseq
        %v421 = vshrl.u32 %v420, 7
        %v422 = vsub.s32 %v419, %v421
        %v423 = vrot.slane %v413, %v422
        %v425 = vunpack.c.l.s4 1983009808
        %v426 = vunpack.c.0.s8 %v425
        %v427 = vlaneseq
        %v428 = vshrl.u32 %v427, 7
        %v429 = vsub.s32 %v426, %v428
        %v430 = vrot.slane %v414, %v429
        %v432 = vunpack.c.l.s4 1983009808
        %v433 = vunpack.c.0.s8 %v432
        %v434 = vlaneseq
        %v435 = vshrl.u32 %v434, 7
        %v436 = vsub.s32 %v433, %v435
        %v437 = vrot.slane %v415, %v436
        %v439 = vunpack.c.l.s4 1983009808
        %v440 = vunpack.c.0.s8 %v439
        %v441 = vlaneseq
        %v442 = vshrl.u32 %v441, 7
        %v443 = vsub.s32 %v440, %v442
        %v444 = vrot.slane %v416, %v443
        %v445 = vcombine.low %v423, %v437
        %v446 = vcombine.high %v423, %v437
        %v447 = vcombine.low %v430, %v444
        %v448 = vcombine.low %v343, %v344
        %v449 = vcombine.high %v343, %v344
        %v450 = vcombine.low %v376, %v377
        %v451 = vcombine.high %v376, %v377
        %v453 = vunpack.c.l.s4 1983009808
        %v454 = vunpack.c.0.s8 %v453
        %v455 = vlaneseq
        %v456 = vshrl.u32 %v455, 7
        %v457 = vsub.s32 %v454, %v456
        %v458 = vrot.slane %v448, %v457
        %v460 = vunpack.c.l.s4 1983009808
        %v461 = vunpack.c.0.s8 %v460
        %v462 = vlaneseq
        %v463 = vshrl.u32 %v462, 7
        %v464 = vsub.s32 %v461, %v463
        %v465 = vrot.slane %v449, %v464
        %v467 = vunpack.c.l.s4 1983009808
        %v468 = vunpack.c.0.s8 %v467
        %v469 = vlaneseq
        %v470 = vshrl.u32 %v469, 7
        %v471 = vsub.s32 %v468, %v470
        %v472 = vrot.slane %v450, %v471
        %v474 = vunpack.c.l.s4 1983009808
        %v475 = vunpack.c.0.s8 %v474
        %v476 = vlaneseq
        %v477 = vshrl.u32 %v476, 7
        %v478 = vsub.s32 %v475, %v477
        %v479 = vrot.slane %v451, %v478
        %v480 = vcombine.low %v458, %v472
        %v481 = vcombine.high %v458, %v472
        %v482 = vcombine.low %v465, %v479
        %v483 = vcombine.low %v378, %v410
        %v484 = vcombine.high %v378, %v410
        %v485 = vcombine.low %v411, %v412
        %v486 = vcombine.high %v411, %v412
        %v488 = vunpack.c.l.s4 1983009808
        %v489 = vunpack.c.0.s8 %v488
        %v490 = vlaneseq
        %v491 = vshrl.u32 %v490, 7
        %v492 = vsub.s32 %v489, %v491
        %v493 = vrot.slane %v483, %v492
        %v495 = vunpack.c.l.s4 1983009808
        %v496 = vunpack.c.0.s8 %v495
        %v497 = vlaneseq
        %v498 = vshrl.u32 %v497, 7
        %v499 = vsub.s32 %v496, %v498
        %v500 = vrot.slane %v484, %v499
        %v502 = vunpack.c.l.s4 1983009808
        %v503 = vunpack.c.0.s8 %v502
        %v504 = vlaneseq
        %v505 = vshrl.u32 %v504, 7
        %v506 = vsub.s32 %v503, %v505
        %v507 = vrot.slane %v485, %v506
        %v509 = vunpack.c.l.s4 1983009808
        %v510 = vunpack.c.0.s8 %v509
        %v511 = vlaneseq
        %v512 = vshrl.u32 %v511, 7
        %v513 = vsub.s32 %v510, %v512
        %v514 = vrot.slane %v486, %v513
        %v515 = vcombine.low %v493, %v507
        %v516 = vcombine.high %v493, %v507
        %v517 = vcombine.low %v500, %v514
        %v527 = vpack.c.bf16 %v480, %v445
        %v528 = vpack.c.bf16 %v481, %v446
        %v529 = vpack.c.bf16 %v482, %v447
        %v530 = vpack.c.bf16 %v515, %v515
        %v531 = vpack.c.bf16 %v516, %v516
        %v532 = vpack.c.bf16 %v517, %v517
        %v533 = vld [vmem:[#allocation2] sm:$0xf]
        %v534 = vld [vmem:[#allocation2 + $0x4] sm:$0xf]
        %v535 = vld [vmem:[#allocation2 + $0x8] sm:$0xf]
        %v536 = vld [vmem:[#allocation2 + $0xc] sm:$0xf]
        %v537 = vld [vmem:[#allocation2 + $0x10] sm:$0xf]
        %v538 = vld [vmem:[#allocation2 + $0x14] sm:$0xf]
        %v539 = vld [vmem:[#allocation2 + $0x18] sm:$0xf]
        %v540 = vld [vmem:[#allocation2 + $0x1c] sm:$0xf]
        %v541 = vld [vmem:[#allocation2 + $0x20] sm:$0xf]
        %v542 = vld [vmem:[#allocation2 + $0x24] sm:$0xf]
        %v543 = vld [vmem:[#allocation2 + $0x28] sm:$0xf]
        %v544 = vld [vmem:[#allocation2 + $0x2c] sm:$0xf]
        %v545 = vld [vmem:[#allocation2 + $0x30] sm:$0xf]
        %v546 = vld [vmem:[#allocation2 + $0x34] sm:$0xf]
        %v547 = vld [vmem:[#allocation2 + $0x38] sm:$0xf]
        %v548 = vld [vmem:[#allocation2 + $0x3c] sm:$0xf]
        %v549 = vld [vmem:[#allocation2 + $0x40] sm:$0xf]
        %v550 = vld [vmem:[#allocation2 + $0x44] sm:$0xf]
        %v551 = vld [vmem:[#allocation2 + $0x48] sm:$0xf]
        %v552 = vld [vmem:[#allocation2 + $0x4c] sm:$0xf]
        %v553 = vld [vmem:[#allocation2 + $0x50] sm:$0xf]
        %v554 = vld [vmem:[#allocation2 + $0x54] sm:$0xf]
        %v555 = vld [vmem:[#allocation2 + $0x58] sm:$0xf]
        %v556 = vld [vmem:[#allocation2 + $0x5c] sm:$0xf]
        %v557 = vld [vmem:[#allocation2 + $0x60] sm:$0xf]
        %v558 = vld [vmem:[#allocation2 + $0x64] sm:$0xf]
        %v559 = vld [vmem:[#allocation2 + $0x68] sm:$0xf]
        %v560 = vld [vmem:[#allocation2 + $0x6c] sm:$0xf]
        %v561 = vld [vmem:[#allocation2 + $0x70] sm:$0xf]
        %v562 = vld [vmem:[#allocation2 + $0x74] sm:$0xf]
        %v563 = vld [vmem:[#allocation2 + $0x78] sm:$0xf]
        %v564 = vld [vmem:[#allocation2 + $0x7c] sm:$0xf]
        %v565 = vld [vmem:[#allocation2 + $0x80] sm:$0xf]
        %v566 = vld [vmem:[#allocation2 + $0x84] sm:$0xf]
        %v567 = vld [vmem:[#allocation2 + $0x88] sm:$0xf]
        %v568 = vld [vmem:[#allocation2 + $0x8c] sm:$0xf]
        %v569 = vld [vmem:[#allocation2 + $0x90] sm:$0xf]
        %v570 = vld [vmem:[#allocation2 + $0x94] sm:$0x3]
        %v571 = vcombine.high %v293, %v307
        %v572 = vcombine.high %v327, %v341
        %v573 = vcombine.high %v361, %v375
        %v574 = vcombine.high %v395, %v409
        %vm575 = vcmask 1040384
        %vm576 = vcmask 1042434
        %vm577 = vmor %vm575, %vm576
        %vm578 = vcmask 1044484
        %vm579 = vmor %vm577, %vm578
        %vm580 = vcmask 1046534
        %vm581 = vmor %vm579, %vm580
        %v582 = vrot.slane %v308, 7
        %v583 = vrot.slane %v582, 2
        %v584 = vrot.slane %v309, 7
        %v585 = vsel %vm581, %v583, %v584
        %v586 = vrot.slane %v584, 2
        %v587 = vrot.slane %v310, 7
        %v588 = vsel %vm581, %v586, %v587
        %v589 = vrot.slane %v587, 2
        %v590 = vrot.slane %v571, 7
        %v591 = vsel %vm581, %v589, %v590
        %v592 = vrot.slane %v342, 7
        %v593 = vrot.slane %v592, 2
        %v594 = vrot.slane %v343, 7
        %v595 = vsel %vm581, %v593, %v594
        %v596 = vrot.slane %v594, 2
        %v597 = vrot.slane %v344, 7
        %v598 = vsel %vm581, %v596, %v597
        %v599 = vrot.slane %v597, 2
        %v600 = vrot.slane %v572, 7
        %v601 = vsel %vm581, %v599, %v600
        %v602 = vrot.slane %v376, 7
        %v603 = vrot.slane %v602, 2
        %v604 = vrot.slane %v377, 7
        %v605 = vsel %vm581, %v603, %v604
        %v606 = vrot.slane %v604, 2
        %v607 = vrot.slane %v378, 7
        %v608 = vsel %vm581, %v606, %v607
        %v609 = vrot.slane %v607, 2
        %v610 = vrot.slane %v573, 7
        %v611 = vsel %vm581, %v609, %v610
        %v612 = vrot.slane %v410, 7
        %v613 = vrot.slane %v612, 2
        %v614 = vrot.slane %v411, 7
        %v615 = vsel %vm581, %v613, %v614
        %v616 = vrot.slane %v614, 2
        %v617 = vrot.slane %v412, 7
        %v618 = vsel %vm581, %v616, %v617
        %v619 = vrot.slane %v617, 2
        %v620 = vrot.slane %v574, 7
        %v621 = vsel %vm581, %v619, %v620
        %v622 = vcombine.low %v585, %v588
        %v623 = vcombine.high %v585, %v588
        %v624 = vcombine.low %v591, %v595
        %v625 = vcombine.high %v591, %v595
        %v627 = vunpack.c.l.s4 1983009808
        %v628 = vunpack.c.0.s8 %v627
        %v629 = vlaneseq
        %v630 = vshrl.u32 %v629, 7
        %v631 = vsub.s32 %v628, %v630
        %v632 = vrot.slane %v622, %v631
        %v634 = vunpack.c.l.s4 1983009808
        %v635 = vunpack.c.0.s8 %v634
        %v636 = vlaneseq
        %v637 = vshrl.u32 %v636, 7
        %v638 = vsub.s32 %v635, %v637
        %v639 = vrot.slane %v623, %v638
        %v641 = vunpack.c.l.s4 1983009808
        %v642 = vunpack.c.0.s8 %v641
        %v643 = vlaneseq
        %v644 = vshrl.u32 %v643, 7
        %v645 = vsub.s32 %v642, %v644
        %v646 = vrot.slane %v624, %v645
        %v648 = vunpack.c.l.s4 1983009808
        %v649 = vunpack.c.0.s8 %v648
        %v650 = vlaneseq
        %v651 = vshrl.u32 %v650, 7
        %v652 = vsub.s32 %v649, %v651
        %v653 = vrot.slane %v625, %v652
        %v654 = vcombine.low %v632, %v646
        %v655 = vcombine.high %v632, %v646
        %v656 = vcombine.low %v639, %v653
        %v657 = vcombine.low %v598, %v601
        %v658 = vcombine.high %v598, %v601
        %v659 = vcombine.low %v605, %v608
        %v660 = vcombine.high %v605, %v608
        %v662 = vunpack.c.l.s4 1983009808
        %v663 = vunpack.c.0.s8 %v662
        %v664 = vlaneseq
        %v665 = vshrl.u32 %v664, 7
        %v666 = vsub.s32 %v663, %v665
        %v667 = vrot.slane %v657, %v666
        %v669 = vunpack.c.l.s4 1983009808
        %v670 = vunpack.c.0.s8 %v669
        %v671 = vlaneseq
        %v672 = vshrl.u32 %v671, 7
        %v673 = vsub.s32 %v670, %v672
        %v674 = vrot.slane %v658, %v673
        %v676 = vunpack.c.l.s4 1983009808
        %v677 = vunpack.c.0.s8 %v676
        %v678 = vlaneseq
        %v679 = vshrl.u32 %v678, 7
        %v680 = vsub.s32 %v677, %v679
        %v681 = vrot.slane %v659, %v680
        %v683 = vunpack.c.l.s4 1983009808
        %v684 = vunpack.c.0.s8 %v683
        %v685 = vlaneseq
        %v686 = vshrl.u32 %v685, 7
        %v687 = vsub.s32 %v684, %v686
        %v688 = vrot.slane %v660, %v687
        %v689 = vcombine.low %v667, %v681
        %v690 = vcombine.high %v667, %v681
        %v691 = vcombine.low %v674, %v688
        %v692 = vcombine.low %v611, %v615
        %v693 = vcombine.high %v611, %v615
        %v694 = vcombine.low %v618, %v621
        %v695 = vcombine.high %v618, %v621
        %v697 = vunpack.c.l.s4 1983009808
        %v698 = vunpack.c.0.s8 %v697
        %v699 = vlaneseq
        %v700 = vshrl.u32 %v699, 7
        %v701 = vsub.s32 %v698, %v700
        %v702 = vrot.slane %v692, %v701
        %v704 = vunpack.c.l.s4 1983009808
        %v705 = vunpack.c.0.s8 %v704
        %v706 = vlaneseq
        %v707 = vshrl.u32 %v706, 7
        %v708 = vsub.s32 %v705, %v707
        %v709 = vrot.slane %v693, %v708
        %v711 = vunpack.c.l.s4 1983009808
        %v712 = vunpack.c.0.s8 %v711
        %v713 = vlaneseq
        %v714 = vshrl.u32 %v713, 7
        %v715 = vsub.s32 %v712, %v714
        %v716 = vrot.slane %v694, %v715
        %v718 = vunpack.c.l.s4 1983009808
        %v719 = vunpack.c.0.s8 %v718
        %v720 = vlaneseq
        %v721 = vshrl.u32 %v720, 7
        %v722 = vsub.s32 %v719, %v721
        %v723 = vrot.slane %v695, %v722
        %v724 = vcombine.low %v702, %v716
        %v725 = vcombine.high %v702, %v716
        %v726 = vcombine.low %v709, %v723
        %v736 = vpack.c.bf16 %v689, %v654
        %v737 = vpack.c.bf16 %v690, %v655
        %v738 = vpack.c.bf16 %v691, %v656
        %v739 = vpack.c.bf16 %v724, %v724
        %v740 = vpack.c.bf16 %v725, %v725
        %v741 = vpack.c.bf16 %v726, %v726
        %s742 = scalar_lea.vmem [#allocation2], 152
        %v743 = vld [vmem:[%s742] sm:$0xf]
        %v744 = vld [vmem:[%s742 + $0x4] sm:$0xf]
        %v745 = vld [vmem:[%s742 + $0x8] sm:$0xf]
        %v746 = vld [vmem:[%s742 + $0xc] sm:$0xf]
        %v747 = vld [vmem:[%s742 + $0x10] sm:$0xf]
        %v748 = vld [vmem:[%s742 + $0x14] sm:$0xf]
        %v749 = vld [vmem:[%s742 + $0x18] sm:$0xf]
        %v750 = vld [vmem:[%s742 + $0x1c] sm:$0xf]
        %v751 = vld [vmem:[%s742 + $0x20] sm:$0xf]
        %v752 = vld [vmem:[%s742 + $0x24] sm:$0xf]
        %v753 = vld [vmem:[%s742 + $0x28] sm:$0xf]
        %v754 = vld [vmem:[%s742 + $0x2c] sm:$0xf]
        %v755 = vld [vmem:[%s742 + $0x30] sm:$0xf]
        %v756 = vld [vmem:[%s742 + $0x34] sm:$0xf]
        %v757 = vld [vmem:[%s742 + $0x38] sm:$0xf]
        %v758 = vld [vmem:[%s742 + $0x3c] sm:$0xf]
        %v759 = vld [vmem:[%s742 + $0x40] sm:$0xf]
        %v760 = vld [vmem:[%s742 + $0x44] sm:$0xf]
        %v761 = vld [vmem:[%s742 + $0x48] sm:$0xf]
        %v762 = vld [vmem:[%s742 + $0x4c] sm:$0xf]
        %v763 = vld [vmem:[%s742 + $0x50] sm:$0xf]
        %v764 = vld [vmem:[%s742 + $0x54] sm:$0xf]
        %v765 = vld [vmem:[%s742 + $0x58] sm:$0xf]
        %v766 = vld [vmem:[%s742 + $0x5c] sm:$0xf]
        %v767 = vld [vmem:[%s742 + $0x60] sm:$0xf]
        %v768 = vld [vmem:[%s742 + $0x64] sm:$0xf]
        %v769 = vld [vmem:[%s742 + $0x68] sm:$0xf]
        %v770 = vld [vmem:[%s742 + $0x6c] sm:$0xf]
        %v771 = vld [vmem:[%s742 + $0x70] sm:$0xf]
        %v772 = vld [vmem:[%s742 + $0x74] sm:$0xf]
        %v773 = vld [vmem:[%s742 + $0x78] sm:$0xf]
        %v774 = vld [vmem:[%s742 + $0x7c] sm:$0xf]
        %v775 = vld [vmem:[%s742 + $0x80] sm:$0xf]
        %v776 = vld [vmem:[%s742 + $0x84] sm:$0xf]
        %v777 = vld [vmem:[%s742 + $0x88] sm:$0xf]
        %v778 = vld [vmem:[%s742 + $0x8c] sm:$0xf]
        %v779 = vld [vmem:[%s742 + $0x90] sm:$0xf]
        %v780 = vld [vmem:[%s742 + $0x94] sm:$0x3]
        %v819 = vunpack.c.l.b16 %v743
        %v820 = vunpack.c.l.b16 %v744
        %v821 = vunpack.c.l.b16 %v745
        %v822 = vunpack.c.l.b16 %v746
        %v823 = vunpack.c.l.b16 %v747
        %v824 = vunpack.c.l.b16 %v748
        %v825 = vunpack.c.l.b16 %v749
        %v826 = vunpack.c.l.b16 %v750
        %v827 = vunpack.c.l.b16 %v751
        %v828 = vunpack.c.l.b16 %v752
        %v829 = vunpack.c.l.b16 %v753
        %v830 = vunpack.c.l.b16 %v754
        %v831 = vunpack.c.l.b16 %v755
        %v832 = vunpack.c.l.b16 %v756
        %v833 = vunpack.c.l.b16 %v757
        %v834 = vunpack.c.l.b16 %v758
        %v835 = vunpack.c.l.b16 %v759
        %v836 = vunpack.c.l.b16 %v760
        %v837 = vunpack.c.l.b16 %v761
        %v838 = vunpack.c.l.b16 %v762
        %v839 = vunpack.c.l.b16 %v763
        %v840 = vunpack.c.l.b16 %v764
        %v841 = vunpack.c.l.b16 %v765
        %v842 = vunpack.c.l.b16 %v766
        %v843 = vunpack.c.l.b16 %v767
        %v844 = vunpack.c.l.b16 %v768
        %v845 = vunpack.c.l.b16 %v769
        %v846 = vunpack.c.l.b16 %v770
        %v847 = vunpack.c.l.b16 %v771
        %v848 = vunpack.c.l.b16 %v772
        %v849 = vunpack.c.l.b16 %v773
        %v850 = vunpack.c.l.b16 %v774
        %v851 = vunpack.c.l.b16 %v775
        %v852 = vunpack.c.l.b16 %v776
        %v853 = vunpack.c.l.b16 %v777
        %v854 = vunpack.c.l.b16 %v778
        %v855 = vunpack.c.l.b16 %v779
        %v856 = vunpack.c.l.b16 %v780
        %v857 = vpack.c.b16 %v820, %v819
        %v858 = vpack.c.b16 %v822, %v821
        %v859 = vpack.c.b16 %v824, %v823
        %v860 = vpack.c.b16 %v826, %v825
        %v861 = vpack.c.b16 %v828, %v827
        %v862 = vpack.c.b16 %v830, %v829
        %v863 = vpack.c.b16 %v832, %v831
        %v864 = vpack.c.b16 %v834, %v833
        %v865 = vpack.c.b16 %v836, %v835
        %v866 = vpack.c.b16 %v838, %v837
        %v867 = vpack.c.b16 %v840, %v839
        %v868 = vpack.c.b16 %v842, %v841
        %v869 = vpack.c.b16 %v844, %v843
        %v870 = vpack.c.b16 %v846, %v845
        %v871 = vpack.c.b16 %v848, %v847
        %v872 = vpack.c.b16 %v850, %v849
        %v873 = vpack.c.b16 %v852, %v851
        %v874 = vpack.c.b16 %v854, %v853
        %v875 = vpack.c.b16 %v856, %v855
        %vm894 = vcmask 359424
        %v896 = vsel %vm894, %v738, 0
        %v899 = vsel %vm894, %v741, 0
        %vm901 = vcmask 1045504
        %v903 = vsel %vm901, %v875, 0
        %905 = vmatprep.subr.bf16.mxu0 0
        %906 = vmatpush1.bf16.msra.mxu0 %v857
        %907 = vmatprep.subr.bf16.mxu0 0
        %908 = vmatpush1.bf16.msra.mxu0 %v858
        %909 = vmatprep.subr.bf16.mxu0 0
        %910 = vmatpush1.bf16.msra.mxu0 %v859
        %911 = vmatprep.subr.bf16.mxu0 0
        %912 = vmatpush1.bf16.msra.mxu0 %v860
        %913 = vmatprep.subr.bf16.mxu0 0
        %914 = vmatpush1.bf16.msra.mxu0 %v861
        %915 = vmatprep.subr.bf16.mxu0 0
        %916 = vmatpush1.bf16.msra.mxu0 %v862
        %917 = vmatprep.subr.bf16.mxu0 0
        %918 = vmatpush1.bf16.msra.mxu0 %v863
        %919 = vmatprep.subr.bf16.mxu0 0
        %920 = vmatpush1.bf16.msra.mxu0 %v864
        %921 = vmatprep.subr.bf16.mxu0 0
        %922 = vmatpush1.bf16.msra.mxu0 %v865
        %923 = vmatprep.subr.bf16.mxu0 0
        %924 = vmatpush1.bf16.msra.mxu0 %v866
        %925 = vmatprep.subr.bf16.mxu0 0
        %926 = vmatpush1.bf16.msra.mxu0 %v867
        %927 = vmatprep.subr.bf16.mxu0 0
        %928 = vmatpush1.bf16.msra.mxu0 %v868
        %929 = vmatprep.subr.bf16.mxu0 0
        %930 = vmatpush1.bf16.msra.mxu0 %v869
        %931 = vmatprep.subr.bf16.mxu0 0
        %932 = vmatpush1.bf16.msra.mxu0 %v870
        %933 = vmatprep.subr.bf16.mxu0 0
        %934 = vmatpush1.bf16.msra.mxu0 %v871
        %935 = vmatprep.subr.bf16.mxu0 0
        %936 = vmatpush1.bf16.msra.mxu0 %v872
        %937 = vmatprep.mubr.bf16.mxu0 %v737
        %938 = vmatmul.mubr.bf16.gmra.mrb[0].mxu0 %v736
        %v939 = vpop.f32.mrb[0].mxu0
        %v940 = vadd.f32 0.0, %v939
        %v941 = vpop.f32.mrb[0].mxu0
        %v942 = vpop.f32.mrb[0].mxu0
        %v943 = vadd.f32 0.0, %v942
        %v944 = vpop.f32.mrb[0].mxu0
        %945 = vmatprep.mubr.bf16.mxu0 %v740
        %946 = vmatmul.mubr.bf16.gmra.mrb[0].mxu0 %v739
        %v947 = vpop.f32.mrb[0].mxu0
        %v948 = vadd.f32 0.0, %v947
        %v949 = vpop.f32.mrb[0].mxu0
        %v950 = vpop.f32.mrb[0].mxu0
        %v951 = vpop.f32.mrb[0].mxu0
        %952 = vdwg.mxu0
        %953 = vmatprep.subr.bf16.mxu0 0
        %954 = vmatpush1.bf16.msra.mxu0 %v873
        %955 = vmatprep.subr.bf16.mxu0 0
        %956 = vmatpush1.bf16.msra.mxu0 %v874
        %957 = vmatprep.subr.bf16.mxu0 0
        %958 = vmatpush1.bf16.msra.mxu0 %v903
        %959 = vmatprep.subr.bf16.mxu0 0
        %960 = vmatpush1.bf16.msra.mxu0 0
        %961 = vmatprep.subr.bf16.mxu0 0
        %962 = vmatpush1.bf16.msra.mxu0 0
        %963 = vmatprep.subr.bf16.mxu0 0
        %964 = vmatpush1.bf16.msra.mxu0 0
        %965 = vmatprep.subr.bf16.mxu0 0
        %966 = vmatpush1.bf16.msra.mxu0 0
        %967 = vmatprep.subr.bf16.mxu0 0
        %968 = vmatpush1.bf16.msra.mxu0 0
        %969 = vmatprep.subr.bf16.mxu0 0
        %970 = vmatpush1.bf16.msra.mxu0 0
        %971 = vmatprep.subr.bf16.mxu0 0
        %972 = vmatpush1.bf16.msra.mxu0 0
        %973 = vmatprep.subr.bf16.mxu0 0
        %974 = vmatpush1.bf16.msra.mxu0 0
        %975 = vmatprep.subr.bf16.mxu0 0
        %976 = vmatpush1.bf16.msra.mxu0 0
        %977 = vmatprep.subr.bf16.mxu0 0
        %978 = vmatpush1.bf16.msra.mxu0 0
        %979 = vmatprep.subr.bf16.mxu0 0
        %980 = vmatpush1.bf16.msra.mxu0 0
        %981 = vmatprep.subr.bf16.mxu0 0
        %982 = vmatpush1.bf16.msra.mxu0 0
        %983 = vmatprep.subr.bf16.mxu0 0
        %984 = vmatpush1.bf16.msra.mxu0 0
        %985 = vmatprep.mubr.bf16.mxu0 0
        %986 = vmatmul.mubr.bf16.gmra.mrb[0].mxu0 %v896
        %v987 = vpop.f32.mrb[0].mxu0
        %v988 = vadd.f32 %v940, %v987
        %v989 = vpop.f32.mrb[0].mxu0
        %v990 = vpop.f32.mrb[0].mxu0
        %v991 = vadd.f32 %v943, %v990
        %v992 = vpop.f32.mrb[0].mxu0
        %993 = vmatprep.mubr.bf16.mxu0 0
        %994 = vmatmul.mubr.bf16.gmra.mrb[0].mxu0 %v899
        %v995 = vpop.f32.mrb[0].mxu0
        %v996 = vadd.f32 %v948, %v995
        %v997 = vpop.f32.mrb[0].mxu0
        %v998 = vpop.f32.mrb[0].mxu0
        %v999 = vpop.f32.mrb[0].mxu0
        %1000 = vdwg.mxu0
        %v1039 = vunpack.c.l.b16 %v533
        %v1040 = vunpack.c.l.b16 %v534
        %v1041 = vunpack.c.l.b16 %v535
        %v1042 = vunpack.c.l.b16 %v536
        %v1043 = vunpack.c.l.b16 %v537
        %v1044 = vunpack.c.l.b16 %v538
        %v1045 = vunpack.c.l.b16 %v539
        %v1046 = vunpack.c.l.b16 %v540
        %v1047 = vunpack.c.l.b16 %v541
        %v1048 = vunpack.c.l.b16 %v542
        %v1049 = vunpack.c.l.b16 %v543
        %v1050 = vunpack.c.l.b16 %v544
        %v1051 = vunpack.c.l.b16 %v545
        %v1052 = vunpack.c.l.b16 %v546
        %v1053 = vunpack.c.l.b16 %v547
        %v1054 = vunpack.c.l.b16 %v548
        %v1055 = vunpack.c.l.b16 %v549
        %v1056 = vunpack.c.l.b16 %v550
        %v1057 = vunpack.c.l.b16 %v551
        %v1058 = vunpack.c.l.b16 %v552
        %v1059 = vunpack.c.l.b16 %v553
        %v1060 = vunpack.c.l.b16 %v554
        %v1061 = vunpack.c.l.b16 %v555
        %v1062 = vunpack.c.l.b16 %v556
        %v1063 = vunpack.c.l.b16 %v557
        %v1064 = vunpack.c.l.b16 %v558
        %v1065 = vunpack.c.l.b16 %v559
        %v1066 = vunpack.c.l.b16 %v560
        %v1067 = vunpack.c.l.b16 %v561
        %v1068 = vunpack.c.l.b16 %v562
        %v1069 = vunpack.c.l.b16 %v563
        %v1070 = vunpack.c.l.b16 %v564
        %v1071 = vunpack.c.l.b16 %v565
        %v1072 = vunpack.c.l.b16 %v566
        %v1073 = vunpack.c.l.b16 %v567
        %v1074 = vunpack.c.l.b16 %v568
        %v1075 = vunpack.c.l.b16 %v569
        %v1076 = vunpack.c.l.b16 %v570
        %v1077 = vpack.c.b16 %v1040, %v1039
        %v1078 = vpack.c.b16 %v1042, %v1041
        %v1079 = vpack.c.b16 %v1044, %v1043
        %v1080 = vpack.c.b16 %v1046, %v1045
        %v1081 = vpack.c.b16 %v1048, %v1047
        %v1082 = vpack.c.b16 %v1050, %v1049
        %v1083 = vpack.c.b16 %v1052, %v1051
        %v1084 = vpack.c.b16 %v1054, %v1053
        %v1085 = vpack.c.b16 %v1056, %v1055
        %v1086 = vpack.c.b16 %v1058, %v1057
        %v1087 = vpack.c.b16 %v1060, %v1059
        %v1088 = vpack.c.b16 %v1062, %v1061
        %v1089 = vpack.c.b16 %v1064, %v1063
        %v1090 = vpack.c.b16 %v1066, %v1065
        %v1091 = vpack.c.b16 %v1068, %v1067
        %v1092 = vpack.c.b16 %v1070, %v1069
        %v1093 = vpack.c.b16 %v1072, %v1071
        %v1094 = vpack.c.b16 %v1074, %v1073
        %v1095 = vpack.c.b16 %v1076, %v1075
        %v1115 = vsel %vm894, %v529, 0
        %v1118 = vsel %vm894, %v532, 0
        %v1121 = vsel %vm901, %v1095, 0
        %1123 = vmatprep.subr.bf16.mxu0 0
        %1124 = vmatpush1.bf16.msra.mxu0 %v1077
        %1125 = vmatprep.subr.bf16.mxu0 0
        %1126 = vmatpush1.bf16.msra.mxu0 %v1078
        %1127 = vmatprep.subr.bf16.mxu0 0
        %1128 = vmatpush1.bf16.msra.mxu0 %v1079
        %1129 = vmatprep.subr.bf16.mxu0 0
        %1130 = vmatpush1.bf16.msra.mxu0 %v1080
        %1131 = vmatprep.subr.bf16.mxu0 0
        %1132 = vmatpush1.bf16.msra.mxu0 %v1081
        %1133 = vmatprep.subr.bf16.mxu0 0
        %1134 = vmatpush1.bf16.msra.mxu0 %v1082
        %1135 = vmatprep.subr.bf16.mxu0 0
        %1136 = vmatpush1.bf16.msra.mxu0 %v1083
        %1137 = vmatprep.subr.bf16.mxu0 0
        %1138 = vmatpush1.bf16.msra.mxu0 %v1084
        %1139 = vmatprep.subr.bf16.mxu0 0
        %1140 = vmatpush1.bf16.msra.mxu0 %v1085
        %1141 = vmatprep.subr.bf16.mxu0 0
        %1142 = vmatpush1.bf16.msra.mxu0 %v1086
        %1143 = vmatprep.subr.bf16.mxu0 0
        %1144 = vmatpush1.bf16.msra.mxu0 %v1087
        %1145 = vmatprep.subr.bf16.mxu0 0
        %1146 = vmatpush1.bf16.msra.mxu0 %v1088
        %1147 = vmatprep.subr.bf16.mxu0 0
        %1148 = vmatpush1.bf16.msra.mxu0 %v1089
        %1149 = vmatprep.subr.bf16.mxu0 0
        %1150 = vmatpush1.bf16.msra.mxu0 %v1090
        %1151 = vmatprep.subr.bf16.mxu0 0
        %1152 = vmatpush1.bf16.msra.mxu0 %v1091
        %1153 = vmatprep.subr.bf16.mxu0 0
        %1154 = vmatpush1.bf16.msra.mxu0 %v1092
        %1155 = vmatprep.mubr.bf16.mxu0 %v528
        %1156 = vmatmul.mubr.bf16.gmra.mrb[0].mxu0 %v527
        %v1157 = vpop.f32.mrb[0].mxu0
        %v1158 = vadd.f32 %v988, %v1157
        %v1159 = vpop.f32.mrb[0].mxu0
        %v1160 = vpop.f32.mrb[0].mxu0
        %v1161 = vadd.f32 %v991, %v1160
        %v1162 = vpop.f32.mrb[0].mxu0
        %1163 = vmatprep.mubr.bf16.mxu0 %v531
        %1164 = vmatmul.mubr.bf16.gmra.mrb[0].mxu0 %v530
        %v1165 = vpop.f32.mrb[0].mxu0
        %v1166 = vadd.f32 %v996, %v1165
        %v1167 = vpop.f32.mrb[0].mxu0
        %v1168 = vpop.f32.mrb[0].mxu0
        %v1169 = vpop.f32.mrb[0].mxu0
        %1170 = vdwg.mxu0
        %1171 = vmatprep.subr.bf16.mxu0 0
        %1172 = vmatpush1.bf16.msra.mxu0 %v1093
        %1173 = vmatprep.subr.bf16.mxu0 0
        %1174 = vmatpush1.bf16.msra.mxu0 %v1094
        %1175 = vmatprep.subr.bf16.mxu0 0
        %1176 = vmatpush1.bf16.msra.mxu0 %v1121
        %1177 = vmatprep.subr.bf16.mxu0 0
        %1178 = vmatpush1.bf16.msra.mxu0 0
        %1179 = vmatprep.subr.bf16.mxu0 0
        %1180 = vmatpush1.bf16.msra.mxu0 0
        %1181 = vmatprep.subr.bf16.mxu0 0
        %1182 = vmatpush1.bf16.msra.mxu0 0
        %1183 = vmatprep.subr.bf16.mxu0 0
        %1184 = vmatpush1.bf16.msra.mxu0 0
        %1185 = vmatprep.subr.bf16.mxu0 0
        %1186 = vmatpush1.bf16.msra.mxu0 0
        %1187 = vmatprep.subr.bf16.mxu0 0
        %1188 = vmatpush1.bf16.msra.mxu0 0
        %1189 = vmatprep.subr.bf16.mxu0 0
        %1190 = vmatpush1.bf16.msra.mxu0 0
        %1191 = vmatprep.subr.bf16.mxu0 0
        %1192 = vmatpush1.bf16.msra.mxu0 0
        %1193 = vmatprep.subr.bf16.mxu0 0
        %1194 = vmatpush1.bf16.msra.mxu0 0
        %1195 = vmatprep.subr.bf16.mxu0 0
        %1196 = vmatpush1.bf16.msra.mxu0 0
        %1197 = vmatprep.subr.bf16.mxu0 0
        %1198 = vmatpush1.bf16.msra.mxu0 0
        %1199 = vmatprep.subr.bf16.mxu0 0
        %1200 = vmatpush1.bf16.msra.mxu0 0
        %1201 = vmatprep.subr.bf16.mxu0 0
        %1202 = vmatpush1.bf16.msra.mxu0 0
        %1203 = vmatprep.mubr.bf16.mxu0 0
        %1204 = vmatmul.mubr.bf16.gmra.mrb[0].mxu0 %v1115
        %v1205 = vpop.f32.mrb[0].mxu0
        %v1206 = vadd.f32 %v1158, %v1205
        %v1207 = vpop.f32.mrb[0].mxu0
        %v1208 = vpop.f32.mrb[0].mxu0
        %v1209 = vadd.f32 %v1161, %v1208
        %v1210 = vpop.f32.mrb[0].mxu0
        %1211 = vmatprep.mubr.bf16.mxu0 0
        %1212 = vmatmul.mubr.bf16.gmra.mrb[0].mxu0 %v1118
        %v1213 = vpop.f32.mrb[0].mxu0
        %v1214 = vadd.f32 %v1166, %v1213
        %v1215 = vpop.f32.mrb[0].mxu0
        %v1216 = vpop.f32.mrb[0].mxu0
        %v1217 = vpop.f32.mrb[0].mxu0
        %1218 = vdwg.mxu0
        %v1219 = vcombine.low %v309, %v310
        %v1220 = vcombine.high %v309, %v310
        %v1221 = vcombine.low %v571, %v343
        %v1222 = vcombine.high %v571, %v343
        %v1224 = vunpack.c.l.s4 1983009808
        %v1225 = vunpack.c.0.s8 %v1224
        %v1226 = vlaneseq
        %v1227 = vshrl.u32 %v1226, 7
        %v1228 = vsub.s32 %v1225, %v1227
        %v1229 = vrot.slane %v1219, %v1228
        %v1231 = vunpack.c.l.s4 1983009808
        %v1232 = vunpack.c.0.s8 %v1231
        %v1233 = vlaneseq
        %v1234 = vshrl.u32 %v1233, 7
        %v1235 = vsub.s32 %v1232, %v1234
        %v1236 = vrot.slane %v1220, %v1235
        %v1238 = vunpack.c.l.s4 1983009808
        %v1239 = vunpack.c.0.s8 %v1238
        %v1240 = vlaneseq
        %v1241 = vshrl.u32 %v1240, 7
        %v1242 = vsub.s32 %v1239, %v1241
        %v1243 = vrot.slane %v1221, %v1242
        %v1245 = vunpack.c.l.s4 1983009808
        %v1246 = vunpack.c.0.s8 %v1245
        %v1247 = vlaneseq
        %v1248 = vshrl.u32 %v1247, 7
        %v1249 = vsub.s32 %v1246, %v1248
        %v1250 = vrot.slane %v1222, %v1249
        %v1251 = vcombine.low %v1229, %v1243
        %v1252 = vcombine.high %v1229, %v1243
        %v1253 = vcombine.low %v1236, %v1250
        %v1254 = vcombine.low %v344, %v572
        %v1255 = vcombine.high %v344, %v572
        %v1256 = vcombine.low %v377, %v378
        %v1257 = vcombine.high %v377, %v378
        %v1259 = vunpack.c.l.s4 1983009808
        %v1260 = vunpack.c.0.s8 %v1259
        %v1261 = vlaneseq
        %v1262 = vshrl.u32 %v1261, 7
        %v1263 = vsub.s32 %v1260, %v1262
        %v1264 = vrot.slane %v1254, %v1263
        %v1266 = vunpack.c.l.s4 1983009808
        %v1267 = vunpack.c.0.s8 %v1266
        %v1268 = vlaneseq
        %v1269 = vshrl.u32 %v1268, 7
        %v1270 = vsub.s32 %v1267, %v1269
        %v1271 = vrot.slane %v1255, %v1270
        %v1273 = vunpack.c.l.s4 1983009808
        %v1274 = vunpack.c.0.s8 %v1273
        %v1275 = vlaneseq
        %v1276 = vshrl.u32 %v1275, 7
        %v1277 = vsub.s32 %v1274, %v1276
        %v1278 = vrot.slane %v1256, %v1277
        %v1280 = vunpack.c.l.s4 1983009808
        %v1281 = vunpack.c.0.s8 %v1280
        %v1282 = vlaneseq
        %v1283 = vshrl.u32 %v1282, 7
        %v1284 = vsub.s32 %v1281, %v1283
        %v1285 = vrot.slane %v1257, %v1284
        %v1286 = vcombine.low %v1264, %v1278
        %v1287 = vcombine.high %v1264, %v1278
        %v1288 = vcombine.low %v1271, %v1285
        %v1289 = vcombine.low %v573, %v411
        %v1290 = vcombine.high %v573, %v411
        %v1291 = vcombine.low %v412, %v574
        %v1292 = vcombine.high %v412, %v574
        %v1294 = vunpack.c.l.s4 1983009808
        %v1295 = vunpack.c.0.s8 %v1294
        %v1296 = vlaneseq
        %v1297 = vshrl.u32 %v1296, 7
        %v1298 = vsub.s32 %v1295, %v1297
        %v1299 = vrot.slane %v1289, %v1298
        %v1301 = vunpack.c.l.s4 1983009808
        %v1302 = vunpack.c.0.s8 %v1301
        %v1303 = vlaneseq
        %v1304 = vshrl.u32 %v1303, 7
        %v1305 = vsub.s32 %v1302, %v1304
        %v1306 = vrot.slane %v1290, %v1305
        %v1308 = vunpack.c.l.s4 1983009808
        %v1309 = vunpack.c.0.s8 %v1308
        %v1310 = vlaneseq
        %v1311 = vshrl.u32 %v1310, 7
        %v1312 = vsub.s32 %v1309, %v1311
        %v1313 = vrot.slane %v1291, %v1312
        %v1315 = vunpack.c.l.s4 1983009808
        %v1316 = vunpack.c.0.s8 %v1315
        %v1317 = vlaneseq
        %v1318 = vshrl.u32 %v1317, 7
        %v1319 = vsub.s32 %v1316, %v1318
        %v1320 = vrot.slane %v1292, %v1319
        %v1321 = vcombine.low %v1299, %v1313
        %v1322 = vcombine.high %v1299, %v1313
        %v1323 = vcombine.low %v1306, %v1320
        %v1333 = vpack.c.bf16 %v1286, %v1251
        %v1334 = vpack.c.bf16 %v1287, %v1252
        %v1335 = vpack.c.bf16 %v1288, %v1253
        %v1336 = vpack.c.bf16 %v1321, %v1321
        %v1337 = vpack.c.bf16 %v1322, %v1322
        %v1338 = vpack.c.bf16 %v1323, %v1323
        %s1339 = scalar_lea.vmem [#allocation2], 304
        %v1340 = vld [vmem:[%s1339] sm:$0xf]
        %v1341 = vld [vmem:[%s1339 + $0x4] sm:$0xf]
        %v1342 = vld [vmem:[%s1339 + $0x8] sm:$0xf]
        %v1343 = vld [vmem:[%s1339 + $0xc] sm:$0xf]
        %v1344 = vld [vmem:[%s1339 + $0x10] sm:$0xf]
        %v1345 = vld [vmem:[%s1339 + $0x14] sm:$0xf]
        %v1346 = vld [vmem:[%s1339 + $0x18] sm:$0xf]
        %v1347 = vld [vmem:[%s1339 + $0x1c] sm:$0xf]
        %v1348 = vld [vmem:[%s1339 + $0x20] sm:$0xf]
        %v1349 = vld [vmem:[%s1339 + $0x24] sm:$0xf]
        %v1350 = vld [vmem:[%s1339 + $0x28] sm:$0xf]
        %v1351 = vld [vmem:[%s1339 + $0x2c] sm:$0xf]
        %v1352 = vld [vmem:[%s1339 + $0x30] sm:$0xf]
        %v1353 = vld [vmem:[%s1339 + $0x34] sm:$0xf]
        %v1354 = vld [vmem:[%s1339 + $0x38] sm:$0xf]
        %v1355 = vld [vmem:[%s1339 + $0x3c] sm:$0xf]
        %v1356 = vld [vmem:[%s1339 + $0x40] sm:$0xf]
        %v1357 = vld [vmem:[%s1339 + $0x44] sm:$0xf]
        %v1358 = vld [vmem:[%s1339 + $0x48] sm:$0xf]
        %v1359 = vld [vmem:[%s1339 + $0x4c] sm:$0xf]
        %v1360 = vld [vmem:[%s1339 + $0x50] sm:$0xf]
        %v1361 = vld [vmem:[%s1339 + $0x54] sm:$0xf]
        %v1362 = vld [vmem:[%s1339 + $0x58] sm:$0xf]
        %v1363 = vld [vmem:[%s1339 + $0x5c] sm:$0xf]
        %v1364 = vld [vmem:[%s1339 + $0x60] sm:$0xf]
        %v1365 = vld [vmem:[%s1339 + $0x64] sm:$0xf]
        %v1366 = vld [vmem:[%s1339 + $0x68] sm:$0xf]
        %v1367 = vld [vmem:[%s1339 + $0x6c] sm:$0xf]
        %v1368 = vld [vmem:[%s1339 + $0x70] sm:$0xf]
        %v1369 = vld [vmem:[%s1339 + $0x74] sm:$0xf]
        %v1370 = vld [vmem:[%s1339 + $0x78] sm:$0xf]
        %v1371 = vld [vmem:[%s1339 + $0x7c] sm:$0xf]
        %v1372 = vld [vmem:[%s1339 + $0x80] sm:$0xf]
        %v1373 = vld [vmem:[%s1339 + $0x84] sm:$0xf]
        %v1374 = vld [vmem:[%s1339 + $0x88] sm:$0xf]
        %v1375 = vld [vmem:[%s1339 + $0x8c] sm:$0xf]
        %v1376 = vld [vmem:[%s1339 + $0x90] sm:$0xf]
        %v1377 = vld [vmem:[%s1339 + $0x94] sm:$0x3]
        %v1416 = vunpack.c.l.b16 %v1340
        %v1417 = vunpack.c.l.b16 %v1341
        %v1418 = vunpack.c.l.b16 %v1342
        %v1419 = vunpack.c.l.b16 %v1343
        %v1420 = vunpack.c.l.b16 %v1344
        %v1421 = vunpack.c.l.b16 %v1345
        %v1422 = vunpack.c.l.b16 %v1346
        %v1423 = vunpack.c.l.b16 %v1347
        %v1424 = vunpack.c.l.b16 %v1348
        %v1425 = vunpack.c.l.b16 %v1349
        %v1426 = vunpack.c.l.b16 %v1350
        %v1427 = vunpack.c.l.b16 %v1351
        %v1428 = vunpack.c.l.b16 %v1352
        %v1429 = vunpack.c.l.b16 %v1353
        %v1430 = vunpack.c.l.b16 %v1354
        %v1431 = vunpack.c.l.b16 %v1355
        %v1432 = vunpack.c.l.b16 %v1356
        %v1433 = vunpack.c.l.b16 %v1357
        %v1434 = vunpack.c.l.b16 %v1358
        %v1435 = vunpack.c.l.b16 %v1359
        %v1436 = vunpack.c.l.b16 %v1360
        %v1437 = vunpack.c.l.b16 %v1361
        %v1438 = vunpack.c.l.b16 %v1362
        %v1439 = vunpack.c.l.b16 %v1363
        %v1440 = vunpack.c.l.b16 %v1364
        %v1441 = vunpack.c.l.b16 %v1365
        %v1442 = vunpack.c.l.b16 %v1366
        %v1443 = vunpack.c.l.b16 %v1367
        %v1444 = vunpack.c.l.b16 %v1368
        %v1445 = vunpack.c.l.b16 %v1369
        %v1446 = vunpack.c.l.b16 %v1370
        %v1447 = vunpack.c.l.b16 %v1371
        %v1448 = vunpack.c.l.b16 %v1372
        %v1449 = vunpack.c.l.b16 %v1373
        %v1450 = vunpack.c.l.b16 %v1374
        %v1451 = vunpack.c.l.b16 %v1375
        %v1452 = vunpack.c.l.b16 %v1376
        %v1453 = vunpack.c.l.b16 %v1377
        %v1454 = vpack.c.b16 %v1417, %v1416
        %v1455 = vpack.c.b16 %v1419, %v1418
        %v1456 = vpack.c.b16 %v1421, %v1420
        %v1457 = vpack.c.b16 %v1423, %v1422
        %v1458 = vpack.c.b16 %v1425, %v1424
        %v1459 = vpack.c.b16 %v1427, %v1426
        %v1460 = vpack.c.b16 %v1429, %v1428
        %v1461 = vpack.c.b16 %v1431, %v1430
        %v1462 = vpack.c.b16 %v1433, %v1432
        %v1463 = vpack.c.b16 %v1435, %v1434
        %v1464 = vpack.c.b16 %v1437, %v1436
        %v1465 = vpack.c.b16 %v1439, %v1438
        %v1466 = vpack.c.b16 %v1441, %v1440
        %v1467 = vpack.c.b16 %v1443, %v1442
        %v1468 = vpack.c.b16 %v1445, %v1444
        %v1469 = vpack.c.b16 %v1447, %v1446
        %v1470 = vpack.c.b16 %v1449, %v1448
        %v1471 = vpack.c.b16 %v1451, %v1450
        %v1472 = vpack.c.b16 %v1453, %v1452
        %v1492 = vsel %vm894, %v1335, 0
        %v1495 = vsel %vm894, %v1338, 0
        %v1498 = vsel %vm901, %v1472, 0
        %1500 = vmatprep.subr.bf16.mxu0 0
        %1501 = vmatpush1.bf16.msra.mxu0 %v1454
        %1502 = vmatprep.subr.bf16.mxu0 0
        %1503 = vmatpush1.bf16.msra.mxu0 %v1455
        %1504 = vmatprep.subr.bf16.mxu0 0
        %1505 = vmatpush1.bf16.msra.mxu0 %v1456
        %1506 = vmatprep.subr.bf16.mxu0 0
        %1507 = vmatpush1.bf16.msra.mxu0 %v1457
        %1508 = vmatprep.subr.bf16.mxu0 0
        %1509 = vmatpush1.bf16.msra.mxu0 %v1458
        %1510 = vmatprep.subr.bf16.mxu0 0
        %1511 = vmatpush1.bf16.msra.mxu0 %v1459
        %1512 = vmatprep.subr.bf16.mxu0 0
        %1513 = vmatpush1.bf16.msra.mxu0 %v1460
        %1514 = vmatprep.subr.bf16.mxu0 0
        %1515 = vmatpush1.bf16.msra.mxu0 %v1461
        %1516 = vmatprep.subr.bf16.mxu0 0
        %1517 = vmatpush1.bf16.msra.mxu0 %v1462
        %1518 = vmatprep.subr.bf16.mxu0 0
        %1519 = vmatpush1.bf16.msra.mxu0 %v1463
        %1520 = vmatprep.subr.bf16.mxu0 0
        %1521 = vmatpush1.bf16.msra.mxu0 %v1464
        %1522 = vmatprep.subr.bf16.mxu0 0
        %1523 = vmatpush1.bf16.msra.mxu0 %v1465
        %1524 = vmatprep.subr.bf16.mxu0 0
        %1525 = vmatpush1.bf16.msra.mxu0 %v1466
        %1526 = vmatprep.subr.bf16.mxu0 0
        %1527 = vmatpush1.bf16.msra.mxu0 %v1467
        %1528 = vmatprep.subr.bf16.mxu0 0
        %1529 = vmatpush1.bf16.msra.mxu0 %v1468
        %1530 = vmatprep.subr.bf16.mxu0 0
        %1531 = vmatpush1.bf16.msra.mxu0 %v1469
        %1532 = vmatprep.mubr.bf16.mxu0 %v1334
        %1533 = vmatmul.mubr.bf16.gmra.mrb[0].mxu0 %v1333
        %v1534 = vpop.f32.mrb[0].mxu0
        %v1535 = vadd.f32 0.0, %v1534
        %v1536 = vpop.f32.mrb[0].mxu0
        %v1537 = vpop.f32.mrb[0].mxu0
        %v1538 = vadd.f32 0.0, %v1537
        %v1539 = vpop.f32.mrb[0].mxu0
        %1540 = vmatprep.mubr.bf16.mxu0 %v1337
        %1541 = vmatmul.mubr.bf16.gmra.mrb[0].mxu0 %v1336
        %v1542 = vpop.f32.mrb[0].mxu0
        %v1543 = vadd.f32 0.0, %v1542
        %v1544 = vpop.f32.mrb[0].mxu0
        %v1545 = vpop.f32.mrb[0].mxu0
        %v1546 = vpop.f32.mrb[0].mxu0
        %1547 = vdwg.mxu0
        %1548 = vmatprep.subr.bf16.mxu0 0
        %1549 = vmatpush1.bf16.msra.mxu0 %v1470
        %1550 = vmatprep.subr.bf16.mxu0 0
        %1551 = vmatpush1.bf16.msra.mxu0 %v1471
        %1552 = vmatprep.subr.bf16.mxu0 0
        %1553 = vmatpush1.bf16.msra.mxu0 %v1498
        %1554 = vmatprep.subr.bf16.mxu0 0
        %1555 = vmatpush1.bf16.msra.mxu0 0
        %1556 = vmatprep.subr.bf16.mxu0 0
        %1557 = vmatpush1.bf16.msra.mxu0 0
        %1558 = vmatprep.subr.bf16.mxu0 0
        %1559 = vmatpush1.bf16.msra.mxu0 0
        %1560 = vmatprep.subr.bf16.mxu0 0
        %1561 = vmatpush1.bf16.msra.mxu0 0
        %1562 = vmatprep.subr.bf16.mxu0 0
        %1563 = vmatpush1.bf16.msra.mxu0 0
        %1564 = vmatprep.subr.bf16.mxu0 0
        %1565 = vmatpush1.bf16.msra.mxu0 0
        %1566 = vmatprep.subr.bf16.mxu0 0
        %1567 = vmatpush1.bf16.msra.mxu0 0
        %1568 = vmatprep.subr.bf16.mxu0 0
        %1569 = vmatpush1.bf16.msra.mxu0 0
        %1570 = vmatprep.subr.bf16.mxu0 0
        %1571 = vmatpush1.bf16.msra.mxu0 0
        %1572 = vmatprep.subr.bf16.mxu0 0
        %1573 = vmatpush1.bf16.msra.mxu0 0
        %1574 = vmatprep.subr.bf16.mxu0 0
        %1575 = vmatpush1.bf16.msra.mxu0 0
        %1576 = vmatprep.subr.bf16.mxu0 0
        %1577 = vmatpush1.bf16.msra.mxu0 0
        %1578 = vmatprep.subr.bf16.mxu0 0
        %1579 = vmatpush1.bf16.msra.mxu0 0
        %1580 = vmatprep.mubr.bf16.mxu0 0
        %1581 = vmatmul.mubr.bf16.gmra.mrb[0].mxu0 %v1492
        %v1582 = vpop.f32.mrb[0].mxu0
        %v1583 = vadd.f32 %v1535, %v1582
        %v1584 = vpop.f32.mrb[0].mxu0
        %v1585 = vpop.f32.mrb[0].mxu0
        %v1586 = vadd.f32 %v1538, %v1585
        %v1587 = vpop.f32.mrb[0].mxu0
        %1588 = vmatprep.mubr.bf16.mxu0 0
        %1589 = vmatmul.mubr.bf16.gmra.mrb[0].mxu0 %v1495
        %v1590 = vpop.f32.mrb[0].mxu0
        %v1591 = vadd.f32 %v1543, %v1590
        %v1592 = vpop.f32.mrb[0].mxu0
        %v1593 = vpop.f32.mrb[0].mxu0
        %v1594 = vpop.f32.mrb[0].mxu0
        %1595 = vdwg.mxu0
        %v1596 = vadd.f32 %v1206, %v1583
        %v1597 = vadd.f32 %v1209, %v1586
        %v1598 = vadd.f32 %v1214, %v1591
        %v1599 = vld [vmem:[%s2] sm:$0x1]
        %v1601 = vlaneseq
        %v1602 = vshrl.u32 %v1601, 7
        %v1603 = vsub.s32 0, %v1602
        %v1604 = vrot.slane %v1599, %v1603
        %v1606 = vadd.f32 %v1596, %v1604
        %v1607 = vadd.f32 %v1597, %v1604
        %v1608 = vadd.f32 %v1598, %v1604
        %v1609 = vmax.f32 %v1606, 0.0
        %v1610 = vmax.f32 %v1607, 0.0
        %v1611 = vmax.f32 %v1608, 0.0
        %v1615 = vcombine.high %v1609, %v1609
        %v1617 = vunpack.c.l.s4 1983009808
        %v1618 = vunpack.c.0.s8 %v1617
        %v1619 = vlaneseq
        %v1620 = vshrl.u32 %v1619, 7
        %v1621 = vsub.s32 %v1618, %v1620
        %v1622 = vrot.slane %v1609, %v1621
        %v1624 = vunpack.c.l.s4 1983009808
        %v1625 = vunpack.c.0.s8 %v1624
        %v1626 = vlaneseq
        %v1627 = vshrl.u32 %v1626, 7
        %v1628 = vsub.s32 %v1625, %v1627
        %v1629 = vrot.slane %v1615, %v1628
        %v1630 = vcombine.high %v1622, %v1622
        %v1631 = vcombine.high %v1629, %v1629
        %v1632 = vcombine.high %v1610, %v1610
        %v1634 = vunpack.c.l.s4 1983009808
        %v1635 = vunpack.c.0.s8 %v1634
        %v1636 = vlaneseq
        %v1637 = vshrl.u32 %v1636, 7
        %v1638 = vsub.s32 %v1635, %v1637
        %v1639 = vrot.slane %v1610, %v1638
        %v1641 = vunpack.c.l.s4 1983009808
        %v1642 = vunpack.c.0.s8 %v1641
        %v1643 = vlaneseq
        %v1644 = vshrl.u32 %v1643, 7
        %v1645 = vsub.s32 %v1642, %v1644
        %v1646 = vrot.slane %v1632, %v1645
        %v1647 = vcombine.high %v1639, %v1639
        %v1648 = vcombine.high %v1646, %v1646
        %v1649 = vcombine.high %v1611, %v1611
        %v1651 = vunpack.c.l.s4 1983009808
        %v1652 = vunpack.c.0.s8 %v1651
        %v1653 = vlaneseq
        %v1654 = vshrl.u32 %v1653, 7
        %v1655 = vsub.s32 %v1652, %v1654
        %v1656 = vrot.slane %v1611, %v1655
        %v1658 = vunpack.c.l.s4 1983009808
        %v1659 = vunpack.c.0.s8 %v1658
        %v1660 = vlaneseq
        %v1661 = vshrl.u32 %v1660, 7
        %v1662 = vsub.s32 %v1659, %v1661
        %v1663 = vrot.slane %v1649, %v1662
        %v1664 = vcombine.high %v1656, %v1656
        %v1665 = vcombine.high %v1663, %v1663
        %v1666 = vcombine.low %v1622, %v1630
        %v1668 = vunpack.c.l.s4 1983009808
        %v1669 = vunpack.c.0.s8 %v1668
        %v1670 = vlaneseq
        %v1671 = vshrl.u32 %v1670, 7
        %v1672 = vsub.s32 %v1669, %v1671
        %v1673 = vrot.slane %v1666, %v1672
        %v1675 = vunpack.c.l.s4 1983009808
        %v1676 = vunpack.c.0.s8 %v1675
        %v1677 = vlaneseq
        %v1678 = vshrl.u32 %v1677, 7
        %v1679 = vsub.s32 %v1676, %v1678
        %v1680 = vrot.slane %v1629, %v1679
        %v1681 = vcombine.low %v1673, %v1680
        %v1682 = vcombine.low %v1631, %v1639
        %v1684 = vunpack.c.l.s4 1983009808
        %v1685 = vunpack.c.0.s8 %v1684
        %v1686 = vlaneseq
        %v1687 = vshrl.u32 %v1686, 7
        %v1688 = vsub.s32 %v1685, %v1687
        %v1689 = vrot.slane %v1682, %v1688
        %v1691 = vunpack.c.l.s4 1983009808
        %v1692 = vunpack.c.0.s8 %v1691
        %v1693 = vlaneseq
        %v1694 = vshrl.u32 %v1693, 7
        %v1695 = vsub.s32 %v1692, %v1694
        %v1696 = vrot.slane %v1647, %v1695
        %v1697 = vcombine.low %v1689, %v1696
        %v1698 = vcombine.low %v1646, %v1648
        %v1700 = vunpack.c.l.s4 1983009808
        %v1701 = vunpack.c.0.s8 %v1700
        %v1702 = vlaneseq
        %v1703 = vshrl.u32 %v1702, 7
        %v1704 = vsub.s32 %v1701, %v1703
        %v1705 = vrot.slane %v1698, %v1704
        %v1707 = vunpack.c.l.s4 1983009808
        %v1708 = vunpack.c.0.s8 %v1707
        %v1709 = vlaneseq
        %v1710 = vshrl.u32 %v1709, 7
        %v1711 = vsub.s32 %v1708, %v1710
        %v1712 = vrot.slane %v1656, %v1711
        %v1713 = vcombine.low %v1705, %v1712
        %v1714 = vcombine.low %v1664, %v1663
        %v1716 = vunpack.c.l.s4 1983009808
        %v1717 = vunpack.c.0.s8 %v1716
        %v1718 = vlaneseq
        %v1719 = vshrl.u32 %v1718, 7
        %v1720 = vsub.s32 %v1717, %v1719
        %v1721 = vrot.slane %v1714, %v1720
        %v1723 = vunpack.c.l.s4 1983009808
        %v1724 = vunpack.c.0.s8 %v1723
        %v1725 = vlaneseq
        %v1726 = vshrl.u32 %v1725, 7
        %v1727 = vsub.s32 %v1724, %v1726
        %v1728 = vrot.slane %v1665, %v1727
        %v1729 = vcombine.low %v1721, %v1728
        %vm1734 = vcmask 816128
        %v1735 = vsel %vm1734, %v1681, -inf
        %v1736 = vrot.slane %v1735, 4
        %v1737 = vmax.f32 %v1735, %v1736
        %v1738 = vrot.slane %v1737, 2
        %v1739 = vmax.f32 %v1737, %v1738
        %v1740 = vrot.slane %v1739, 1
        %v1741 = vmax.f32 %v1739, %v1740
        %v1742 = vsel %vm1734, %v1697, -inf
        %v1743 = vrot.slane %v1742, 4
        %v1744 = vmax.f32 %v1742, %v1743
        %v1745 = vrot.slane %v1744, 2
        %v1746 = vmax.f32 %v1744, %v1745
        %v1747 = vrot.slane %v1746, 1
        %v1748 = vmax.f32 %v1746, %v1747
        %v1749 = vsel %vm1734, %v1713, -inf
        %v1750 = vrot.slane %v1749, 4
        %v1751 = vmax.f32 %v1749, %v1750
        %v1752 = vrot.slane %v1751, 2
        %v1753 = vmax.f32 %v1751, %v1752
        %v1754 = vrot.slane %v1753, 1
        %v1755 = vmax.f32 %v1753, %v1754
        %v1756 = vsel %vm1734, %v1729, -inf
        %v1757 = vrot.slane %v1756, 4
        %v1758 = vmax.f32 %v1756, %v1757
        %v1759 = vrot.slane %v1758, 2
        %v1760 = vmax.f32 %v1758, %v1759
        %v1761 = vrot.slane %v1760, 1
        %v1762 = vmax.f32 %v1760, %v1761
        %v1763 = vld [vmem:[%s3] sm:$0xff]
        %v1764 = vld [vmem:[%s3 + $0x8] sm:$0xff]
        %v1765 = vld [vmem:[%s3 + $0x10] sm:$0xff]
        %v1766 = vld [vmem:[%s3 + $0x18] sm:$0xff]
        %v1767 = vld [vmem:[%s3 + $0x20] sm:$0xff]
        %v1768 = vld [vmem:[%s3 + $0x28] sm:$0xff]
        %v1769 = vld [vmem:[%s3 + $0x30] sm:$0xff]
        %v1770 = vld [vmem:[%s3 + $0x38] sm:$0xff]
        %v1771 = vld [vmem:[%s3 + $0x40] sm:$0xff]
        %v1772 = vld [vmem:[%s3 + $0x48] sm:$0xff]
        %v1773 = vld [vmem:[%s3 + $0x50] sm:$0xff]
        %v1774 = vld [vmem:[%s3 + $0x58] sm:$0xff]
        %v1775 = vld [vmem:[%s3 + $0x60] sm:$0xf]
        %v1777 = vunpack.c.l.s4 1966171168
        %v1778 = vunpack.c.0.s8 %v1777
        %v1779 = vlaneseq
        %v1780 = vshrl.u32 %v1779, 7
        %v1781 = vsub.s32 %v1778, %v1780
        %v1782 = vrot.slane %v277, %v1781
        %v1784 = vunpack.c.l.s4 1966171168
        %v1785 = vunpack.c.0.s8 %v1784
        %v1786 = vlaneseq
        %v1787 = vshrl.u32 %v1786, 7
        %v1788 = vsub.s32 %v1785, %v1787
        %v1789 = vrot.slane %v278, %v1788
        %v1791 = vunpack.c.l.s4 1966171168
        %v1792 = vunpack.c.0.s8 %v1791
        %v1793 = vlaneseq
        %v1794 = vshrl.u32 %v1793, 7
        %v1795 = vsub.s32 %v1792, %v1794
        %v1796 = vrot.slane %v255, %v1795
        %v1798 = vunpack.c.l.s4 1966171168
        %v1799 = vunpack.c.0.s8 %v1798
        %v1800 = vlaneseq
        %v1801 = vshrl.u32 %v1800, 7
        %v1802 = vsub.s32 %v1799, %v1801
        %v1803 = vrot.slane %v279, %v1802
        %v1804 = vcombine.low %v1782, %v1796
        %v1805 = vcombine.high %v1782, %v1796
        %v1806 = vcombine.low %v1789, %v1803
        %v1808 = vunpack.c.l.s4 1966171168
        %v1809 = vunpack.c.0.s8 %v1808
        %v1810 = vlaneseq
        %v1811 = vshrl.u32 %v1810, 7
        %v1812 = vsub.s32 %v1809, %v1811
        %v1813 = vrot.slane %v1804, %v1812
        %v1815 = vunpack.c.l.s4 1966171168
        %v1816 = vunpack.c.0.s8 %v1815
        %v1817 = vlaneseq
        %v1818 = vshrl.u32 %v1817, 7
        %v1819 = vsub.s32 %v1816, %v1818
        %v1820 = vrot.slane %v1806, %v1819
        %v1822 = vunpack.c.l.s4 1966171168
        %v1823 = vunpack.c.0.s8 %v1822
        %v1824 = vlaneseq
        %v1825 = vshrl.u32 %v1824, 7
        %v1826 = vsub.s32 %v1823, %v1825
        %v1827 = vrot.slane %v1805, %v1826
        %v1828 = vcombine.high %v1813, %v1813
        %v1829 = vcombine.high %v1827, %v1827
        %v1831 = vunpack.c.l.s4 1966171168
        %v1832 = vunpack.c.0.s8 %v1831
        %v1833 = vlaneseq
        %v1834 = vshrl.u32 %v1833, 7
        %v1835 = vsub.s32 %v1832, %v1834
        %v1836 = vrot.slane %v311, %v1835
        %v1838 = vunpack.c.l.s4 1966171168
        %v1839 = vunpack.c.0.s8 %v1838
        %v1840 = vlaneseq
        %v1841 = vshrl.u32 %v1840, 7
        %v1842 = vsub.s32 %v1839, %v1841
        %v1843 = vrot.slane %v312, %v1842
        %v1845 = vunpack.c.l.s4 1966171168
        %v1846 = vunpack.c.0.s8 %v1845
        %v1847 = vlaneseq
        %v1848 = vshrl.u32 %v1847, 7
        %v1849 = vsub.s32 %v1846, %v1848
        %v1850 = vrot.slane %v258, %v1849
        %v1852 = vunpack.c.l.s4 1966171168
        %v1853 = vunpack.c.0.s8 %v1852
        %v1854 = vlaneseq
        %v1855 = vshrl.u32 %v1854, 7
        %v1856 = vsub.s32 %v1853, %v1855
        %v1857 = vrot.slane %v313, %v1856
        %v1858 = vcombine.low %v1836, %v1850
        %v1859 = vcombine.high %v1836, %v1850
        %v1860 = vcombine.low %v1843, %v1857
        %v1862 = vunpack.c.l.s4 1966171168
        %v1863 = vunpack.c.0.s8 %v1862
        %v1864 = vlaneseq
        %v1865 = vshrl.u32 %v1864, 7
        %v1866 = vsub.s32 %v1863, %v1865
        %v1867 = vrot.slane %v1858, %v1866
        %v1869 = vunpack.c.l.s4 1966171168
        %v1870 = vunpack.c.0.s8 %v1869
        %v1871 = vlaneseq
        %v1872 = vshrl.u32 %v1871, 7
        %v1873 = vsub.s32 %v1870, %v1872
        %v1874 = vrot.slane %v1860, %v1873
        %v1876 = vunpack.c.l.s4 1966171168
        %v1877 = vunpack.c.0.s8 %v1876
        %v1878 = vlaneseq
        %v1879 = vshrl.u32 %v1878, 7
        %v1880 = vsub.s32 %v1877, %v1879
        %v1881 = vrot.slane %v1859, %v1880
        %v1882 = vcombine.high %v1867, %v1867
        %v1883 = vcombine.high %v1881, %v1881
        %v1885 = vunpack.c.l.s4 1966171168
        %v1886 = vunpack.c.0.s8 %v1885
        %v1887 = vlaneseq
        %v1888 = vshrl.u32 %v1887, 7
        %v1889 = vsub.s32 %v1886, %v1888
        %v1890 = vrot.slane %v345, %v1889
        %v1892 = vunpack.c.l.s4 1966171168
        %v1893 = vunpack.c.0.s8 %v1892
        %v1894 = vlaneseq
        %v1895 = vshrl.u32 %v1894, 7
        %v1896 = vsub.s32 %v1893, %v1895
        %v1897 = vrot.slane %v346, %v1896
        %v1899 = vunpack.c.l.s4 1966171168
        %v1900 = vunpack.c.0.s8 %v1899
        %v1901 = vlaneseq
        %v1902 = vshrl.u32 %v1901, 7
        %v1903 = vsub.s32 %v1900, %v1902
        %v1904 = vrot.slane %v261, %v1903
        %v1906 = vunpack.c.l.s4 1966171168
        %v1907 = vunpack.c.0.s8 %v1906
        %v1908 = vlaneseq
        %v1909 = vshrl.u32 %v1908, 7
        %v1910 = vsub.s32 %v1907, %v1909
        %v1911 = vrot.slane %v347, %v1910
        %v1912 = vcombine.low %v1890, %v1904
        %v1913 = vcombine.high %v1890, %v1904
        %v1914 = vcombine.low %v1897, %v1911
        %v1916 = vunpack.c.l.s4 1966171168
        %v1917 = vunpack.c.0.s8 %v1916
        %v1918 = vlaneseq
        %v1919 = vshrl.u32 %v1918, 7
        %v1920 = vsub.s32 %v1917, %v1919
        %v1921 = vrot.slane %v1912, %v1920
        %v1923 = vunpack.c.l.s4 1966171168
        %v1924 = vunpack.c.0.s8 %v1923
        %v1925 = vlaneseq
        %v1926 = vshrl.u32 %v1925, 7
        %v1927 = vsub.s32 %v1924, %v1926
        %v1928 = vrot.slane %v1914, %v1927
        %v1930 = vunpack.c.l.s4 1966171168
        %v1931 = vunpack.c.0.s8 %v1930
        %v1932 = vlaneseq
        %v1933 = vshrl.u32 %v1932, 7
        %v1934 = vsub.s32 %v1931, %v1933
        %v1935 = vrot.slane %v1913, %v1934
        %v1936 = vcombine.high %v1921, %v1921
        %v1937 = vcombine.high %v1935, %v1935
        %v1939 = vunpack.c.l.s4 1966171168
        %v1940 = vunpack.c.0.s8 %v1939
        %v1941 = vlaneseq
        %v1942 = vshrl.u32 %v1941, 7
        %v1943 = vsub.s32 %v1940, %v1942
        %v1944 = vrot.slane %v379, %v1943
        %v1946 = vunpack.c.l.s4 1966171168
        %v1947 = vunpack.c.0.s8 %v1946
        %v1948 = vlaneseq
        %v1949 = vshrl.u32 %v1948, 7
        %v1950 = vsub.s32 %v1947, %v1949
        %v1951 = vrot.slane %v380, %v1950
        %v1953 = vunpack.c.l.s4 1966171168
        %v1954 = vunpack.c.0.s8 %v1953
        %v1955 = vlaneseq
        %v1956 = vshrl.u32 %v1955, 7
        %v1957 = vsub.s32 %v1954, %v1956
        %v1958 = vrot.slane %v264, %v1957
        %v1960 = vunpack.c.l.s4 1966171168
        %v1961 = vunpack.c.0.s8 %v1960
        %v1962 = vlaneseq
        %v1963 = vshrl.u32 %v1962, 7
        %v1964 = vsub.s32 %v1961, %v1963
        %v1965 = vrot.slane %v381, %v1964
        %v1966 = vcombine.low %v1944, %v1958
        %v1967 = vcombine.high %v1944, %v1958
        %v1968 = vcombine.low %v1951, %v1965
        %v1970 = vunpack.c.l.s4 1966171168
        %v1971 = vunpack.c.0.s8 %v1970
        %v1972 = vlaneseq
        %v1973 = vshrl.u32 %v1972, 7
        %v1974 = vsub.s32 %v1971, %v1973
        %v1975 = vrot.slane %v1966, %v1974
        %v1977 = vunpack.c.l.s4 1966171168
        %v1978 = vunpack.c.0.s8 %v1977
        %v1979 = vlaneseq
        %v1980 = vshrl.u32 %v1979, 7
        %v1981 = vsub.s32 %v1978, %v1980
        %v1982 = vrot.slane %v1968, %v1981
        %v1984 = vunpack.c.l.s4 1966171168
        %v1985 = vunpack.c.0.s8 %v1984
        %v1986 = vlaneseq
        %v1987 = vshrl.u32 %v1986, 7
        %v1988 = vsub.s32 %v1985, %v1987
        %v1989 = vrot.slane %v1967, %v1988
        %v1990 = vcombine.high %v1975, %v1975
        %v1991 = vcombine.high %v1989, %v1989
        %v1992 = vcombine.low %v1813, %v1827
        %v1993 = vcombine.low %v1828, %v1829
        %v1994 = vcombine.low %v1820, %v1867
        %v1995 = vcombine.low %v1881, %v1882
        %v1997 = vunpack.c.l.s4 1966171168
        %v1998 = vunpack.c.0.s8 %v1997
        %v1999 = vlaneseq
        %v2000 = vshrl.u32 %v1999, 7
        %v2001 = vsub.s32 %v1998, %v2000
        %v2002 = vrot.slane %v1992, %v2001
        %v2004 = vunpack.c.l.s4 1966171168
        %v2005 = vunpack.c.0.s8 %v2004
        %v2006 = vlaneseq
        %v2007 = vshrl.u32 %v2006, 7
        %v2008 = vsub.s32 %v2005, %v2007
        %v2009 = vrot.slane %v1993, %v2008
        %v2011 = vunpack.c.l.s4 1966171168
        %v2012 = vunpack.c.0.s8 %v2011
        %v2013 = vlaneseq
        %v2014 = vshrl.u32 %v2013, 7
        %v2015 = vsub.s32 %v2012, %v2014
        %v2016 = vrot.slane %v1994, %v2015
        %v2018 = vunpack.c.l.s4 1966171168
        %v2019 = vunpack.c.0.s8 %v2018
        %v2020 = vlaneseq
        %v2021 = vshrl.u32 %v2020, 7
        %v2022 = vsub.s32 %v2019, %v2021
        %v2023 = vrot.slane %v1995, %v2022
        %v2024 = vcombine.low %v2002, %v2009
        %v2025 = vcombine.high %v2002, %v2009
        %v2026 = vcombine.low %v2016, %v2023
        %v2027 = vcombine.high %v2016, %v2023
        %v2029 = vunpack.c.l.s4 1966171168
        %v2030 = vunpack.c.0.s8 %v2029
        %v2031 = vlaneseq
        %v2032 = vshrl.u32 %v2031, 7
        %v2033 = vsub.s32 %v2030, %v2032
        %v2034 = vrot.slane %v2024, %v2033
        %v2036 = vunpack.c.l.s4 1966171168
        %v2037 = vunpack.c.0.s8 %v2036
        %v2038 = vlaneseq
        %v2039 = vshrl.u32 %v2038, 7
        %v2040 = vsub.s32 %v2037, %v2039
        %v2041 = vrot.slane %v2025, %v2040
        %v2043 = vunpack.c.l.s4 1966171168
        %v2044 = vunpack.c.0.s8 %v2043
        %v2045 = vlaneseq
        %v2046 = vshrl.u32 %v2045, 7
        %v2047 = vsub.s32 %v2044, %v2046
        %v2048 = vrot.slane %v2026, %v2047
        %v2050 = vunpack.c.l.s4 1966171168
        %v2051 = vunpack.c.0.s8 %v2050
        %v2052 = vlaneseq
        %v2053 = vshrl.u32 %v2052, 7
        %v2054 = vsub.s32 %v2051, %v2053
        %v2055 = vrot.slane %v2027, %v2054
        %v2056 = vcombine.low %v2034, %v2048
        %v2057 = vcombine.high %v2034, %v2048
        %v2058 = vcombine.low %v2041, %v2055
        %v2059 = vcombine.low %v1883, %v1874
        %v2060 = vcombine.low %v1921, %v1935
        %v2061 = vcombine.low %v1936, %v1937
        %v2062 = vcombine.low %v1928, %v1975
        %v2064 = vunpack.c.l.s4 1966171168
        %v2065 = vunpack.c.0.s8 %v2064
        %v2066 = vlaneseq
        %v2067 = vshrl.u32 %v2066, 7
        %v2068 = vsub.s32 %v2065, %v2067
        %v2069 = vrot.slane %v2059, %v2068
        %v2071 = vunpack.c.l.s4 1966171168
        %v2072 = vunpack.c.0.s8 %v2071
        %v2073 = vlaneseq
        %v2074 = vshrl.u32 %v2073, 7
        %v2075 = vsub.s32 %v2072, %v2074
        %v2076 = vrot.slane %v2060, %v2075
        %v2078 = vunpack.c.l.s4 1966171168
        %v2079 = vunpack.c.0.s8 %v2078
        %v2080 = vlaneseq
        %v2081 = vshrl.u32 %v2080, 7
        %v2082 = vsub.s32 %v2079, %v2081
        %v2083 = vrot.slane %v2061, %v2082
        %v2085 = vunpack.c.l.s4 1966171168
        %v2086 = vunpack.c.0.s8 %v2085
        %v2087 = vlaneseq
        %v2088 = vshrl.u32 %v2087, 7
        %v2089 = vsub.s32 %v2086, %v2088
        %v2090 = vrot.slane %v2062, %v2089
        %v2091 = vcombine.low %v2069, %v2076
        %v2092 = vcombine.high %v2069, %v2076
        %v2093 = vcombine.low %v2083, %v2090
        %v2094 = vcombine.high %v2083, %v2090
        %v2096 = vunpack.c.l.s4 1966171168
        %v2097 = vunpack.c.0.s8 %v2096
        %v2098 = vlaneseq
        %v2099 = vshrl.u32 %v2098, 7
        %v2100 = vsub.s32 %v2097, %v2099
        %v2101 = vrot.slane %v2091, %v2100
        %v2103 = vunpack.c.l.s4 1966171168
        %v2104 = vunpack.c.0.s8 %v2103
        %v2105 = vlaneseq
        %v2106 = vshrl.u32 %v2105, 7
        %v2107 = vsub.s32 %v2104, %v2106
        %v2108 = vrot.slane %v2092, %v2107
        %v2110 = vunpack.c.l.s4 1966171168
        %v2111 = vunpack.c.0.s8 %v2110
        %v2112 = vlaneseq
        %v2113 = vshrl.u32 %v2112, 7
        %v2114 = vsub.s32 %v2111, %v2113
        %v2115 = vrot.slane %v2093, %v2114
        %v2117 = vunpack.c.l.s4 1966171168
        %v2118 = vunpack.c.0.s8 %v2117
        %v2119 = vlaneseq
        %v2120 = vshrl.u32 %v2119, 7
        %v2121 = vsub.s32 %v2118, %v2120
        %v2122 = vrot.slane %v2094, %v2121
        %v2123 = vcombine.low %v2101, %v2115
        %v2124 = vcombine.high %v2101, %v2115
        %v2125 = vcombine.low %v2108, %v2122
        %v2126 = vcombine.low %v1989, %v1990
        %v2127 = vcombine.low %v1991, %v1982
        %v2129 = vunpack.c.l.s4 1966171168
        %v2130 = vunpack.c.0.s8 %v2129
        %v2131 = vlaneseq
        %v2132 = vshrl.u32 %v2131, 7
        %v2133 = vsub.s32 %v2130, %v2132
        %v2134 = vrot.slane %v2126, %v2133
        %v2136 = vunpack.c.l.s4 1966171168
        %v2137 = vunpack.c.0.s8 %v2136
        %v2138 = vlaneseq
        %v2139 = vshrl.u32 %v2138, 7
        %v2140 = vsub.s32 %v2137, %v2139
        %v2141 = vrot.slane %v2127, %v2140
        %v2142 = vcombine.low %v2134, %v2141
        %v2143 = vcombine.high %v2134, %v2141
        %v2145 = vunpack.c.l.s4 1966171168
        %v2146 = vunpack.c.0.s8 %v2145
        %v2147 = vlaneseq
        %v2148 = vshrl.u32 %v2147, 7
        %v2149 = vsub.s32 %v2146, %v2148
        %v2150 = vrot.slane %v2142, %v2149
        %v2152 = vunpack.c.l.s4 1966171168
        %v2153 = vunpack.c.0.s8 %v2152
        %v2154 = vlaneseq
        %v2155 = vshrl.u32 %v2154, 7
        %v2156 = vsub.s32 %v2153, %v2155
        %v2157 = vrot.slane %v2143, %v2156
        %v2158 = vcombine.high %v2150, %v2150
        %v2168 = vpack.c.bf16 %v2123, %v2056
        %v2169 = vpack.c.bf16 %v2125, %v2058
        %v2170 = vpack.c.bf16 %v2124, %v2057
        %v2171 = vpack.c.bf16 %v2150, %v2150
        %v2172 = vpack.c.bf16 %v2157, %v2157
        %v2173 = vpack.c.bf16 %v2158, %v2158
        %s2174 = scalar_lea.vmem [#allocation2], 456
        %v2175 = vld [vmem:[%s2174] sm:$0xf]
        %v2176 = vld [vmem:[%s2174 + $0x4] sm:$0xf]
        %v2177 = vld [vmem:[%s2174 + $0x8] sm:$0xf]
        %v2178 = vld [vmem:[%s2174 + $0xc] sm:$0xf]
        %v2179 = vld [vmem:[%s2174 + $0x10] sm:$0xf]
        %v2180 = vld [vmem:[%s2174 + $0x14] sm:$0xf]
        %v2181 = vld [vmem:[%s2174 + $0x18] sm:$0xf]
        %v2182 = vld [vmem:[%s2174 + $0x1c] sm:$0xf]
        %v2183 = vld [vmem:[%s2174 + $0x20] sm:$0xf]
        %v2184 = vld [vmem:[%s2174 + $0x24] sm:$0xf]
        %v2185 = vld [vmem:[%s2174 + $0x28] sm:$0xf]
        %v2186 = vld [vmem:[%s2174 + $0x2c] sm:$0xf]
        %v2187 = vld [vmem:[%s2174 + $0x30] sm:$0xf]
        %v2188 = vld [vmem:[%s2174 + $0x34] sm:$0xf]
        %v2189 = vld [vmem:[%s2174 + $0x38] sm:$0xf]
        %v2190 = vld [vmem:[%s2174 + $0x3c] sm:$0xf]
        %v2191 = vld [vmem:[%s2174 + $0x40] sm:$0xf]
        %v2192 = vld [vmem:[%s2174 + $0x44] sm:$0xf]
        %v2193 = vld [vmem:[%s2174 + $0x48] sm:$0xf]
        %v2194 = vld [vmem:[%s2174 + $0x4c] sm:$0xf]
        %v2195 = vld [vmem:[%s2174 + $0x50] sm:$0xf]
        %v2196 = vld [vmem:[%s2174 + $0x54] sm:$0xf]
        %v2197 = vld [vmem:[%s2174 + $0x58] sm:$0xf]
        %v2198 = vld [vmem:[%s2174 + $0x5c] sm:$0xf]
        %v2199 = vld [vmem:[%s2174 + $0x60] sm:$0xf]
        %v2200 = vld [vmem:[%s2174 + $0x64] sm:$0xf]
        %v2201 = vld [vmem:[%s2174 + $0x68] sm:$0xf]
        %v2202 = vld [vmem:[%s2174 + $0x6c] sm:$0xf]
        %v2203 = vld [vmem:[%s2174 + $0x70] sm:$0xf]
        %v2204 = vld [vmem:[%s2174 + $0x74] sm:$0xf]
        %v2205 = vld [vmem:[%s2174 + $0x78] sm:$0xf]
        %v2206 = vld [vmem:[%s2174 + $0x7c] sm:$0xf]
        %v2207 = vld [vmem:[%s2174 + $0x80] sm:$0xf]
        %v2208 = vld [vmem:[%s2174 + $0x84] sm:$0xf]
        %v2209 = vld [vmem:[%s2174 + $0x88] sm:$0xf]
        %v2210 = vld [vmem:[%s2174 + $0x8c] sm:$0xf]
        %v2211 = vld [vmem:[%s2174 + $0x90] sm:$0xf]
        %v2212 = vld [vmem:[%s2174 + $0x94] sm:$0x3]
        %v2213 = vcombine.high %v1789, %v1803
        %v2215 = vunpack.c.l.s4 1966171168
        %v2216 = vunpack.c.0.s8 %v2215
        %v2217 = vlaneseq
        %v2218 = vshrl.u32 %v2217, 7
        %v2219 = vsub.s32 %v2216, %v2218
        %v2220 = vrot.slane %v2213, %v2219
        %v2221 = vcombine.high %v1843, %v1857
        %v2223 = vunpack.c.l.s4 1966171168
        %v2224 = vunpack.c.0.s8 %v2223
        %v2225 = vlaneseq
        %v2226 = vshrl.u32 %v2225, 7
        %v2227 = vsub.s32 %v2224, %v2226
        %v2228 = vrot.slane %v2221, %v2227
        %v2229 = vcombine.high %v1897, %v1911
        %v2231 = vunpack.c.l.s4 1966171168
        %v2232 = vunpack.c.0.s8 %v2231
        %v2233 = vlaneseq
        %v2234 = vshrl.u32 %v2233, 7
        %v2235 = vsub.s32 %v2232, %v2234
        %v2236 = vrot.slane %v2229, %v2235
        %v2237 = vcombine.high %v1951, %v1965
        %v2239 = vunpack.c.l.s4 1966171168
        %v2240 = vunpack.c.0.s8 %v2239
        %v2241 = vlaneseq
        %v2242 = vshrl.u32 %v2241, 7
        %v2243 = vsub.s32 %v2240, %v2242
        %v2244 = vrot.slane %v2237, %v2243
        %v2245 = vcombine.low %v1827, %v1828
        %v2246 = vcombine.low %v1829, %v1820
        %v2247 = vcombine.low %v2220, %v1881
        %v2248 = vcombine.low %v1882, %v1883
        %v2250 = vunpack.c.l.s4 1966171168
        %v2251 = vunpack.c.0.s8 %v2250
        %v2252 = vlaneseq
        %v2253 = vshrl.u32 %v2252, 7
        %v2254 = vsub.s32 %v2251, %v2253
        %v2255 = vrot.slane %v2245, %v2254
        %v2257 = vunpack.c.l.s4 1966171168
        %v2258 = vunpack.c.0.s8 %v2257
        %v2259 = vlaneseq
        %v2260 = vshrl.u32 %v2259, 7
        %v2261 = vsub.s32 %v2258, %v2260
        %v2262 = vrot.slane %v2246, %v2261
        %v2264 = vunpack.c.l.s4 1966171168
        %v2265 = vunpack.c.0.s8 %v2264
        %v2266 = vlaneseq
        %v2267 = vshrl.u32 %v2266, 7
        %v2268 = vsub.s32 %v2265, %v2267
        %v2269 = vrot.slane %v2247, %v2268
        %v2271 = vunpack.c.l.s4 1966171168
        %v2272 = vunpack.c.0.s8 %v2271
        %v2273 = vlaneseq
        %v2274 = vshrl.u32 %v2273, 7
        %v2275 = vsub.s32 %v2272, %v2274
        %v2276 = vrot.slane %v2248, %v2275
        %v2277 = vcombine.low %v2255, %v2262
        %v2278 = vcombine.high %v2255, %v2262
        %v2279 = vcombine.low %v2269, %v2276
        %v2280 = vcombine.high %v2269, %v2276
        %v2282 = vunpack.c.l.s4 1966171168
        %v2283 = vunpack.c.0.s8 %v2282
        %v2284 = vlaneseq
        %v2285 = vshrl.u32 %v2284, 7
        %v2286 = vsub.s32 %v2283, %v2285
        %v2287 = vrot.slane %v2277, %v2286
        %v2289 = vunpack.c.l.s4 1966171168
        %v2290 = vunpack.c.0.s8 %v2289
        %v2291 = vlaneseq
        %v2292 = vshrl.u32 %v2291, 7
        %v2293 = vsub.s32 %v2290, %v2292
        %v2294 = vrot.slane %v2278, %v2293
        %v2296 = vunpack.c.l.s4 1966171168
        %v2297 = vunpack.c.0.s8 %v2296
        %v2298 = vlaneseq
        %v2299 = vshrl.u32 %v2298, 7
        %v2300 = vsub.s32 %v2297, %v2299
        %v2301 = vrot.slane %v2279, %v2300
        %v2303 = vunpack.c.l.s4 1966171168
        %v2304 = vunpack.c.0.s8 %v2303
        %v2305 = vlaneseq
        %v2306 = vshrl.u32 %v2305, 7
        %v2307 = vsub.s32 %v2304, %v2306
        %v2308 = vrot.slane %v2280, %v2307
        %v2309 = vcombine.low %v2287, %v2301
        %v2310 = vcombine.high %v2287, %v2301
        %v2311 = vcombine.low %v2294, %v2308
        %v2312 = vcombine.low %v1874, %v2228
        %v2313 = vcombine.low %v1935, %v1936
        %v2314 = vcombine.low %v1937, %v1928
        %v2315 = vcombine.low %v2236, %v1989
        %v2317 = vunpack.c.l.s4 1966171168
        %v2318 = vunpack.c.0.s8 %v2317
        %v2319 = vlaneseq
        %v2320 = vshrl.u32 %v2319, 7
        %v2321 = vsub.s32 %v2318, %v2320
        %v2322 = vrot.slane %v2312, %v2321
        %v2324 = vunpack.c.l.s4 1966171168
        %v2325 = vunpack.c.0.s8 %v2324
        %v2326 = vlaneseq
        %v2327 = vshrl.u32 %v2326, 7
        %v2328 = vsub.s32 %v2325, %v2327
        %v2329 = vrot.slane %v2313, %v2328
        %v2331 = vunpack.c.l.s4 1966171168
        %v2332 = vunpack.c.0.s8 %v2331
        %v2333 = vlaneseq
        %v2334 = vshrl.u32 %v2333, 7
        %v2335 = vsub.s32 %v2332, %v2334
        %v2336 = vrot.slane %v2314, %v2335
        %v2338 = vunpack.c.l.s4 1966171168
        %v2339 = vunpack.c.0.s8 %v2338
        %v2340 = vlaneseq
        %v2341 = vshrl.u32 %v2340, 7
        %v2342 = vsub.s32 %v2339, %v2341
        %v2343 = vrot.slane %v2315, %v2342
        %v2344 = vcombine.low %v2322, %v2329
        %v2345 = vcombine.high %v2322, %v2329
        %v2346 = vcombine.low %v2336, %v2343
        %v2347 = vcombine.high %v2336, %v2343
        %v2349 = vunpack.c.l.s4 1966171168
        %v2350 = vunpack.c.0.s8 %v2349
        %v2351 = vlaneseq
        %v2352 = vshrl.u32 %v2351, 7
        %v2353 = vsub.s32 %v2350, %v2352
        %v2354 = vrot.slane %v2344, %v2353
        %v2356 = vunpack.c.l.s4 1966171168
        %v2357 = vunpack.c.0.s8 %v2356
        %v2358 = vlaneseq
        %v2359 = vshrl.u32 %v2358, 7
        %v2360 = vsub.s32 %v2357, %v2359
        %v2361 = vrot.slane %v2345, %v2360
        %v2363 = vunpack.c.l.s4 1966171168
        %v2364 = vunpack.c.0.s8 %v2363
        %v2365 = vlaneseq
        %v2366 = vshrl.u32 %v2365, 7
        %v2367 = vsub.s32 %v2364, %v2366
        %v2368 = vrot.slane %v2346, %v2367
        %v2370 = vunpack.c.l.s4 1966171168
        %v2371 = vunpack.c.0.s8 %v2370
        %v2372 = vlaneseq
        %v2373 = vshrl.u32 %v2372, 7
        %v2374 = vsub.s32 %v2371, %v2373
        %v2375 = vrot.slane %v2347, %v2374
        %v2376 = vcombine.low %v2354, %v2368
        %v2377 = vcombine.high %v2354, %v2368
        %v2378 = vcombine.low %v2361, %v2375
        %v2379 = vcombine.low %v1990, %v1991
        %v2380 = vcombine.low %v1982, %v2244
        %v2382 = vunpack.c.l.s4 1966171168
        %v2383 = vunpack.c.0.s8 %v2382
        %v2384 = vlaneseq
        %v2385 = vshrl.u32 %v2384, 7
        %v2386 = vsub.s32 %v2383, %v2385
        %v2387 = vrot.slane %v2379, %v2386
        %v2389 = vunpack.c.l.s4 1966171168
        %v2390 = vunpack.c.0.s8 %v2389
        %v2391 = vlaneseq
        %v2392 = vshrl.u32 %v2391, 7
        %v2393 = vsub.s32 %v2390, %v2392
        %v2394 = vrot.slane %v2380, %v2393
        %v2395 = vcombine.low %v2387, %v2394
        %v2396 = vcombine.high %v2387, %v2394
        %v2398 = vunpack.c.l.s4 1966171168
        %v2399 = vunpack.c.0.s8 %v2398
        %v2400 = vlaneseq
        %v2401 = vshrl.u32 %v2400, 7
        %v2402 = vsub.s32 %v2399, %v2401
        %v2403 = vrot.slane %v2395, %v2402
        %v2405 = vunpack.c.l.s4 1966171168
        %v2406 = vunpack.c.0.s8 %v2405
        %v2407 = vlaneseq
        %v2408 = vshrl.u32 %v2407, 7
        %v2409 = vsub.s32 %v2406, %v2408
        %v2410 = vrot.slane %v2396, %v2409
        %v2411 = vcombine.high %v2403, %v2403
        %v2421 = vpack.c.bf16 %v2376, %v2309
        %v2422 = vpack.c.bf16 %v2378, %v2311
        %v2423 = vpack.c.bf16 %v2377, %v2310
        %v2424 = vpack.c.bf16 %v2403, %v2403
        %v2425 = vpack.c.bf16 %v2410, %v2410
        %v2426 = vpack.c.bf16 %v2411, %v2411
        %s2427 = scalar_lea.vmem [#allocation2], 608
        %v2428 = vld [vmem:[%s2427] sm:$0xf]
        %v2429 = vld [vmem:[%s2427 + $0x4] sm:$0xf]
        %v2430 = vld [vmem:[%s2427 + $0x8] sm:$0xf]
        %v2431 = vld [vmem:[%s2427 + $0xc] sm:$0xf]
        %v2432 = vld [vmem:[%s2427 + $0x10] sm:$0xf]
        %v2433 = vld [vmem:[%s2427 + $0x14] sm:$0xf]
        %v2434 = vld [vmem:[%s2427 + $0x18] sm:$0xf]
        %v2435 = vld [vmem:[%s2427 + $0x1c] sm:$0xf]
        %v2436 = vld [vmem:[%s2427 + $0x20] sm:$0xf]
        %v2437 = vld [vmem:[%s2427 + $0x24] sm:$0xf]
        %v2438 = vld [vmem:[%s2427 + $0x28] sm:$0xf]
        %v2439 = vld [vmem:[%s2427 + $0x2c] sm:$0xf]
        %v2440 = vld [vmem:[%s2427 + $0x30] sm:$0xf]
        %v2441 = vld [vmem:[%s2427 + $0x34] sm:$0xf]
        %v2442 = vld [vmem:[%s2427 + $0x38] sm:$0xf]
        %v2443 = vld [vmem:[%s2427 + $0x3c] sm:$0xf]
        %v2444 = vld [vmem:[%s2427 + $0x40] sm:$0xf]
        %v2445 = vld [vmem:[%s2427 + $0x44] sm:$0xf]
        %v2446 = vld [vmem:[%s2427 + $0x48] sm:$0xf]
        %v2447 = vld [vmem:[%s2427 + $0x4c] sm:$0xf]
        %v2448 = vld [vmem:[%s2427 + $0x50] sm:$0xf]
        %v2449 = vld [vmem:[%s2427 + $0x54] sm:$0xf]
        %v2450 = vld [vmem:[%s2427 + $0x58] sm:$0xf]
        %v2451 = vld [vmem:[%s2427 + $0x5c] sm:$0xf]
        %v2452 = vld [vmem:[%s2427 + $0x60] sm:$0xf]
        %v2453 = vld [vmem:[%s2427 + $0x64] sm:$0xf]
        %v2454 = vld [vmem:[%s2427 + $0x68] sm:$0xf]
        %v2455 = vld [vmem:[%s2427 + $0x6c] sm:$0xf]
        %v2456 = vld [vmem:[%s2427 + $0x70] sm:$0xf]
        %v2457 = vld [vmem:[%s2427 + $0x74] sm:$0xf]
        %v2458 = vld [vmem:[%s2427 + $0x78] sm:$0xf]
        %v2459 = vld [vmem:[%s2427 + $0x7c] sm:$0xf]
        %v2460 = vld [vmem:[%s2427 + $0x80] sm:$0xf]
        %v2461 = vld [vmem:[%s2427 + $0x84] sm:$0xf]
        %v2462 = vld [vmem:[%s2427 + $0x88] sm:$0xf]
        %v2463 = vld [vmem:[%s2427 + $0x8c] sm:$0xf]
        %v2464 = vld [vmem:[%s2427 + $0x90] sm:$0xf]
        %v2465 = vld [vmem:[%s2427 + $0x94] sm:$0x3]
        %v2504 = vunpack.c.l.b16 %v2428
        %v2505 = vunpack.c.l.b16 %v2429
        %v2506 = vunpack.c.l.b16 %v2430
        %v2507 = vunpack.c.l.b16 %v2431
        %v2508 = vunpack.c.l.b16 %v2432
        %v2509 = vunpack.c.l.b16 %v2433
        %v2510 = vunpack.c.l.b16 %v2434
        %v2511 = vunpack.c.l.b16 %v2435
        %v2512 = vunpack.c.l.b16 %v2436
        %v2513 = vunpack.c.l.b16 %v2437
        %v2514 = vunpack.c.l.b16 %v2438
        %v2515 = vunpack.c.l.b16 %v2439
        %v2516 = vunpack.c.l.b16 %v2440
        %v2517 = vunpack.c.l.b16 %v2441
        %v2518 = vunpack.c.l.b16 %v2442
        %v2519 = vunpack.c.l.b16 %v2443
        %v2520 = vunpack.c.l.b16 %v2444
        %v2521 = vunpack.c.l.b16 %v2445
        %v2522 = vunpack.c.l.b16 %v2446
        %v2523 = vunpack.c.l.b16 %v2447
        %v2524 = vunpack.c.l.b16 %v2448
        %v2525 = vunpack.c.l.b16 %v2449
        %v2526 = vunpack.c.l.b16 %v2450
        %v2527 = vunpack.c.l.b16 %v2451
        %v2528 = vunpack.c.l.b16 %v2452
        %v2529 = vunpack.c.l.b16 %v2453
        %v2530 = vunpack.c.l.b16 %v2454
        %v2531 = vunpack.c.l.b16 %v2455
        %v2532 = vunpack.c.l.b16 %v2456
        %v2533 = vunpack.c.l.b16 %v2457
        %v2534 = vunpack.c.l.b16 %v2458
        %v2535 = vunpack.c.l.b16 %v2459
        %v2536 = vunpack.c.l.b16 %v2460
        %v2537 = vunpack.c.l.b16 %v2461
        %v2538 = vunpack.c.l.b16 %v2462
        %v2539 = vunpack.c.l.b16 %v2463
        %v2540 = vunpack.c.l.b16 %v2464
        %v2541 = vunpack.c.l.b16 %v2465
        %v2542 = vpack.c.b16 %v2505, %v2504
        %v2543 = vpack.c.b16 %v2507, %v2506
        %v2544 = vpack.c.b16 %v2509, %v2508
        %v2545 = vpack.c.b16 %v2511, %v2510
        %v2546 = vpack.c.b16 %v2513, %v2512
        %v2547 = vpack.c.b16 %v2515, %v2514
        %v2548 = vpack.c.b16 %v2517, %v2516
        %v2549 = vpack.c.b16 %v2519, %v2518
        %v2550 = vpack.c.b16 %v2521, %v2520
        %v2551 = vpack.c.b16 %v2523, %v2522
        %v2552 = vpack.c.b16 %v2525, %v2524
        %v2553 = vpack.c.b16 %v2527, %v2526
        %v2554 = vpack.c.b16 %v2529, %v2528
        %v2555 = vpack.c.b16 %v2531, %v2530
        %v2556 = vpack.c.b16 %v2533, %v2532
        %v2557 = vpack.c.b16 %v2535, %v2534
        %v2558 = vpack.c.b16 %v2537, %v2536
        %v2559 = vpack.c.b16 %v2539, %v2538
        %v2560 = vpack.c.b16 %v2541, %v2540
        %v2580 = vsel %vm894, %v2423, 0
        %v2583 = vsel %vm894, %v2426, 0
        %v2586 = vsel %vm901, %v2560, 0
        %2588 = vmatprep.subr.bf16.mxu0 0
        %2589 = vmatpush1.bf16.msra.mxu0 %v2542
        %2590 = vmatprep.subr.bf16.mxu0 0
        %2591 = vmatpush1.bf16.msra.mxu0 %v2543
        %2592 = vmatprep.subr.bf16.mxu0 0
        %2593 = vmatpush1.bf16.msra.mxu0 %v2544
        %2594 = vmatprep.subr.bf16.mxu0 0
        %2595 = vmatpush1.bf16.msra.mxu0 %v2545
        %2596 = vmatprep.subr.bf16.mxu0 0
        %2597 = vmatpush1.bf16.msra.mxu0 %v2546
        %2598 = vmatprep.subr.bf16.mxu0 0
        %2599 = vmatpush1.bf16.msra.mxu0 %v2547
        %2600 = vmatprep.subr.bf16.mxu0 0
        %2601 = vmatpush1.bf16.msra.mxu0 %v2548
        %2602 = vmatprep.subr.bf16.mxu0 0
        %2603 = vmatpush1.bf16.msra.mxu0 %v2549
        %2604 = vmatprep.subr.bf16.mxu0 0
        %2605 = vmatpush1.bf16.msra.mxu0 %v2550
        %2606 = vmatprep.subr.bf16.mxu0 0
        %2607 = vmatpush1.bf16.msra.mxu0 %v2551
        %2608 = vmatprep.subr.bf16.mxu0 0
        %2609 = vmatpush1.bf16.msra.mxu0 %v2552
        %2610 = vmatprep.subr.bf16.mxu0 0
        %2611 = vmatpush1.bf16.msra.mxu0 %v2553
        %2612 = vmatprep.subr.bf16.mxu0 0
        %2613 = vmatpush1.bf16.msra.mxu0 %v2554
        %2614 = vmatprep.subr.bf16.mxu0 0
        %2615 = vmatpush1.bf16.msra.mxu0 %v2555
        %2616 = vmatprep.subr.bf16.mxu0 0
        %2617 = vmatpush1.bf16.msra.mxu0 %v2556
        %2618 = vmatprep.subr.bf16.mxu0 0
        %2619 = vmatpush1.bf16.msra.mxu0 %v2557
        %2620 = vmatprep.mubr.bf16.mxu0 %v2422
        %2621 = vmatmul.mubr.bf16.gmra.mrb[0].mxu0 %v2421
        %v2622 = vpop.f32.mrb[0].mxu0
        %v2623 = vadd.f32 0.0, %v2622
        %v2624 = vpop.f32.mrb[0].mxu0
        %v2625 = vpop.f32.mrb[0].mxu0
        %v2626 = vadd.f32 0.0, %v2625
        %v2627 = vpop.f32.mrb[0].mxu0
        %2628 = vmatprep.mubr.bf16.mxu0 %v2425
        %2629 = vmatmul.mubr.bf16.gmra.mrb[0].mxu0 %v2424
        %v2630 = vpop.f32.mrb[0].mxu0
        %v2631 = vadd.f32 0.0, %v2630
        %v2632 = vpop.f32.mrb[0].mxu0
        %v2633 = vpop.f32.mrb[0].mxu0
        %v2634 = vpop.f32.mrb[0].mxu0
        %2635 = vdwg.mxu0
        %2636 = vmatprep.subr.bf16.mxu0 0
        %2637 = vmatpush1.bf16.msra.mxu0 %v2558
        %2638 = vmatprep.subr.bf16.mxu0 0
        %2639 = vmatpush1.bf16.msra.mxu0 %v2559
        %2640 = vmatprep.subr.bf16.mxu0 0
        %2641 = vmatpush1.bf16.msra.mxu0 %v2586
        %2642 = vmatprep.subr.bf16.mxu0 0
        %2643 = vmatpush1.bf16.msra.mxu0 0
        %2644 = vmatprep.subr.bf16.mxu0 0
        %2645 = vmatpush1.bf16.msra.mxu0 0
        %2646 = vmatprep.subr.bf16.mxu0 0
        %2647 = vmatpush1.bf16.msra.mxu0 0
        %2648 = vmatprep.subr.bf16.mxu0 0
        %2649 = vmatpush1.bf16.msra.mxu0 0
        %2650 = vmatprep.subr.bf16.mxu0 0
        %2651 = vmatpush1.bf16.msra.mxu0 0
        %2652 = vmatprep.subr.bf16.mxu0 0
        %2653 = vmatpush1.bf16.msra.mxu0 0
        %2654 = vmatprep.subr.bf16.mxu0 0
        %2655 = vmatpush1.bf16.msra.mxu0 0
        %2656 = vmatprep.subr.bf16.mxu0 0
        %2657 = vmatpush1.bf16.msra.mxu0 0
        %2658 = vmatprep.subr.bf16.mxu0 0
        %2659 = vmatpush1.bf16.msra.mxu0 0
        %2660 = vmatprep.subr.bf16.mxu0 0
        %2661 = vmatpush1.bf16.msra.mxu0 0
        %2662 = vmatprep.subr.bf16.mxu0 0
        %2663 = vmatpush1.bf16.msra.mxu0 0
        %2664 = vmatprep.subr.bf16.mxu0 0
        %2665 = vmatpush1.bf16.msra.mxu0 0
        %2666 = vmatprep.subr.bf16.mxu0 0
        %2667 = vmatpush1.bf16.msra.mxu0 0
        %2668 = vmatprep.mubr.bf16.mxu0 0
        %2669 = vmatmul.mubr.bf16.gmra.mrb[0].mxu0 %v2580
        %v2670 = vpop.f32.mrb[0].mxu0
        %v2671 = vadd.f32 %v2623, %v2670
        %v2672 = vpop.f32.mrb[0].mxu0
        %v2673 = vpop.f32.mrb[0].mxu0
        %v2674 = vadd.f32 %v2626, %v2673
        %v2675 = vpop.f32.mrb[0].mxu0
        %2676 = vmatprep.mubr.bf16.mxu0 0
        %2677 = vmatmul.mubr.bf16.gmra.mrb[0].mxu0 %v2583
        %v2678 = vpop.f32.mrb[0].mxu0
        %v2679 = vadd.f32 %v2631, %v2678
        %v2680 = vpop.f32.mrb[0].mxu0
        %v2681 = vpop.f32.mrb[0].mxu0
        %v2682 = vpop.f32.mrb[0].mxu0
        %2683 = vdwg.mxu0
        %v2722 = vunpack.c.l.b16 %v2175
        %v2723 = vunpack.c.l.b16 %v2176
        %v2724 = vunpack.c.l.b16 %v2177
        %v2725 = vunpack.c.l.b16 %v2178
        %v2726 = vunpack.c.l.b16 %v2179
        %v2727 = vunpack.c.l.b16 %v2180
        %v2728 = vunpack.c.l.b16 %v2181
        %v2729 = vunpack.c.l.b16 %v2182
        %v2730 = vunpack.c.l.b16 %v2183
        %v2731 = vunpack.c.l.b16 %v2184
        %v2732 = vunpack.c.l.b16 %v2185
        %v2733 = vunpack.c.l.b16 %v2186
        %v2734 = vunpack.c.l.b16 %v2187
        %v2735 = vunpack.c.l.b16 %v2188
        %v2736 = vunpack.c.l.b16 %v2189
        %v2737 = vunpack.c.l.b16 %v2190
        %v2738 = vunpack.c.l.b16 %v2191
        %v2739 = vunpack.c.l.b16 %v2192
        %v2740 = vunpack.c.l.b16 %v2193
        %v2741 = vunpack.c.l.b16 %v2194
        %v2742 = vunpack.c.l.b16 %v2195
        %v2743 = vunpack.c.l.b16 %v2196
        %v2744 = vunpack.c.l.b16 %v2197
        %v2745 = vunpack.c.l.b16 %v2198
        %v2746 = vunpack.c.l.b16 %v2199
        %v2747 = vunpack.c.l.b16 %v2200
        %v2748 = vunpack.c.l.b16 %v2201
        %v2749 = vunpack.c.l.b16 %v2202
        %v2750 = vunpack.c.l.b16 %v2203
        %v2751 = vunpack.c.l.b16 %v2204
        %v2752 = vunpack.c.l.b16 %v2205
        %v2753 = vunpack.c.l.b16 %v2206
        %v2754 = vunpack.c.l.b16 %v2207
        %v2755 = vunpack.c.l.b16 %v2208
        %v2756 = vunpack.c.l.b16 %v2209
        %v2757 = vunpack.c.l.b16 %v2210
        %v2758 = vunpack.c.l.b16 %v2211
        %v2759 = vunpack.c.l.b16 %v2212
        %v2760 = vpack.c.b16 %v2723, %v2722
        %v2761 = vpack.c.b16 %v2725, %v2724
        %v2762 = vpack.c.b16 %v2727, %v2726
        %v2763 = vpack.c.b16 %v2729, %v2728
        %v2764 = vpack.c.b16 %v2731, %v2730
        %v2765 = vpack.c.b16 %v2733, %v2732
        %v2766 = vpack.c.b16 %v2735, %v2734
        %v2767 = vpack.c.b16 %v2737, %v2736
        %v2768 = vpack.c.b16 %v2739, %v2738
        %v2769 = vpack.c.b16 %v2741, %v2740
        %v2770 = vpack.c.b16 %v2743, %v2742
        %v2771 = vpack.c.b16 %v2745, %v2744
        %v2772 = vpack.c.b16 %v2747, %v2746
        %v2773 = vpack.c.b16 %v2749, %v2748
        %v2774 = vpack.c.b16 %v2751, %v2750
        %v2775 = vpack.c.b16 %v2753, %v2752
        %v2776 = vpack.c.b16 %v2755, %v2754
        %v2777 = vpack.c.b16 %v2757, %v2756
        %v2778 = vpack.c.b16 %v2759, %v2758
        %v2798 = vsel %vm894, %v2170, 0
        %v2801 = vsel %vm894, %v2173, 0
        %v2804 = vsel %vm901, %v2778, 0
        %2806 = vmatprep.subr.bf16.mxu0 0
        %2807 = vmatpush1.bf16.msra.mxu0 %v2760
        %2808 = vmatprep.subr.bf16.mxu0 0
        %2809 = vmatpush1.bf16.msra.mxu0 %v2761
        %2810 = vmatprep.subr.bf16.mxu0 0
        %2811 = vmatpush1.bf16.msra.mxu0 %v2762
        %2812 = vmatprep.subr.bf16.mxu0 0
        %2813 = vmatpush1.bf16.msra.mxu0 %v2763
        %2814 = vmatprep.subr.bf16.mxu0 0
        %2815 = vmatpush1.bf16.msra.mxu0 %v2764
        %2816 = vmatprep.subr.bf16.mxu0 0
        %2817 = vmatpush1.bf16.msra.mxu0 %v2765
        %2818 = vmatprep.subr.bf16.mxu0 0
        %2819 = vmatpush1.bf16.msra.mxu0 %v2766
        %2820 = vmatprep.subr.bf16.mxu0 0
        %2821 = vmatpush1.bf16.msra.mxu0 %v2767
        %2822 = vmatprep.subr.bf16.mxu0 0
        %2823 = vmatpush1.bf16.msra.mxu0 %v2768
        %2824 = vmatprep.subr.bf16.mxu0 0
        %2825 = vmatpush1.bf16.msra.mxu0 %v2769
        %2826 = vmatprep.subr.bf16.mxu0 0
        %2827 = vmatpush1.bf16.msra.mxu0 %v2770
        %2828 = vmatprep.subr.bf16.mxu0 0
        %2829 = vmatpush1.bf16.msra.mxu0 %v2771
        %2830 = vmatprep.subr.bf16.mxu0 0
        %2831 = vmatpush1.bf16.msra.mxu0 %v2772
        %2832 = vmatprep.subr.bf16.mxu0 0
        %2833 = vmatpush1.bf16.msra.mxu0 %v2773
        %2834 = vmatprep.subr.bf16.mxu0 0
        %2835 = vmatpush1.bf16.msra.mxu0 %v2774
        %2836 = vmatprep.subr.bf16.mxu0 0
        %2837 = vmatpush1.bf16.msra.mxu0 %v2775
        %2838 = vmatprep.mubr.bf16.mxu0 %v2169
        %2839 = vmatmul.mubr.bf16.gmra.mrb[0].mxu0 %v2168
        %v2840 = vpop.f32.mrb[0].mxu0
        %v2841 = vadd.f32 %v2671, %v2840
        %v2842 = vpop.f32.mrb[0].mxu0
        %v2843 = vpop.f32.mrb[0].mxu0
        %v2844 = vadd.f32 %v2674, %v2843
        %v2845 = vpop.f32.mrb[0].mxu0
        %2846 = vmatprep.mubr.bf16.mxu0 %v2172
        %2847 = vmatmul.mubr.bf16.gmra.mrb[0].mxu0 %v2171
        %v2848 = vpop.f32.mrb[0].mxu0
        %v2849 = vadd.f32 %v2679, %v2848
        %v2850 = vpop.f32.mrb[0].mxu0
        %v2851 = vpop.f32.mrb[0].mxu0
        %v2852 = vpop.f32.mrb[0].mxu0
        %2853 = vdwg.mxu0
        %2854 = vmatprep.subr.bf16.mxu0 0
        %2855 = vmatpush1.bf16.msra.mxu0 %v2776
        %2856 = vmatprep.subr.bf16.mxu0 0
        %2857 = vmatpush1.bf16.msra.mxu0 %v2777
        %2858 = vmatprep.subr.bf16.mxu0 0
        %2859 = vmatpush1.bf16.msra.mxu0 %v2804
        %2860 = vmatprep.subr.bf16.mxu0 0
        %2861 = vmatpush1.bf16.msra.mxu0 0
        %2862 = vmatprep.subr.bf16.mxu0 0
        %2863 = vmatpush1.bf16.msra.mxu0 0
        %2864 = vmatprep.subr.bf16.mxu0 0
        %2865 = vmatpush1.bf16.msra.mxu0 0
        %2866 = vmatprep.subr.bf16.mxu0 0
        %2867 = vmatpush1.bf16.msra.mxu0 0
        %2868 = vmatprep.subr.bf16.mxu0 0
        %2869 = vmatpush1.bf16.msra.mxu0 0
        %2870 = vmatprep.subr.bf16.mxu0 0
        %2871 = vmatpush1.bf16.msra.mxu0 0
        %2872 = vmatprep.subr.bf16.mxu0 0
        %2873 = vmatpush1.bf16.msra.mxu0 0
        %2874 = vmatprep.subr.bf16.mxu0 0
        %2875 = vmatpush1.bf16.msra.mxu0 0
        %2876 = vmatprep.subr.bf16.mxu0 0
        %2877 = vmatpush1.bf16.msra.mxu0 0
        %2878 = vmatprep.subr.bf16.mxu0 0
        %2879 = vmatpush1.bf16.msra.mxu0 0
        %2880 = vmatprep.subr.bf16.mxu0 0
        %2881 = vmatpush1.bf16.msra.mxu0 0
        %2882 = vmatprep.subr.bf16.mxu0 0
        %2883 = vmatpush1.bf16.msra.mxu0 0
        %2884 = vmatprep.subr.bf16.mxu0 0
        %2885 = vmatpush1.bf16.msra.mxu0 0
        %2886 = vmatprep.mubr.bf16.mxu0 0
        %2887 = vmatmul.mubr.bf16.gmra.mrb[0].mxu0 %v2798
        %v2888 = vpop.f32.mrb[0].mxu0
        %v2889 = vadd.f32 %v2841, %v2888
        %v2890 = vpop.f32.mrb[0].mxu0
        %v2891 = vpop.f32.mrb[0].mxu0
        %v2892 = vadd.f32 %v2844, %v2891
        %v2893 = vpop.f32.mrb[0].mxu0
        %2894 = vmatprep.mubr.bf16.mxu0 0
        %2895 = vmatmul.mubr.bf16.gmra.mrb[0].mxu0 %v2801
        %v2896 = vpop.f32.mrb[0].mxu0
        %v2897 = vadd.f32 %v2849, %v2896
        %v2898 = vpop.f32.mrb[0].mxu0
        %v2899 = vpop.f32.mrb[0].mxu0
        %v2900 = vpop.f32.mrb[0].mxu0
        %2901 = vdwg.mxu0
        %v2902 = vcombine.high %v1820, %v1820
        %v2903 = vcombine.high %v1874, %v1874
        %v2904 = vcombine.high %v1928, %v1928
        %v2905 = vcombine.high %v1982, %v1982
        %v2906 = vcombine.low %v1820, %v2220
        %v2907 = vcombine.low %v2902, %v1882
        %v2909 = vunpack.c.l.s4 1966171168
        %v2910 = vunpack.c.0.s8 %v2909
        %v2911 = vlaneseq
        %v2912 = vshrl.u32 %v2911, 7
        %v2913 = vsub.s32 %v2910, %v2912
        %v2914 = vrot.slane %v2906, %v2913
        %v2916 = vunpack.c.l.s4 1966171168
        %v2917 = vunpack.c.0.s8 %v2916
        %v2918 = vlaneseq
        %v2919 = vshrl.u32 %v2918, 7
        %v2920 = vsub.s32 %v2917, %v2919
        %v2921 = vrot.slane %v2907, %v2920
        %v2922 = vcombine.low %v2009, %v2914
        %v2923 = vcombine.high %v2009, %v2914
        %v2924 = vcombine.low %v2921, %v2069
        %v2925 = vcombine.high %v2921, %v2069
        %v2927 = vunpack.c.l.s4 1966171168
        %v2928 = vunpack.c.0.s8 %v2927
        %v2929 = vlaneseq
        %v2930 = vshrl.u32 %v2929, 7
        %v2931 = vsub.s32 %v2928, %v2930
        %v2932 = vrot.slane %v2922, %v2931
        %v2934 = vunpack.c.l.s4 1966171168
        %v2935 = vunpack.c.0.s8 %v2934
        %v2936 = vlaneseq
        %v2937 = vshrl.u32 %v2936, 7
        %v2938 = vsub.s32 %v2935, %v2937
        %v2939 = vrot.slane %v2923, %v2938
        %v2941 = vunpack.c.l.s4 1966171168
        %v2942 = vunpack.c.0.s8 %v2941
        %v2943 = vlaneseq
        %v2944 = vshrl.u32 %v2943, 7
        %v2945 = vsub.s32 %v2942, %v2944
        %v2946 = vrot.slane %v2924, %v2945
        %v2948 = vunpack.c.l.s4 1966171168
        %v2949 = vunpack.c.0.s8 %v2948
        %v2950 = vlaneseq
        %v2951 = vshrl.u32 %v2950, 7
        %v2952 = vsub.s32 %v2949, %v2951
        %v2953 = vrot.slane %v2925, %v2952
        %v2954 = vcombine.low %v2932, %v2946
        %v2955 = vcombine.high %v2932, %v2946
        %v2956 = vcombine.low %v2939, %v2953
        %v2957 = vcombine.low %v2228, %v2903
        %v2958 = vcombine.low %v1928, %v2236
        %v2959 = vcombine.low %v2904, %v1990
        %v2961 = vunpack.c.l.s4 1966171168
        %v2962 = vunpack.c.0.s8 %v2961
        %v2963 = vlaneseq
        %v2964 = vshrl.u32 %v2963, 7
        %v2965 = vsub.s32 %v2962, %v2964
        %v2966 = vrot.slane %v2957, %v2965
        %v2968 = vunpack.c.l.s4 1966171168
        %v2969 = vunpack.c.0.s8 %v2968
        %v2970 = vlaneseq
        %v2971 = vshrl.u32 %v2970, 7
        %v2972 = vsub.s32 %v2969, %v2971
        %v2973 = vrot.slane %v2958, %v2972
        %v2975 = vunpack.c.l.s4 1966171168
        %v2976 = vunpack.c.0.s8 %v2975
        %v2977 = vlaneseq
        %v2978 = vshrl.u32 %v2977, 7
        %v2979 = vsub.s32 %v2976, %v2978
        %v2980 = vrot.slane %v2959, %v2979
        %v2981 = vcombine.low %v2966, %v2083
        %v2982 = vcombine.high %v2966, %v2083
        %v2983 = vcombine.low %v2973, %v2980
        %v2984 = vcombine.high %v2973, %v2980
        %v2986 = vunpack.c.l.s4 1966171168
        %v2987 = vunpack.c.0.s8 %v2986
        %v2988 = vlaneseq
        %v2989 = vshrl.u32 %v2988, 7
        %v2990 = vsub.s32 %v2987, %v2989
        %v2991 = vrot.slane %v2981, %v2990
        %v2993 = vunpack.c.l.s4 1966171168
        %v2994 = vunpack.c.0.s8 %v2993
        %v2995 = vlaneseq
        %v2996 = vshrl.u32 %v2995, 7
        %v2997 = vsub.s32 %v2994, %v2996
        %v2998 = vrot.slane %v2982, %v2997
        %v3000 = vunpack.c.l.s4 1966171168
        %v3001 = vunpack.c.0.s8 %v3000
        %v3002 = vlaneseq
        %v3003 = vshrl.u32 %v3002, 7
        %v3004 = vsub.s32 %v3001, %v3003
        %v3005 = vrot.slane %v2983, %v3004
        %v3007 = vunpack.c.l.s4 1966171168
        %v3008 = vunpack.c.0.s8 %v3007
        %v3009 = vlaneseq
        %v3010 = vshrl.u32 %v3009, 7
        %v3011 = vsub.s32 %v3008, %v3010
        %v3012 = vrot.slane %v2984, %v3011
        %v3013 = vcombine.low %v2991, %v3005
        %v3014 = vcombine.high %v2991, %v3005
        %v3015 = vcombine.low %v2998, %v3012
        %v3016 = vcombine.low %v2244, %v2905
        %v3018 = vunpack.c.l.s4 1966171168
        %v3019 = vunpack.c.0.s8 %v3018
        %v3020 = vlaneseq
        %v3021 = vshrl.u32 %v3020, 7
        %v3022 = vsub.s32 %v3019, %v3021
        %v3023 = vrot.slane %v3016, %v3022
        %v3024 = vcombine.low %v2141, %v3023
        %v3025 = vcombine.high %v2141, %v3023
        %v3027 = vunpack.c.l.s4 1966171168
        %v3028 = vunpack.c.0.s8 %v3027
        %v3029 = vlaneseq
        %v3030 = vshrl.u32 %v3029, 7
        %v3031 = vsub.s32 %v3028, %v3030
        %v3032 = vrot.slane %v3024, %v3031
        %v3034 = vunpack.c.l.s4 1966171168
        %v3035 = vunpack.c.0.s8 %v3034
        %v3036 = vlaneseq
        %v3037 = vshrl.u32 %v3036, 7
        %v3038 = vsub.s32 %v3035, %v3037
        %v3039 = vrot.slane %v3025, %v3038
        %v3040 = vcombine.high %v3032, %v3032
        %v3050 = vpack.c.bf16 %v3013, %v2954
        %v3051 = vpack.c.bf16 %v3015, %v2956
        %v3052 = vpack.c.bf16 %v3014, %v2955
        %v3053 = vpack.c.bf16 %v3032, %v3032
        %v3054 = vpack.c.bf16 %v3039, %v3039
        %v3055 = vpack.c.bf16 %v3040, %v3040
        %s3056 = scalar_lea.vmem [#allocation2], 760
        %v3057 = vld [vmem:[%s3056] sm:$0xf]
        %v3058 = vld [vmem:[%s3056 + $0x4] sm:$0xf]
        %v3059 = vld [vmem:[%s3056 + $0x8] sm:$0xf]
        %v3060 = vld [vmem:[%s3056 + $0xc] sm:$0xf]
        %v3061 = vld [vmem:[%s3056 + $0x10] sm:$0xf]
        %v3062 = vld [vmem:[%s3056 + $0x14] sm:$0xf]
        %v3063 = vld [vmem:[%s3056 + $0x18] sm:$0xf]
        %v3064 = vld [vmem:[%s3056 + $0x1c] sm:$0xf]
        %v3065 = vld [vmem:[%s3056 + $0x20] sm:$0xf]
        %v3066 = vld [vmem:[%s3056 + $0x24] sm:$0xf]
        %v3067 = vld [vmem:[%s3056 + $0x28] sm:$0xf]
        %v3068 = vld [vmem:[%s3056 + $0x2c] sm:$0xf]
        %v3069 = vld [vmem:[%s3056 + $0x30] sm:$0xf]
        %v3070 = vld [vmem:[%s3056 + $0x34] sm:$0xf]
        %v3071 = vld [vmem:[%s3056 + $0x38] sm:$0xf]
        %v3072 = vld [vmem:[%s3056 + $0x3c] sm:$0xf]
        %v3073 = vld [vmem:[%s3056 + $0x40] sm:$0xf]
        %v3074 = vld [vmem:[%s3056 + $0x44] sm:$0xf]
        %v3075 = vld [vmem:[%s3056 + $0x48] sm:$0xf]
        %v3076 = vld [vmem:[%s3056 + $0x4c] sm:$0xf]
        %v3077 = vld [vmem:[%s3056 + $0x50] sm:$0xf]
        %v3078 = vld [vmem:[%s3056 + $0x54] sm:$0xf]
        %v3079 = vld [vmem:[%s3056 + $0x58] sm:$0xf]
        %v3080 = vld [vmem:[%s3056 + $0x5c] sm:$0xf]
        %v3081 = vld [vmem:[%s3056 + $0x60] sm:$0xf]
        %v3082 = vld [vmem:[%s3056 + $0x64] sm:$0xf]
        %v3083 = vld [vmem:[%s3056 + $0x68] sm:$0xf]
        %v3084 = vld [vmem:[%s3056 + $0x6c] sm:$0xf]
        %v3085 = vld [vmem:[%s3056 + $0x70] sm:$0xf]
        %v3086 = vld [vmem:[%s3056 + $0x74] sm:$0xf]
        %v3087 = vld [vmem:[%s3056 + $0x78] sm:$0xf]
        %v3088 = vld [vmem:[%s3056 + $0x7c] sm:$0xf]
        %v3089 = vld [vmem:[%s3056 + $0x80] sm:$0xf]
        %v3090 = vld [vmem:[%s3056 + $0x84] sm:$0xf]
        %v3091 = vld [vmem:[%s3056 + $0x88] sm:$0xf]
        %v3092 = vld [vmem:[%s3056 + $0x8c] sm:$0xf]
        %v3093 = vld [vmem:[%s3056 + $0x90] sm:$0xf]
        %v3094 = vld [vmem:[%s3056 + $0x94] sm:$0x3]
        %v3133 = vunpack.c.l.b16 %v3057
        %v3134 = vunpack.c.l.b16 %v3058
        %v3135 = vunpack.c.l.b16 %v3059
        %v3136 = vunpack.c.l.b16 %v3060
        %v3137 = vunpack.c.l.b16 %v3061
        %v3138 = vunpack.c.l.b16 %v3062
        %v3139 = vunpack.c.l.b16 %v3063
        %v3140 = vunpack.c.l.b16 %v3064
        %v3141 = vunpack.c.l.b16 %v3065
        %v3142 = vunpack.c.l.b16 %v3066
        %v3143 = vunpack.c.l.b16 %v3067
        %v3144 = vunpack.c.l.b16 %v3068
        %v3145 = vunpack.c.l.b16 %v3069
        %v3146 = vunpack.c.l.b16 %v3070
        %v3147 = vunpack.c.l.b16 %v3071
        %v3148 = vunpack.c.l.b16 %v3072
        %v3149 = vunpack.c.l.b16 %v3073
        %v3150 = vunpack.c.l.b16 %v3074
        %v3151 = vunpack.c.l.b16 %v3075
        %v3152 = vunpack.c.l.b16 %v3076
        %v3153 = vunpack.c.l.b16 %v3077
        %v3154 = vunpack.c.l.b16 %v3078
        %v3155 = vunpack.c.l.b16 %v3079
        %v3156 = vunpack.c.l.b16 %v3080
        %v3157 = vunpack.c.l.b16 %v3081
        %v3158 = vunpack.c.l.b16 %v3082
        %v3159 = vunpack.c.l.b16 %v3083
        %v3160 = vunpack.c.l.b16 %v3084
        %v3161 = vunpack.c.l.b16 %v3085
        %v3162 = vunpack.c.l.b16 %v3086
        %v3163 = vunpack.c.l.b16 %v3087
        %v3164 = vunpack.c.l.b16 %v3088
        %v3165 = vunpack.c.l.b16 %v3089
        %v3166 = vunpack.c.l.b16 %v3090
        %v3167 = vunpack.c.l.b16 %v3091
        %v3168 = vunpack.c.l.b16 %v3092
        %v3169 = vunpack.c.l.b16 %v3093
        %v3170 = vunpack.c.l.b16 %v3094
        %v3171 = vpack.c.b16 %v3134, %v3133
        %v3172 = vpack.c.b16 %v3136, %v3135
        %v3173 = vpack.c.b16 %v3138, %v3137
        %v3174 = vpack.c.b16 %v3140, %v3139
        %v3175 = vpack.c.b16 %v3142, %v3141
        %v3176 = vpack.c.b16 %v3144, %v3143
        %v3177 = vpack.c.b16 %v3146, %v3145
        %v3178 = vpack.c.b16 %v3148, %v3147
        %v3179 = vpack.c.b16 %v3150, %v3149
        %v3180 = vpack.c.b16 %v3152, %v3151
        %v3181 = vpack.c.b16 %v3154, %v3153
        %v3182 = vpack.c.b16 %v3156, %v3155
        %v3183 = vpack.c.b16 %v3158, %v3157
        %v3184 = vpack.c.b16 %v3160, %v3159
        %v3185 = vpack.c.b16 %v3162, %v3161
        %v3186 = vpack.c.b16 %v3164, %v3163
        %v3187 = vpack.c.b16 %v3166, %v3165
        %v3188 = vpack.c.b16 %v3168, %v3167
        %v3189 = vpack.c.b16 %v3170, %v3169
        %v3209 = vsel %vm894, %v3052, 0
        %v3212 = vsel %vm894, %v3055, 0
        %v3215 = vsel %vm901, %v3189, 0
        %3217 = vmatprep.subr.bf16.mxu0 0
        %3218 = vmatpush1.bf16.msra.mxu0 %v3171
        %3219 = vmatprep.subr.bf16.mxu0 0
        %3220 = vmatpush1.bf16.msra.mxu0 %v3172
        %3221 = vmatprep.subr.bf16.mxu0 0
        %3222 = vmatpush1.bf16.msra.mxu0 %v3173
        %3223 = vmatprep.subr.bf16.mxu0 0
        %3224 = vmatpush1.bf16.msra.mxu0 %v3174
        %3225 = vmatprep.subr.bf16.mxu0 0
        %3226 = vmatpush1.bf16.msra.mxu0 %v3175
        %3227 = vmatprep.subr.bf16.mxu0 0
        %3228 = vmatpush1.bf16.msra.mxu0 %v3176
        %3229 = vmatprep.subr.bf16.mxu0 0
        %3230 = vmatpush1.bf16.msra.mxu0 %v3177
        %3231 = vmatprep.subr.bf16.mxu0 0
        %3232 = vmatpush1.bf16.msra.mxu0 %v3178
        %3233 = vmatprep.subr.bf16.mxu0 0
        %3234 = vmatpush1.bf16.msra.mxu0 %v3179
        %3235 = vmatprep.subr.bf16.mxu0 0
        %3236 = vmatpush1.bf16.msra.mxu0 %v3180
        %3237 = vmatprep.subr.bf16.mxu0 0
        %3238 = vmatpush1.bf16.msra.mxu0 %v3181
        %3239 = vmatprep.subr.bf16.mxu0 0
        %3240 = vmatpush1.bf16.msra.mxu0 %v3182
        %3241 = vmatprep.subr.bf16.mxu0 0
        %3242 = vmatpush1.bf16.msra.mxu0 %v3183
        %3243 = vmatprep.subr.bf16.mxu0 0
        %3244 = vmatpush1.bf16.msra.mxu0 %v3184
        %3245 = vmatprep.subr.bf16.mxu0 0
        %3246 = vmatpush1.bf16.msra.mxu0 %v3185
        %3247 = vmatprep.subr.bf16.mxu0 0
        %3248 = vmatpush1.bf16.msra.mxu0 %v3186
        %3249 = vmatprep.mubr.bf16.mxu0 %v3051
        %3250 = vmatmul.mubr.bf16.gmra.mrb[0].mxu0 %v3050
        %v3251 = vpop.f32.mrb[0].mxu0
        %v3252 = vadd.f32 0.0, %v3251
        %v3253 = vpop.f32.mrb[0].mxu0
        %v3254 = vpop.f32.mrb[0].mxu0
        %v3255 = vadd.f32 0.0, %v3254
        %v3256 = vpop.f32.mrb[0].mxu0
        %3257 = vmatprep.mubr.bf16.mxu0 %v3054
        %3258 = vmatmul.mubr.bf16.gmra.mrb[0].mxu0 %v3053
        %v3259 = vpop.f32.mrb[0].mxu0
        %v3260 = vadd.f32 0.0, %v3259
        %v3261 = vpop.f32.mrb[0].mxu0
        %v3262 = vpop.f32.mrb[0].mxu0
        %v3263 = vpop.f32.mrb[0].mxu0
        %3264 = vdwg.mxu0
        %3265 = vmatprep.subr.bf16.mxu0 0
        %3266 = vmatpush1.bf16.msra.mxu0 %v3187
        %3267 = vmatprep.subr.bf16.mxu0 0
        %3268 = vmatpush1.bf16.msra.mxu0 %v3188
        %3269 = vmatprep.subr.bf16.mxu0 0
        %3270 = vmatpush1.bf16.msra.mxu0 %v3215
        %3271 = vmatprep.subr.bf16.mxu0 0
        %3272 = vmatpush1.bf16.msra.mxu0 0
        %3273 = vmatprep.subr.bf16.mxu0 0
        %3274 = vmatpush1.bf16.msra.mxu0 0
        %3275 = vmatprep.subr.bf16.mxu0 0
        %3276 = vmatpush1.bf16.msra.mxu0 0
        %3277 = vmatprep.subr.bf16.mxu0 0
        %3278 = vmatpush1.bf16.msra.mxu0 0
        %3279 = vmatprep.subr.bf16.mxu0 0
        %3280 = vmatpush1.bf16.msra.mxu0 0
        %3281 = vmatprep.subr.bf16.mxu0 0
        %3282 = vmatpush1.bf16.msra.mxu0 0
        %3283 = vmatprep.subr.bf16.mxu0 0
        %3284 = vmatpush1.bf16.msra.mxu0 0
        %3285 = vmatprep.subr.bf16.mxu0 0
        %3286 = vmatpush1.bf16.msra.mxu0 0
        %3287 = vmatprep.subr.bf16.mxu0 0
        %3288 = vmatpush1.bf16.msra.mxu0 0
        %3289 = vmatprep.subr.bf16.mxu0 0
        %3290 = vmatpush1.bf16.msra.mxu0 0
        %3291 = vmatprep.subr.bf16.mxu0 0
        %3292 = vmatpush1.bf16.msra.mxu0 0
        %3293 = vmatprep.subr.bf16.mxu0 0
        %3294 = vmatpush1.bf16.msra.mxu0 0
        %3295 = vmatprep.subr.bf16.mxu0 0
        %3296 = vmatpush1.bf16.msra.mxu0 0
        %3297 = vmatprep.mubr.bf16.mxu0 0
        %3298 = vmatmul.mubr.bf16.gmra.mrb[0].mxu0 %v3209
        %v3299 = vpop.f32.mrb[0].mxu0
        %v3300 = vadd.f32 %v3252, %v3299
        %v3301 = vpop.f32.mrb[0].mxu0
        %v3302 = vpop.f32.mrb[0].mxu0
        %v3303 = vadd.f32 %v3255, %v3302
        %v3304 = vpop.f32.mrb[0].mxu0
        %3305 = vmatprep.mubr.bf16.mxu0 0
        %3306 = vmatmul.mubr.bf16.gmra.mrb[0].mxu0 %v3212
        %v3307 = vpop.f32.mrb[0].mxu0
        %v3308 = vadd.f32 %v3260, %v3307
        %v3309 = vpop.f32.mrb[0].mxu0
        %v3310 = vpop.f32.mrb[0].mxu0
        %v3311 = vpop.f32.mrb[0].mxu0
        %3312 = vdwg.mxu0
        %v3313 = vadd.f32 %v2889, %v3300
        %v3314 = vadd.f32 %v2892, %v3303
        %v3315 = vadd.f32 %v2897, %v3308
        %v3316 = vcombine.high %v2220, %v2220
        %v3317 = vcombine.high %v2228, %v2228
        %v3318 = vcombine.high %v2236, %v2236
        %v3319 = vcombine.high %v2244, %v2244
        %v3320 = vcombine.low %v2220, %v2902
        %v3321 = vcombine.low %v3316, %v1883
        %v3323 = vunpack.c.l.s4 1966171168
        %v3324 = vunpack.c.0.s8 %v3323
        %v3325 = vlaneseq
        %v3326 = vshrl.u32 %v3325, 7
        %v3327 = vsub.s32 %v3324, %v3326
        %v3328 = vrot.slane %v3320, %v3327
        %v3330 = vunpack.c.l.s4 1966171168
        %v3331 = vunpack.c.0.s8 %v3330
        %v3332 = vlaneseq
        %v3333 = vshrl.u32 %v3332, 7
        %v3334 = vsub.s32 %v3331, %v3333
        %v3335 = vrot.slane %v3321, %v3334
        %v3336 = vcombine.low %v2262, %v3328
        %v3337 = vcombine.high %v2262, %v3328
        %v3338 = vcombine.low %v3335, %v2322
        %v3339 = vcombine.high %v3335, %v2322
        %v3341 = vunpack.c.l.s4 1966171168
        %v3342 = vunpack.c.0.s8 %v3341
        %v3343 = vlaneseq
        %v3344 = vshrl.u32 %v3343, 7
        %v3345 = vsub.s32 %v3342, %v3344
        %v3346 = vrot.slane %v3336, %v3345
        %v3348 = vunpack.c.l.s4 1966171168
        %v3349 = vunpack.c.0.s8 %v3348
        %v3350 = vlaneseq
        %v3351 = vshrl.u32 %v3350, 7
        %v3352 = vsub.s32 %v3349, %v3351
        %v3353 = vrot.slane %v3337, %v3352
        %v3355 = vunpack.c.l.s4 1966171168
        %v3356 = vunpack.c.0.s8 %v3355
        %v3357 = vlaneseq
        %v3358 = vshrl.u32 %v3357, 7
        %v3359 = vsub.s32 %v3356, %v3358
        %v3360 = vrot.slane %v3338, %v3359
        %v3362 = vunpack.c.l.s4 1966171168
        %v3363 = vunpack.c.0.s8 %v3362
        %v3364 = vlaneseq
        %v3365 = vshrl.u32 %v3364, 7
        %v3366 = vsub.s32 %v3363, %v3365
        %v3367 = vrot.slane %v3339, %v3366
        %v3368 = vcombine.low %v3346, %v3360
        %v3369 = vcombine.high %v3346, %v3360
        %v3370 = vcombine.low %v3353, %v3367
        %v3371 = vcombine.low %v2903, %v3317
        %v3372 = vcombine.low %v2236, %v2904
        %v3373 = vcombine.low %v3318, %v1991
        %v3375 = vunpack.c.l.s4 1966171168
        %v3376 = vunpack.c.0.s8 %v3375
        %v3377 = vlaneseq
        %v3378 = vshrl.u32 %v3377, 7
        %v3379 = vsub.s32 %v3376, %v3378
        %v3380 = vrot.slane %v3371, %v3379
        %v3382 = vunpack.c.l.s4 1966171168
        %v3383 = vunpack.c.0.s8 %v3382
        %v3384 = vlaneseq
        %v3385 = vshrl.u32 %v3384, 7
        %v3386 = vsub.s32 %v3383, %v3385
        %v3387 = vrot.slane %v3372, %v3386
        %v3389 = vunpack.c.l.s4 1966171168
        %v3390 = vunpack.c.0.s8 %v3389
        %v3391 = vlaneseq
        %v3392 = vshrl.u32 %v3391, 7
        %v3393 = vsub.s32 %v3390, %v3392
        %v3394 = vrot.slane %v3373, %v3393
        %v3395 = vcombine.low %v3380, %v2336
        %v3396 = vcombine.high %v3380, %v2336
        %v3397 = vcombine.low %v3387, %v3394
        %v3398 = vcombine.high %v3387, %v3394
        %v3400 = vunpack.c.l.s4 1966171168
        %v3401 = vunpack.c.0.s8 %v3400
        %v3402 = vlaneseq
        %v3403 = vshrl.u32 %v3402, 7
        %v3404 = vsub.s32 %v3401, %v3403
        %v3405 = vrot.slane %v3395, %v3404
        %v3407 = vunpack.c.l.s4 1966171168
        %v3408 = vunpack.c.0.s8 %v3407
        %v3409 = vlaneseq
        %v3410 = vshrl.u32 %v3409, 7
        %v3411 = vsub.s32 %v3408, %v3410
        %v3412 = vrot.slane %v3396, %v3411
        %v3414 = vunpack.c.l.s4 1966171168
        %v3415 = vunpack.c.0.s8 %v3414
        %v3416 = vlaneseq
        %v3417 = vshrl.u32 %v3416, 7
        %v3418 = vsub.s32 %v3415, %v3417
        %v3419 = vrot.slane %v3397, %v3418
        %v3421 = vunpack.c.l.s4 1966171168
        %v3422 = vunpack.c.0.s8 %v3421
        %v3423 = vlaneseq
        %v3424 = vshrl.u32 %v3423, 7
        %v3425 = vsub.s32 %v3422, %v3424
        %v3426 = vrot.slane %v3398, %v3425
        %v3427 = vcombine.low %v3405, %v3419
        %v3428 = vcombine.high %v3405, %v3419
        %v3429 = vcombine.low %v3412, %v3426
        %v3430 = vcombine.low %v2905, %v3319
        %v3432 = vunpack.c.l.s4 1966171168
        %v3433 = vunpack.c.0.s8 %v3432
        %v3434 = vlaneseq
        %v3435 = vshrl.u32 %v3434, 7
        %v3436 = vsub.s32 %v3433, %v3435
        %v3437 = vrot.slane %v3430, %v3436
        %v3438 = vcombine.low %v2394, %v3437
        %v3439 = vcombine.high %v2394, %v3437
        %v3441 = vunpack.c.l.s4 1966171168
        %v3442 = vunpack.c.0.s8 %v3441
        %v3443 = vlaneseq
        %v3444 = vshrl.u32 %v3443, 7
        %v3445 = vsub.s32 %v3442, %v3444
        %v3446 = vrot.slane %v3438, %v3445
        %v3448 = vunpack.c.l.s4 1966171168
        %v3449 = vunpack.c.0.s8 %v3448
        %v3450 = vlaneseq
        %v3451 = vshrl.u32 %v3450, 7
        %v3452 = vsub.s32 %v3449, %v3451
        %v3453 = vrot.slane %v3439, %v3452
        %v3454 = vcombine.high %v3446, %v3446
        %v3464 = vpack.c.bf16 %v3427, %v3368
        %v3465 = vpack.c.bf16 %v3429, %v3370
        %v3466 = vpack.c.bf16 %v3428, %v3369
        %v3467 = vpack.c.bf16 %v3446, %v3446
        %v3468 = vpack.c.bf16 %v3453, %v3453
        %v3469 = vpack.c.bf16 %v3454, %v3454
        %s3470 = scalar_lea.vmem [#allocation2], 912
        %v3471 = vld [vmem:[%s3470] sm:$0xf]
        %v3472 = vld [vmem:[%s3470 + $0x4] sm:$0xf]
        %v3473 = vld [vmem:[%s3470 + $0x8] sm:$0xf]
        %v3474 = vld [vmem:[%s3470 + $0xc] sm:$0xf]
        %v3475 = vld [vmem:[%s3470 + $0x10] sm:$0xf]
        %v3476 = vld [vmem:[%s3470 + $0x14] sm:$0xf]
        %v3477 = vld [vmem:[%s3470 + $0x18] sm:$0xf]
        %v3478 = vld [vmem:[%s3470 + $0x1c] sm:$0xf]
        %v3479 = vld [vmem:[%s3470 + $0x20] sm:$0xf]
        %v3480 = vld [vmem:[%s3470 + $0x24] sm:$0xf]
        %v3481 = vld [vmem:[%s3470 + $0x28] sm:$0xf]
        %v3482 = vld [vmem:[%s3470 + $0x2c] sm:$0xf]
        %v3483 = vld [vmem:[%s3470 + $0x30] sm:$0xf]
        %v3484 = vld [vmem:[%s3470 + $0x34] sm:$0xf]
        %v3485 = vld [vmem:[%s3470 + $0x38] sm:$0xf]
        %v3486 = vld [vmem:[%s3470 + $0x3c] sm:$0xf]
        %v3487 = vld [vmem:[%s3470 + $0x40] sm:$0xf]
        %v3488 = vld [vmem:[%s3470 + $0x44] sm:$0xf]
        %v3489 = vld [vmem:[%s3470 + $0x48] sm:$0xf]
        %v3490 = vld [vmem:[%s3470 + $0x4c] sm:$0xf]
        %v3491 = vld [vmem:[%s3470 + $0x50] sm:$0xf]
        %v3492 = vld [vmem:[%s3470 + $0x54] sm:$0xf]
        %v3493 = vld [vmem:[%s3470 + $0x58] sm:$0xf]
        %v3494 = vld [vmem:[%s3470 + $0x5c] sm:$0xf]
        %v3495 = vld [vmem:[%s3470 + $0x60] sm:$0xf]
        %v3496 = vld [vmem:[%s3470 + $0x64] sm:$0xf]
        %v3497 = vld [vmem:[%s3470 + $0x68] sm:$0xf]
        %v3498 = vld [vmem:[%s3470 + $0x6c] sm:$0xf]
        %v3499 = vld [vmem:[%s3470 + $0x70] sm:$0xf]
        %v3500 = vld [vmem:[%s3470 + $0x74] sm:$0xf]
        %v3501 = vld [vmem:[%s3470 + $0x78] sm:$0xf]
        %v3502 = vld [vmem:[%s3470 + $0x7c] sm:$0xf]
        %v3503 = vld [vmem:[%s3470 + $0x80] sm:$0xf]
        %v3504 = vld [vmem:[%s3470 + $0x84] sm:$0xf]
        %v3505 = vld [vmem:[%s3470 + $0x88] sm:$0xf]
        %v3506 = vld [vmem:[%s3470 + $0x8c] sm:$0xf]
        %v3507 = vld [vmem:[%s3470 + $0x90] sm:$0xf]
        %v3508 = vld [vmem:[%s3470 + $0x94] sm:$0x3]
        %v3547 = vunpack.c.l.b16 %v3471
        %v3548 = vunpack.c.l.b16 %v3472
        %v3549 = vunpack.c.l.b16 %v3473
        %v3550 = vunpack.c.l.b16 %v3474
        %v3551 = vunpack.c.l.b16 %v3475
        %v3552 = vunpack.c.l.b16 %v3476
        %v3553 = vunpack.c.l.b16 %v3477
        %v3554 = vunpack.c.l.b16 %v3478
        %v3555 = vunpack.c.l.b16 %v3479
        %v3556 = vunpack.c.l.b16 %v3480
        %v3557 = vunpack.c.l.b16 %v3481
        %v3558 = vunpack.c.l.b16 %v3482
        %v3559 = vunpack.c.l.b16 %v3483
        %v3560 = vunpack.c.l.b16 %v3484
        %v3561 = vunpack.c.l.b16 %v3485
        %v3562 = vunpack.c.l.b16 %v3486
        %v3563 = vunpack.c.l.b16 %v3487
        %v3564 = vunpack.c.l.b16 %v3488
        %v3565 = vunpack.c.l.b16 %v3489
        %v3566 = vunpack.c.l.b16 %v3490
        %v3567 = vunpack.c.l.b16 %v3491
        %v3568 = vunpack.c.l.b16 %v3492
        %v3569 = vunpack.c.l.b16 %v3493
        %v3570 = vunpack.c.l.b16 %v3494
        %v3571 = vunpack.c.l.b16 %v3495
        %v3572 = vunpack.c.l.b16 %v3496
        %v3573 = vunpack.c.l.b16 %v3497
        %v3574 = vunpack.c.l.b16 %v3498
        %v3575 = vunpack.c.l.b16 %v3499
        %v3576 = vunpack.c.l.b16 %v3500
        %v3577 = vunpack.c.l.b16 %v3501
        %v3578 = vunpack.c.l.b16 %v3502
        %v3579 = vunpack.c.l.b16 %v3503
        %v3580 = vunpack.c.l.b16 %v3504
        %v3581 = vunpack.c.l.b16 %v3505
        %v3582 = vunpack.c.l.b16 %v3506
        %v3583 = vunpack.c.l.b16 %v3507
        %v3584 = vunpack.c.l.b16 %v3508
        %v3585 = vpack.c.b16 %v3548, %v3547
        %v3586 = vpack.c.b16 %v3550, %v3549
        %v3587 = vpack.c.b16 %v3552, %v3551
        %v3588 = vpack.c.b16 %v3554, %v3553
        %v3589 = vpack.c.b16 %v3556, %v3555
        %v3590 = vpack.c.b16 %v3558, %v3557
        %v3591 = vpack.c.b16 %v3560, %v3559
        %v3592 = vpack.c.b16 %v3562, %v3561
        %v3593 = vpack.c.b16 %v3564, %v3563
        %v3594 = vpack.c.b16 %v3566, %v3565
        %v3595 = vpack.c.b16 %v3568, %v3567
        %v3596 = vpack.c.b16 %v3570, %v3569
        %v3597 = vpack.c.b16 %v3572, %v3571
        %v3598 = vpack.c.b16 %v3574, %v3573
        %v3599 = vpack.c.b16 %v3576, %v3575
        %v3600 = vpack.c.b16 %v3578, %v3577
        %v3601 = vpack.c.b16 %v3580, %v3579
        %v3602 = vpack.c.b16 %v3582, %v3581
        %v3603 = vpack.c.b16 %v3584, %v3583
        %v3623 = vsel %vm894, %v3466, 0
        %v3626 = vsel %vm894, %v3469, 0
        %v3629 = vsel %vm901, %v3603, 0
        %3631 = vmatprep.subr.bf16.mxu0 0
        %3632 = vmatpush1.bf16.msra.mxu0 %v3585
        %3633 = vmatprep.subr.bf16.mxu0 0
        %3634 = vmatpush1.bf16.msra.mxu0 %v3586
        %3635 = vmatprep.subr.bf16.mxu0 0
        %3636 = vmatpush1.bf16.msra.mxu0 %v3587
        %3637 = vmatprep.subr.bf16.mxu0 0
        %3638 = vmatpush1.bf16.msra.mxu0 %v3588
        %3639 = vmatprep.subr.bf16.mxu0 0
        %3640 = vmatpush1.bf16.msra.mxu0 %v3589
        %3641 = vmatprep.subr.bf16.mxu0 0
        %3642 = vmatpush1.bf16.msra.mxu0 %v3590
        %3643 = vmatprep.subr.bf16.mxu0 0
        %3644 = vmatpush1.bf16.msra.mxu0 %v3591
        %3645 = vmatprep.subr.bf16.mxu0 0
        %3646 = vmatpush1.bf16.msra.mxu0 %v3592
        %3647 = vmatprep.subr.bf16.mxu0 0
        %3648 = vmatpush1.bf16.msra.mxu0 %v3593
        %3649 = vmatprep.subr.bf16.mxu0 0
        %3650 = vmatpush1.bf16.msra.mxu0 %v3594
        %3651 = vmatprep.subr.bf16.mxu0 0
        %3652 = vmatpush1.bf16.msra.mxu0 %v3595
        %3653 = vmatprep.subr.bf16.mxu0 0
        %3654 = vmatpush1.bf16.msra.mxu0 %v3596
        %3655 = vmatprep.subr.bf16.mxu0 0
        %3656 = vmatpush1.bf16.msra.mxu0 %v3597
        %3657 = vmatprep.subr.bf16.mxu0 0
        %3658 = vmatpush1.bf16.msra.mxu0 %v3598
        %3659 = vmatprep.subr.bf16.mxu0 0
        %3660 = vmatpush1.bf16.msra.mxu0 %v3599
        %3661 = vmatprep.subr.bf16.mxu0 0
        %3662 = vmatpush1.bf16.msra.mxu0 %v3600
        %3663 = vmatprep.mubr.bf16.mxu0 %v3465
        %3664 = vmatmul.mubr.bf16.gmra.mrb[0].mxu0 %v3464
        %v3665 = vpop.f32.mrb[0].mxu0
        %v3666 = vadd.f32 0.0, %v3665
        %v3667 = vpop.f32.mrb[0].mxu0
        %v3668 = vpop.f32.mrb[0].mxu0
        %v3669 = vadd.f32 0.0, %v3668
        %v3670 = vpop.f32.mrb[0].mxu0
        %3671 = vmatprep.mubr.bf16.mxu0 %v3468
        %3672 = vmatmul.mubr.bf16.gmra.mrb[0].mxu0 %v3467
        %v3673 = vpop.f32.mrb[0].mxu0
        %v3674 = vadd.f32 0.0, %v3673
        %v3675 = vpop.f32.mrb[0].mxu0
        %v3676 = vpop.f32.mrb[0].mxu0
        %v3677 = vpop.f32.mrb[0].mxu0
        %3678 = vdwg.mxu0
        %3679 = vmatprep.subr.bf16.mxu0 0
        %3680 = vmatpush1.bf16.msra.mxu0 %v3601
        %3681 = vmatprep.subr.bf16.mxu0 0
        %3682 = vmatpush1.bf16.msra.mxu0 %v3602
        %3683 = vmatprep.subr.bf16.mxu0 0
        %3684 = vmatpush1.bf16.msra.mxu0 %v3629
        %3685 = vmatprep.subr.bf16.mxu0 0
        %3686 = vmatpush1.bf16.msra.mxu0 0
        %3687 = vmatprep.subr.bf16.mxu0 0
        %3688 = vmatpush1.bf16.msra.mxu0 0
        %3689 = vmatprep.subr.bf16.mxu0 0
        %3690 = vmatpush1.bf16.msra.mxu0 0
        %3691 = vmatprep.subr.bf16.mxu0 0
        %3692 = vmatpush1.bf16.msra.mxu0 0
        %3693 = vmatprep.subr.bf16.mxu0 0
        %3694 = vmatpush1.bf16.msra.mxu0 0
        %3695 = vmatprep.subr.bf16.mxu0 0
        %3696 = vmatpush1.bf16.msra.mxu0 0
        %3697 = vmatprep.subr.bf16.mxu0 0
        %3698 = vmatpush1.bf16.msra.mxu0 0
        %3699 = vmatprep.subr.bf16.mxu0 0
        %3700 = vmatpush1.bf16.msra.mxu0 0
        %3701 = vmatprep.subr.bf16.mxu0 0
        %3702 = vmatpush1.bf16.msra.mxu0 0
        %3703 = vmatprep.subr.bf16.mxu0 0
        %3704 = vmatpush1.bf16.msra.mxu0 0
        %3705 = vmatprep.subr.bf16.mxu0 0
        %3706 = vmatpush1.bf16.msra.mxu0 0
        %3707 = vmatprep.subr.bf16.mxu0 0
        %3708 = vmatpush1.bf16.msra.mxu0 0
        %3709 = vmatprep.subr.bf16.mxu0 0
        %3710 = vmatpush1.bf16.msra.mxu0 0
        %3711 = vmatprep.mubr.bf16.mxu0 0
        %3712 = vmatmul.mubr.bf16.gmra.mrb[0].mxu0 %v3623
        %v3713 = vpop.f32.mrb[0].mxu0
        %v3714 = vadd.f32 %v3666, %v3713
        %v3715 = vpop.f32.mrb[0].mxu0
        %v3716 = vpop.f32.mrb[0].mxu0
        %v3717 = vadd.f32 %v3669, %v3716
        %v3718 = vpop.f32.mrb[0].mxu0
        %3719 = vmatprep.mubr.bf16.mxu0 0
        %3720 = vmatmul.mubr.bf16.gmra.mrb[0].mxu0 %v3626
        %v3721 = vpop.f32.mrb[0].mxu0
        %v3722 = vadd.f32 %v3674, %v3721
        %v3723 = vpop.f32.mrb[0].mxu0
        %v3724 = vpop.f32.mrb[0].mxu0
        %v3725 = vpop.f32.mrb[0].mxu0
        %3726 = vdwg.mxu0
        %v3727 = vadd.f32 %v3313, %v3714
        %v3728 = vadd.f32 %v3314, %v3717
        %v3729 = vadd.f32 %v3315, %v3722
        %s3730 = scalar_lea.vmem %s2, 1
        %v3731 = vld [vmem:[%s3730] sm:$0x1]
        %v3733 = vlaneseq
        %v3734 = vshrl.u32 %v3733, 7
        %v3735 = vsub.s32 0, %v3734
        %v3736 = vrot.slane %v3731, %v3735
        %v3738 = vadd.f32 %v3727, %v3736
        %v3739 = vadd.f32 %v3728, %v3736
        %v3740 = vadd.f32 %v3729, %v3736
        %v3741 = vmax.f32 %v3738, 0.0
        %v3742 = vmax.f32 %v3739, 0.0
        %v3743 = vmax.f32 %v3740, 0.0
        %v3747 = vcombine.high %v3741, %v3741
        %v3749 = vunpack.c.l.s4 1966171168
        %v3750 = vunpack.c.0.s8 %v3749
        %v3751 = vlaneseq
        %v3752 = vshrl.u32 %v3751, 7
        %v3753 = vsub.s32 %v3750, %v3752
        %v3754 = vrot.slane %v3741, %v3753
        %v3756 = vunpack.c.l.s4 1966171168
        %v3757 = vunpack.c.0.s8 %v3756
        %v3758 = vlaneseq
        %v3759 = vshrl.u32 %v3758, 7
        %v3760 = vsub.s32 %v3757, %v3759
        %v3761 = vrot.slane %v3747, %v3760
        %v3762 = vcombine.high %v3754, %v3754
        %v3763 = vcombine.high %v3761, %v3761
        %v3765 = vunpack.c.l.s4 1966171168
        %v3766 = vunpack.c.0.s8 %v3765
        %v3767 = vlaneseq
        %v3768 = vshrl.u32 %v3767, 7
        %v3769 = vsub.s32 %v3766, %v3768
        %v3770 = vrot.slane %v3754, %v3769
        %v3772 = vunpack.c.l.s4 1966171168
        %v3773 = vunpack.c.0.s8 %v3772
        %v3774 = vlaneseq
        %v3775 = vshrl.u32 %v3774, 7
        %v3776 = vsub.s32 %v3773, %v3775
        %v3777 = vrot.slane %v3761, %v3776
        %v3779 = vunpack.c.l.s4 1966171168
        %v3780 = vunpack.c.0.s8 %v3779
        %v3781 = vlaneseq
        %v3782 = vshrl.u32 %v3781, 7
        %v3783 = vsub.s32 %v3780, %v3782
        %v3784 = vrot.slane %v3762, %v3783
        %v3786 = vunpack.c.l.s4 1966171168
        %v3787 = vunpack.c.0.s8 %v3786
        %v3788 = vlaneseq
        %v3789 = vshrl.u32 %v3788, 7
        %v3790 = vsub.s32 %v3787, %v3789
        %v3791 = vrot.slane %v3763, %v3790
        %v3792 = vcombine.high %v3770, %v3770
        %v3793 = vcombine.high %v3777, %v3777
        %v3794 = vcombine.high %v3784, %v3784
        %v3795 = vcombine.high %v3791, %v3791
        %v3796 = vcombine.high %v3742, %v3742
        %v3798 = vunpack.c.l.s4 1966171168
        %v3799 = vunpack.c.0.s8 %v3798
        %v3800 = vlaneseq
        %v3801 = vshrl.u32 %v3800, 7
        %v3802 = vsub.s32 %v3799, %v3801
        %v3803 = vrot.slane %v3742, %v3802
        %v3805 = vunpack.c.l.s4 1966171168
        %v3806 = vunpack.c.0.s8 %v3805
        %v3807 = vlaneseq
        %v3808 = vshrl.u32 %v3807, 7
        %v3809 = vsub.s32 %v3806, %v3808
        %v3810 = vrot.slane %v3796, %v3809
        %v3811 = vcombine.high %v3803, %v3803
        %v3812 = vcombine.high %v3810, %v3810
        %v3814 = vunpack.c.l.s4 1966171168
        %v3815 = vunpack.c.0.s8 %v3814
        %v3816 = vlaneseq
        %v3817 = vshrl.u32 %v3816, 7
        %v3818 = vsub.s32 %v3815, %v3817
        %v3819 = vrot.slane %v3803, %v3818
        %v3821 = vunpack.c.l.s4 1966171168
        %v3822 = vunpack.c.0.s8 %v3821
        %v3823 = vlaneseq
        %v3824 = vshrl.u32 %v3823, 7
        %v3825 = vsub.s32 %v3822, %v3824
        %v3826 = vrot.slane %v3810, %v3825
        %v3828 = vunpack.c.l.s4 1966171168
        %v3829 = vunpack.c.0.s8 %v3828
        %v3830 = vlaneseq
        %v3831 = vshrl.u32 %v3830, 7
        %v3832 = vsub.s32 %v3829, %v3831
        %v3833 = vrot.slane %v3811, %v3832
        %v3835 = vunpack.c.l.s4 1966171168
        %v3836 = vunpack.c.0.s8 %v3835
        %v3837 = vlaneseq
        %v3838 = vshrl.u32 %v3837, 7
        %v3839 = vsub.s32 %v3836, %v3838
        %v3840 = vrot.slane %v3812, %v3839
        %v3841 = vcombine.high %v3819, %v3819
        %v3842 = vcombine.high %v3826, %v3826
        %v3843 = vcombine.high %v3833, %v3833
        %v3844 = vcombine.high %v3840, %v3840
        %v3846 = vunpack.c.l.s4 1966171168
        %v3847 = vunpack.c.0.s8 %v3846
        %v3848 = vlaneseq
        %v3849 = vshrl.u32 %v3848, 7
        %v3850 = vsub.s32 %v3847, %v3849
        %v3851 = vrot.slane %v3743, %v3850
        %v3852 = vcombine.high %v3851, %v3851
        %v3854 = vunpack.c.l.s4 1966171168
        %v3855 = vunpack.c.0.s8 %v3854
        %v3856 = vlaneseq
        %v3857 = vshrl.u32 %v3856, 7
        %v3858 = vsub.s32 %v3855, %v3857
        %v3859 = vrot.slane %v3851, %v3858
        %v3861 = vunpack.c.l.s4 1966171168
        %v3862 = vunpack.c.0.s8 %v3861
        %v3863 = vlaneseq
        %v3864 = vshrl.u32 %v3863, 7
        %v3865 = vsub.s32 %v3862, %v3864
        %v3866 = vrot.slane %v3852, %v3865
        %v3867 = vcombine.high %v3859, %v3859
        %v3868 = vcombine.high %v3866, %v3866
        %v3869 = vcombine.low %v3770, %v3784
        %v3870 = vcombine.low %v3792, %v3794
        %v3872 = vunpack.c.l.s4 1966171168
        %v3873 = vunpack.c.0.s8 %v3872
        %v3874 = vlaneseq
        %v3875 = vshrl.u32 %v3874, 7
        %v3876 = vsub.s32 %v3873, %v3875
        %v3877 = vrot.slane %v3869, %v3876
        %v3879 = vunpack.c.l.s4 1966171168
        %v3880 = vunpack.c.0.s8 %v3879
        %v3881 = vlaneseq
        %v3882 = vshrl.u32 %v3881, 7
        %v3883 = vsub.s32 %v3880, %v3882
        %v3884 = vrot.slane %v3870, %v3883
        %v3886 = vunpack.c.l.s4 1966171168
        %v3887 = vunpack.c.0.s8 %v3886
        %v3888 = vlaneseq
        %v3889 = vshrl.u32 %v3888, 7
        %v3890 = vsub.s32 %v3887, %v3889
        %v3891 = vrot.slane %v3777, %v3890
        %v3892 = vcombine.low %v3877, %v3884
        %v3894 = vunpack.c.l.s4 1966171168
        %v3895 = vunpack.c.0.s8 %v3894
        %v3896 = vlaneseq
        %v3897 = vshrl.u32 %v3896, 7
        %v3898 = vsub.s32 %v3895, %v3897
        %v3899 = vrot.slane %v3892, %v3898
        %v3901 = vunpack.c.l.s4 1966171168
        %v3902 = vunpack.c.0.s8 %v3901
        %v3903 = vlaneseq
        %v3904 = vshrl.u32 %v3903, 7
        %v3905 = vsub.s32 %v3902, %v3904
        %v3906 = vrot.slane %v3891, %v3905
        %v3907 = vcombine.low %v3899, %v3906
        %v3908 = vcombine.low %v3791, %v3793
        %v3909 = vcombine.low %v3795, %v3819
        %v3911 = vunpack.c.l.s4 1966171168
        %v3912 = vunpack.c.0.s8 %v3911
        %v3913 = vlaneseq
        %v3914 = vshrl.u32 %v3913, 7
        %v3915 = vsub.s32 %v3912, %v3914
        %v3916 = vrot.slane %v3908, %v3915
        %v3918 = vunpack.c.l.s4 1966171168
        %v3919 = vunpack.c.0.s8 %v3918
        %v3920 = vlaneseq
        %v3921 = vshrl.u32 %v3920, 7
        %v3922 = vsub.s32 %v3919, %v3921
        %v3923 = vrot.slane %v3909, %v3922
        %v3925 = vunpack.c.l.s4 1966171168
        %v3926 = vunpack.c.0.s8 %v3925
        %v3927 = vlaneseq
        %v3928 = vshrl.u32 %v3927, 7
        %v3929 = vsub.s32 %v3926, %v3928
        %v3930 = vrot.slane %v3833, %v3929
        %v3931 = vcombine.low %v3916, %v3923
        %v3933 = vunpack.c.l.s4 1966171168
        %v3934 = vunpack.c.0.s8 %v3933
        %v3935 = vlaneseq
        %v3936 = vshrl.u32 %v3935, 7
        %v3937 = vsub.s32 %v3934, %v3936
        %v3938 = vrot.slane %v3931, %v3937
        %v3940 = vunpack.c.l.s4 1966171168
        %v3941 = vunpack.c.0.s8 %v3940
        %v3942 = vlaneseq
        %v3943 = vshrl.u32 %v3942, 7
        %v3944 = vsub.s32 %v3941, %v3943
        %v3945 = vrot.slane %v3930, %v3944
        %v3946 = vcombine.low %v3938, %v3945
        %v3947 = vcombine.low %v3841, %v3843
        %v3948 = vcombine.low %v3826, %v3840
        %v3950 = vunpack.c.l.s4 1966171168
        %v3951 = vunpack.c.0.s8 %v3950
        %v3952 = vlaneseq
        %v3953 = vshrl.u32 %v3952, 7
        %v3954 = vsub.s32 %v3951, %v3953
        %v3955 = vrot.slane %v3947, %v3954
        %v3957 = vunpack.c.l.s4 1966171168
        %v3958 = vunpack.c.0.s8 %v3957
        %v3959 = vlaneseq
        %v3960 = vshrl.u32 %v3959, 7
        %v3961 = vsub.s32 %v3958, %v3960
        %v3962 = vrot.slane %v3948, %v3961
        %v3964 = vunpack.c.l.s4 1966171168
        %v3965 = vunpack.c.0.s8 %v3964
        %v3966 = vlaneseq
        %v3967 = vshrl.u32 %v3966, 7
        %v3968 = vsub.s32 %v3965, %v3967
        %v3969 = vrot.slane %v3842, %v3968
        %v3970 = vcombine.low %v3955, %v3962
        %v3972 = vunpack.c.l.s4 1966171168
        %v3973 = vunpack.c.0.s8 %v3972
        %v3974 = vlaneseq
        %v3975 = vshrl.u32 %v3974, 7
        %v3976 = vsub.s32 %v3973, %v3975
        %v3977 = vrot.slane %v3970, %v3976
        %v3979 = vunpack.c.l.s4 1966171168
        %v3980 = vunpack.c.0.s8 %v3979
        %v3981 = vlaneseq
        %v3982 = vshrl.u32 %v3981, 7
        %v3983 = vsub.s32 %v3980, %v3982
        %v3984 = vrot.slane %v3969, %v3983
        %v3985 = vcombine.low %v3977, %v3984
        %v3986 = vcombine.low %v3844, %v3859
        %v3987 = vcombine.low %v3866, %v3867
        %v3989 = vunpack.c.l.s4 1966171168
        %v3990 = vunpack.c.0.s8 %v3989
        %v3991 = vlaneseq
        %v3992 = vshrl.u32 %v3991, 7
        %v3993 = vsub.s32 %v3990, %v3992
        %v3994 = vrot.slane %v3986, %v3993
        %v3996 = vunpack.c.l.s4 1966171168
        %v3997 = vunpack.c.0.s8 %v3996
        %v3998 = vlaneseq
        %v3999 = vshrl.u32 %v3998, 7
        %v4000 = vsub.s32 %v3997, %v3999
        %v4001 = vrot.slane %v3987, %v4000
        %v4003 = vunpack.c.l.s4 1966171168
        %v4004 = vunpack.c.0.s8 %v4003
        %v4005 = vlaneseq
        %v4006 = vshrl.u32 %v4005, 7
        %v4007 = vsub.s32 %v4004, %v4006
        %v4008 = vrot.slane %v3868, %v4007
        %v4009 = vcombine.low %v3994, %v4001
        %v4011 = vunpack.c.l.s4 1966171168
        %v4012 = vunpack.c.0.s8 %v4011
        %v4013 = vlaneseq
        %v4014 = vshrl.u32 %v4013, 7
        %v4015 = vsub.s32 %v4012, %v4014
        %v4016 = vrot.slane %v4009, %v4015
        %v4018 = vunpack.c.l.s4 1966171168
        %v4019 = vunpack.c.0.s8 %v4018
        %v4020 = vlaneseq
        %v4021 = vshrl.u32 %v4020, 7
        %v4022 = vsub.s32 %v4019, %v4021
        %v4023 = vrot.slane %v4008, %v4022
        %v4024 = vcombine.low %v4016, %v4023
        %vm4029 = vcmask 815104
        %v4030 = vsel %vm4029, %v3907, -inf
        %v4031 = vrot.slane %v4030, 4
        %v4032 = vmax.f32 %v4030, %v4031
        %v4033 = vrot.slane %v4032, 2
        %v4034 = vmax.f32 %v4032, %v4033
        %v4035 = vrot.slane %v4034, 1
        %v4036 = vmax.f32 %v4034, %v4035
        %v4037 = vsel %vm4029, %v3946, -inf
        %v4038 = vrot.slane %v4037, 4
        %v4039 = vmax.f32 %v4037, %v4038
        %v4040 = vrot.slane %v4039, 2
        %v4041 = vmax.f32 %v4039, %v4040
        %v4042 = vrot.slane %v4041, 1
        %v4043 = vmax.f32 %v4041, %v4042
        %v4044 = vsel %vm4029, %v3985, -inf
        %v4045 = vrot.slane %v4044, 4
        %v4046 = vmax.f32 %v4044, %v4045
        %v4047 = vrot.slane %v4046, 2
        %v4048 = vmax.f32 %v4046, %v4047
        %v4049 = vrot.slane %v4048, 1
        %v4050 = vmax.f32 %v4048, %v4049
        %v4051 = vsel %vm4029, %v4024, -inf
        %v4052 = vrot.slane %v4051, 4
        %v4053 = vmax.f32 %v4051, %v4052
        %v4054 = vrot.slane %v4053, 2
        %v4055 = vmax.f32 %v4053, %v4054
        %v4056 = vrot.slane %v4055, 1
        %v4057 = vmax.f32 %v4055, %v4056
        %s4058 = scalar_lea.vmem %s3, 104
        %v4059 = vld [vmem:[%s4058] sm:$0xff]
        %v4060 = vld [vmem:[%s4058 + $0x8] sm:$0xff]
        %v4061 = vld [vmem:[%s4058 + $0x10] sm:$0xff]
        %v4062 = vld [vmem:[%s4058 + $0x18] sm:$0xff]
        %v4063 = vld [vmem:[%s4058 + $0x20] sm:$0xff]
        %v4064 = vld [vmem:[%s4058 + $0x28] sm:$0xff]
        %v4065 = vld [vmem:[%s4058 + $0x30] sm:$0xff]
        %v4066 = vld [vmem:[%s4058 + $0x38] sm:$0xff]
        %v4067 = vld [vmem:[%s4058 + $0x40] sm:$0xff]
        %v4068 = vld [vmem:[%s4058 + $0x48] sm:$0xff]
        %v4069 = vld [vmem:[%s4058 + $0x50] sm:$0xff]
        %v4070 = vld [vmem:[%s4058 + $0x58] sm:$0xff]
        %v4071 = vld [vmem:[%s4058 + $0x60] sm:$0xf]
        %vm4076 = vcmask 1041409
        %v4077 = vsel %vm4076, %v4043, %v4036
        %v4078 = vsel %vm576, %v4050, %v4077
        %vm4079 = vcmask 1043459
        %v4080 = vsel %vm4079, %v4057, %v4078
        %vm4081 = vcmask 818176
        %v4082 = vsel %vm4081, %v4080, 0
        %vm4084 = vcmask 1043456
        %v4086 = vsel %vm4084, %v4071, 0
        %4088 = vmatprep.subr.mxu0 0.0
        %4089 = vmatpush1.msra.mxu0 %v4059
        %4090 = vmatprep.subr.mxu0 0.0
        %4091 = vmatpush1.msra.mxu0 %v4060
        %4092 = vmatprep.subr.mxu0 0.0
        %4093 = vmatpush1.msra.mxu0 %v4061
        %4094 = vmatprep.subr.mxu0 0.0
        %4095 = vmatpush1.msra.mxu0 %v4062
        %4096 = vmatprep.subr.mxu0 0.0
        %4097 = vmatpush1.msra.mxu0 %v4063
        %4098 = vmatprep.subr.mxu0 0.0
        %4099 = vmatpush1.msra.mxu0 %v4064
        %4100 = vmatprep.subr.mxu0 0.0
        %4101 = vmatpush1.msra.mxu0 %v4065
        %4102 = vmatprep.subr.mxu0 0.0
        %4103 = vmatpush1.msra.mxu0 %v4066
        %4104 = vmatprep.subr.mxu0 0.0
        %4105 = vmatpush1.msra.mxu0 %v4067
        %4106 = vmatprep.subr.mxu0 0.0
        %4107 = vmatpush1.msra.mxu0 %v4068
        %4108 = vmatprep.subr.mxu0 0.0
        %4109 = vmatpush1.msra.mxu0 %v4069
        %4110 = vmatprep.subr.mxu0 0.0
        %4111 = vmatpush1.msra.mxu0 %v4070
        %4112 = vmatprep.subr.mxu0 0.0
        %4113 = vmatpush1.msra.mxu0 %v4086
        %4114 = vmatprep.subr.mxu0 0.0
        %4115 = vmatpush1.msra.mxu0 0.0
        %4116 = vmatprep.subr.mxu0 0.0
        %4117 = vmatpush1.msra.mxu0 0.0
        %4118 = vmatprep.subr.mxu0 0.0
        %4119 = vmatpush1.msra.mxu0 0.0
        %4120 = vmatprep.subr.mxu0 0.0
        %4121 = vmatpush1.msra.mxu0 0.0
        %4122 = vmatprep.subr.mxu0 0.0
        %4123 = vmatpush1.msra.mxu0 0.0
        %4124 = vmatprep.subr.mxu0 0.0
        %4125 = vmatpush1.msra.mxu0 0.0
        %4126 = vmatprep.subr.mxu0 0.0
        %4127 = vmatpush1.msra.mxu0 0.0
        %4128 = vmatprep.subr.mxu0 0.0
        %4129 = vmatpush1.msra.mxu0 0.0
        %4130 = vmatprep.subr.mxu0 0.0
        %4131 = vmatpush1.msra.mxu0 0.0
        %4132 = vmatprep.subr.mxu0 0.0
        %4133 = vmatpush1.msra.mxu0 0.0
        %4134 = vmatprep.subr.mxu0 0.0
        %4135 = vmatpush1.msra.mxu0 0.0
        %4136 = vmatprep.subr.mxu0 0.0
        %4137 = vmatpush1.msra.mxu0 0.0
        %4138 = vmatprep.subr.mxu0 0.0
        %4139 = vmatpush1.msra.mxu0 0.0
        %4140 = vmatprep.subr.mxu0 0.0
        %4141 = vmatpush1.msra.mxu0 0.0
        %4142 = vmatprep.subr.mxu0 0.0
        %4143 = vmatpush1.msra.mxu0 0.0
        %4144 = vmatprep.subr.mxu0 0.0
        %4145 = vmatpush1.msra.mxu0 0.0
        %4146 = vmatprep.subr.mxu0 0.0
        %4147 = vmatpush1.msra.mxu0 0.0
        %4148 = vmatprep.subr.mxu0 0.0
        %4149 = vmatpush1.msra.mxu0 0.0
        %4150 = vmatprep.subr.mxu0 0.0
        %4151 = vmatpush1.msra.mxu0 0.0
        %4152 = vmatprep.mubr.f32.mxu0 0.0
        %4153 = vmatmul.mubr.f32.gmra.mrb[0].mxu0 %v4082
        %v4154 = vpop.f32.mrb[0].mxu0
        %v4155 = vadd.f32 0.0, %v4154
        %v4156 = vpop.f32.mrb[0].mxu0
        %4157 = vdwg.mxu0
        %v4162 = vsel %vm4076, %v1748, %v1741
        %v4163 = vsel %vm576, %v1755, %v4162
        %v4164 = vsel %vm4079, %v1762, %v4163
        %v4165 = vsel %vm4081, %v4164, 0
        %v4168 = vsel %vm4084, %v1775, 0
        %4170 = vmatprep.subr.mxu0 0.0
        %4171 = vmatpush1.msra.mxu0 %v1763
        %4172 = vmatprep.subr.mxu0 0.0
        %4173 = vmatpush1.msra.mxu0 %v1764
        %4174 = vmatprep.subr.mxu0 0.0
        %4175 = vmatpush1.msra.mxu0 %v1765
        %4176 = vmatprep.subr.mxu0 0.0
        %4177 = vmatpush1.msra.mxu0 %v1766
        %4178 = vmatprep.subr.mxu0 0.0
        %4179 = vmatpush1.msra.mxu0 %v1767
        %4180 = vmatprep.subr.mxu0 0.0
        %4181 = vmatpush1.msra.mxu0 %v1768
        %4182 = vmatprep.subr.mxu0 0.0
        %4183 = vmatpush1.msra.mxu0 %v1769
        %4184 = vmatprep.subr.mxu0 0.0
        %4185 = vmatpush1.msra.mxu0 %v1770
        %4186 = vmatprep.subr.mxu0 0.0
        %4187 = vmatpush1.msra.mxu0 %v1771
        %4188 = vmatprep.subr.mxu0 0.0
        %4189 = vmatpush1.msra.mxu0 %v1772
        %4190 = vmatprep.subr.mxu0 0.0
        %4191 = vmatpush1.msra.mxu0 %v1773
        %4192 = vmatprep.subr.mxu0 0.0
        %4193 = vmatpush1.msra.mxu0 %v1774
        %4194 = vmatprep.subr.mxu0 0.0
        %4195 = vmatpush1.msra.mxu0 %v4168
        %4196 = vmatprep.subr.mxu0 0.0
        %4197 = vmatpush1.msra.mxu0 0.0
        %4198 = vmatprep.subr.mxu0 0.0
        %4199 = vmatpush1.msra.mxu0 0.0
        %4200 = vmatprep.subr.mxu0 0.0
        %4201 = vmatpush1.msra.mxu0 0.0
        %4202 = vmatprep.subr.mxu0 0.0
        %4203 = vmatpush1.msra.mxu0 0.0
        %4204 = vmatprep.subr.mxu0 0.0
        %4205 = vmatpush1.msra.mxu0 0.0
        %4206 = vmatprep.subr.mxu0 0.0
        %4207 = vmatpush1.msra.mxu0 0.0
        %4208 = vmatprep.subr.mxu0 0.0
        %4209 = vmatpush1.msra.mxu0 0.0
        %4210 = vmatprep.subr.mxu0 0.0
        %4211 = vmatpush1.msra.mxu0 0.0
        %4212 = vmatprep.subr.mxu0 0.0
        %4213 = vmatpush1.msra.mxu0 0.0
        %4214 = vmatprep.subr.mxu0 0.0
        %4215 = vmatpush1.msra.mxu0 0.0
        %4216 = vmatprep.subr.mxu0 0.0
        %4217 = vmatpush1.msra.mxu0 0.0
        %4218 = vmatprep.subr.mxu0 0.0
        %4219 = vmatpush1.msra.mxu0 0.0
        %4220 = vmatprep.subr.mxu0 0.0
        %4221 = vmatpush1.msra.mxu0 0.0
        %4222 = vmatprep.subr.mxu0 0.0
        %4223 = vmatpush1.msra.mxu0 0.0
        %4224 = vmatprep.subr.mxu0 0.0
        %4225 = vmatpush1.msra.mxu0 0.0
        %4226 = vmatprep.subr.mxu0 0.0
        %4227 = vmatpush1.msra.mxu0 0.0
        %4228 = vmatprep.subr.mxu0 0.0
        %4229 = vmatpush1.msra.mxu0 0.0
        %4230 = vmatprep.subr.mxu0 0.0
        %4231 = vmatpush1.msra.mxu0 0.0
        %4232 = vmatprep.subr.mxu0 0.0
        %4233 = vmatpush1.msra.mxu0 0.0
        %4234 = vmatprep.mubr.f32.mxu0 0.0
        %4235 = vmatmul.mubr.f32.gmra.mrb[0].mxu0 %v4165
        %v4236 = vpop.f32.mrb[0].mxu0
        %v4237 = vadd.f32 %v4155, %v4236
        %v4238 = vpop.f32.mrb[0].mxu0
        %4239 = vdwg.mxu0
        %v4240 = vcombine.low %v277, %v311
        %v4241 = vcombine.high %v277, %v311
        %v4242 = vcombine.low %v255, %v258
        %v4243 = vcombine.low %v345, %v379
        %v4244 = vcombine.high %v345, %v379
        %v4245 = vcombine.low %v261, %v264
        %v4252 = vpack.c.bf16 %v4243, %v4240
        %v4253 = vpack.c.bf16 %v4244, %v4241
        %v4254 = vpack.c.bf16 %v4245, %v4242
        %s4255 = scalar_lea.vmem [#allocation2], 1064
        %v4256 = vld [vmem:[%s4255] sm:$0xf]
        %v4257 = vld [vmem:[%s4255 + $0x4] sm:$0xf]
        %v4258 = vld [vmem:[%s4255 + $0x8] sm:$0xf]
        %v4259 = vld [vmem:[%s4255 + $0xc] sm:$0xf]
        %v4260 = vld [vmem:[%s4255 + $0x10] sm:$0xf]
        %v4261 = vld [vmem:[%s4255 + $0x14] sm:$0xf]
        %v4262 = vld [vmem:[%s4255 + $0x18] sm:$0xf]
        %v4263 = vld [vmem:[%s4255 + $0x1c] sm:$0xf]
        %v4264 = vld [vmem:[%s4255 + $0x20] sm:$0xf]
        %v4265 = vld [vmem:[%s4255 + $0x24] sm:$0xf]
        %v4266 = vld [vmem:[%s4255 + $0x28] sm:$0xf]
        %v4267 = vld [vmem:[%s4255 + $0x2c] sm:$0xf]
        %v4268 = vld [vmem:[%s4255 + $0x30] sm:$0xf]
        %v4269 = vld [vmem:[%s4255 + $0x34] sm:$0xf]
        %v4270 = vld [vmem:[%s4255 + $0x38] sm:$0xf]
        %v4271 = vld [vmem:[%s4255 + $0x3c] sm:$0xf]
        %v4272 = vld [vmem:[%s4255 + $0x40] sm:$0xf]
        %v4273 = vld [vmem:[%s4255 + $0x44] sm:$0xf]
        %v4274 = vld [vmem:[%s4255 + $0x48] sm:$0xf]
        %v4275 = vld [vmem:[%s4255 + $0x4c] sm:$0xf]
        %v4276 = vld [vmem:[%s4255 + $0x50] sm:$0xf]
        %v4277 = vld [vmem:[%s4255 + $0x54] sm:$0xf]
        %v4278 = vld [vmem:[%s4255 + $0x58] sm:$0xf]
        %v4279 = vld [vmem:[%s4255 + $0x5c] sm:$0xf]
        %v4280 = vld [vmem:[%s4255 + $0x60] sm:$0xf]
        %v4281 = vld [vmem:[%s4255 + $0x64] sm:$0xf]
        %v4282 = vld [vmem:[%s4255 + $0x68] sm:$0xf]
        %v4283 = vld [vmem:[%s4255 + $0x6c] sm:$0xf]
        %v4284 = vld [vmem:[%s4255 + $0x70] sm:$0xf]
        %v4285 = vld [vmem:[%s4255 + $0x74] sm:$0xf]
        %v4286 = vld [vmem:[%s4255 + $0x78] sm:$0xf]
        %v4287 = vld [vmem:[%s4255 + $0x7c] sm:$0xf]
        %v4288 = vld [vmem:[%s4255 + $0x80] sm:$0xf]
        %v4289 = vld [vmem:[%s4255 + $0x84] sm:$0xf]
        %v4290 = vld [vmem:[%s4255 + $0x88] sm:$0xf]
        %v4291 = vld [vmem:[%s4255 + $0x8c] sm:$0xf]
        %v4292 = vld [vmem:[%s4255 + $0x90] sm:$0xf]
        %v4293 = vld [vmem:[%s4255 + $0x94] sm:$0x3]
        %vm4294 = vcmask 1042432
        %vm4295 = vcmask 1046532
        %vm4296 = vmor %vm4294, %vm4295
        %v4297 = vrot.slane %v277, 5
        %v4298 = vrot.slane %v4297, 4
        %v4299 = vrot.slane %v278, 5
        %v4300 = vsel %vm4296, %v4298, %v4299
        %v4301 = vrot.slane %v255, 5
        %v4302 = vrot.slane %v4301, 4
        %v4303 = vrot.slane %v279, 5
        %v4304 = vsel %vm4296, %v4302, %v4303
        %v4305 = vrot.slane %v311, 5
        %v4306 = vrot.slane %v4305, 4
        %v4307 = vrot.slane %v312, 5
        %v4308 = vsel %vm4296, %v4306, %v4307
        %v4309 = vrot.slane %v258, 5
        %v4310 = vrot.slane %v4309, 4
        %v4311 = vrot.slane %v313, 5
        %v4312 = vsel %vm4296, %v4310, %v4311
        %v4313 = vrot.slane %v345, 5
        %v4314 = vrot.slane %v4313, 4
        %v4315 = vrot.slane %v346, 5
        %v4316 = vsel %vm4296, %v4314, %v4315
        %v4317 = vrot.slane %v261, 5
        %v4318 = vrot.slane %v4317, 4
        %v4319 = vrot.slane %v347, 5
        %v4320 = vsel %vm4296, %v4318, %v4319
        %v4321 = vrot.slane %v379, 5
        %v4322 = vrot.slane %v4321, 4
        %v4323 = vrot.slane %v380, 5
        %v4324 = vsel %vm4296, %v4322, %v4323
        %v4325 = vrot.slane %v264, 5
        %v4326 = vrot.slane %v4325, 4
        %v4327 = vrot.slane %v381, 5
        %v4328 = vsel %vm4296, %v4326, %v4327
        %v4329 = vcombine.low %v4300, %v4308
        %v4330 = vcombine.high %v4300, %v4308
        %v4331 = vcombine.low %v4304, %v4312
        %v4332 = vcombine.low %v4316, %v4324
        %v4333 = vcombine.high %v4316, %v4324
        %v4334 = vcombine.low %v4320, %v4328
        %v4341 = vpack.c.bf16 %v4332, %v4329
        %v4342 = vpack.c.bf16 %v4333, %v4330
        %v4343 = vpack.c.bf16 %v4334, %v4331
        %s4344 = scalar_lea.vmem [#allocation2], 1216
        %v4345 = vld [vmem:[%s4344] sm:$0xf]
        %v4346 = vld [vmem:[%s4344 + $0x4] sm:$0xf]
        %v4347 = vld [vmem:[%s4344 + $0x8] sm:$0xf]
        %v4348 = vld [vmem:[%s4344 + $0xc] sm:$0xf]
        %v4349 = vld [vmem:[%s4344 + $0x10] sm:$0xf]
        %v4350 = vld [vmem:[%s4344 + $0x14] sm:$0xf]
        %v4351 = vld [vmem:[%s4344 + $0x18] sm:$0xf]
        %v4352 = vld [vmem:[%s4344 + $0x1c] sm:$0xf]
        %v4353 = vld [vmem:[%s4344 + $0x20] sm:$0xf]
        %v4354 = vld [vmem:[%s4344 + $0x24] sm:$0xf]
        %v4355 = vld [vmem:[%s4344 + $0x28] sm:$0xf]
        %v4356 = vld [vmem:[%s4344 + $0x2c] sm:$0xf]
        %v4357 = vld [vmem:[%s4344 + $0x30] sm:$0xf]
        %v4358 = vld [vmem:[%s4344 + $0x34] sm:$0xf]
        %v4359 = vld [vmem:[%s4344 + $0x38] sm:$0xf]
        %v4360 = vld [vmem:[%s4344 + $0x3c] sm:$0xf]
        %v4361 = vld [vmem:[%s4344 + $0x40] sm:$0xf]
        %v4362 = vld [vmem:[%s4344 + $0x44] sm:$0xf]
        %v4363 = vld [vmem:[%s4344 + $0x48] sm:$0xf]
        %v4364 = vld [vmem:[%s4344 + $0x4c] sm:$0xf]
        %v4365 = vld [vmem:[%s4344 + $0x50] sm:$0xf]
        %v4366 = vld [vmem:[%s4344 + $0x54] sm:$0xf]
        %v4367 = vld [vmem:[%s4344 + $0x58] sm:$0xf]
        %v4368 = vld [vmem:[%s4344 + $0x5c] sm:$0xf]
        %v4369 = vld [vmem:[%s4344 + $0x60] sm:$0xf]
        %v4370 = vld [vmem:[%s4344 + $0x64] sm:$0xf]
        %v4371 = vld [vmem:[%s4344 + $0x68] sm:$0xf]
        %v4372 = vld [vmem:[%s4344 + $0x6c] sm:$0xf]
        %v4373 = vld [vmem:[%s4344 + $0x70] sm:$0xf]
        %v4374 = vld [vmem:[%s4344 + $0x74] sm:$0xf]
        %v4375 = vld [vmem:[%s4344 + $0x78] sm:$0xf]
        %v4376 = vld [vmem:[%s4344 + $0x7c] sm:$0xf]
        %v4377 = vld [vmem:[%s4344 + $0x80] sm:$0xf]
        %v4378 = vld [vmem:[%s4344 + $0x84] sm:$0xf]
        %v4379 = vld [vmem:[%s4344 + $0x88] sm:$0xf]
        %v4380 = vld [vmem:[%s4344 + $0x8c] sm:$0xf]
        %v4381 = vld [vmem:[%s4344 + $0x90] sm:$0xf]
        %v4382 = vld [vmem:[%s4344 + $0x94] sm:$0x3]
        %v4421 = vunpack.c.l.b16 %v4345
        %v4422 = vunpack.c.l.b16 %v4346
        %v4423 = vunpack.c.l.b16 %v4347
        %v4424 = vunpack.c.l.b16 %v4348
        %v4425 = vunpack.c.l.b16 %v4349
        %v4426 = vunpack.c.l.b16 %v4350
        %v4427 = vunpack.c.l.b16 %v4351
        %v4428 = vunpack.c.l.b16 %v4352
        %v4429 = vunpack.c.l.b16 %v4353
        %v4430 = vunpack.c.l.b16 %v4354
        %v4431 = vunpack.c.l.b16 %v4355
        %v4432 = vunpack.c.l.b16 %v4356
        %v4433 = vunpack.c.l.b16 %v4357
        %v4434 = vunpack.c.l.b16 %v4358
        %v4435 = vunpack.c.l.b16 %v4359
        %v4436 = vunpack.c.l.b16 %v4360
        %v4437 = vunpack.c.l.b16 %v4361
        %v4438 = vunpack.c.l.b16 %v4362
        %v4439 = vunpack.c.l.b16 %v4363
        %v4440 = vunpack.c.l.b16 %v4364
        %v4441 = vunpack.c.l.b16 %v4365
        %v4442 = vunpack.c.l.b16 %v4366
        %v4443 = vunpack.c.l.b16 %v4367
        %v4444 = vunpack.c.l.b16 %v4368
        %v4445 = vunpack.c.l.b16 %v4369
        %v4446 = vunpack.c.l.b16 %v4370
        %v4447 = vunpack.c.l.b16 %v4371
        %v4448 = vunpack.c.l.b16 %v4372
        %v4449 = vunpack.c.l.b16 %v4373
        %v4450 = vunpack.c.l.b16 %v4374
        %v4451 = vunpack.c.l.b16 %v4375
        %v4452 = vunpack.c.l.b16 %v4376
        %v4453 = vunpack.c.l.b16 %v4377
        %v4454 = vunpack.c.l.b16 %v4378
        %v4455 = vunpack.c.l.b16 %v4379
        %v4456 = vunpack.c.l.b16 %v4380
        %v4457 = vunpack.c.l.b16 %v4381
        %v4458 = vunpack.c.l.b16 %v4382
        %v4459 = vpack.c.b16 %v4422, %v4421
        %v4460 = vpack.c.b16 %v4424, %v4423
        %v4461 = vpack.c.b16 %v4426, %v4425
        %v4462 = vpack.c.b16 %v4428, %v4427
        %v4463 = vpack.c.b16 %v4430, %v4429
        %v4464 = vpack.c.b16 %v4432, %v4431
        %v4465 = vpack.c.b16 %v4434, %v4433
        %v4466 = vpack.c.b16 %v4436, %v4435
        %v4467 = vpack.c.b16 %v4438, %v4437
        %v4468 = vpack.c.b16 %v4440, %v4439
        %v4469 = vpack.c.b16 %v4442, %v4441
        %v4470 = vpack.c.b16 %v4444, %v4443
        %v4471 = vpack.c.b16 %v4446, %v4445
        %v4472 = vpack.c.b16 %v4448, %v4447
        %v4473 = vpack.c.b16 %v4450, %v4449
        %v4474 = vpack.c.b16 %v4452, %v4451
        %v4475 = vpack.c.b16 %v4454, %v4453
        %v4476 = vpack.c.b16 %v4456, %v4455
        %v4477 = vpack.c.b16 %v4458, %v4457
        %v4497 = vsel %vm894, %v4343, 0
        %v4500 = vsel %vm901, %v4477, 0
        %4502 = vmatprep.subr.bf16.mxu0 0
        %4503 = vmatpush1.bf16.msra.mxu0 %v4459
        %4504 = vmatprep.subr.bf16.mxu0 0
        %4505 = vmatpush1.bf16.msra.mxu0 %v4460
        %4506 = vmatprep.subr.bf16.mxu0 0
        %4507 = vmatpush1.bf16.msra.mxu0 %v4461
        %4508 = vmatprep.subr.bf16.mxu0 0
        %4509 = vmatpush1.bf16.msra.mxu0 %v4462
        %4510 = vmatprep.subr.bf16.mxu0 0
        %4511 = vmatpush1.bf16.msra.mxu0 %v4463
        %4512 = vmatprep.subr.bf16.mxu0 0
        %4513 = vmatpush1.bf16.msra.mxu0 %v4464
        %4514 = vmatprep.subr.bf16.mxu0 0
        %4515 = vmatpush1.bf16.msra.mxu0 %v4465
        %4516 = vmatprep.subr.bf16.mxu0 0
        %4517 = vmatpush1.bf16.msra.mxu0 %v4466
        %4518 = vmatprep.subr.bf16.mxu0 0
        %4519 = vmatpush1.bf16.msra.mxu0 %v4467
        %4520 = vmatprep.subr.bf16.mxu0 0
        %4521 = vmatpush1.bf16.msra.mxu0 %v4468
        %4522 = vmatprep.subr.bf16.mxu0 0
        %4523 = vmatpush1.bf16.msra.mxu0 %v4469
        %4524 = vmatprep.subr.bf16.mxu0 0
        %4525 = vmatpush1.bf16.msra.mxu0 %v4470
        %4526 = vmatprep.subr.bf16.mxu0 0
        %4527 = vmatpush1.bf16.msra.mxu0 %v4471
        %4528 = vmatprep.subr.bf16.mxu0 0
        %4529 = vmatpush1.bf16.msra.mxu0 %v4472
        %4530 = vmatprep.subr.bf16.mxu0 0
        %4531 = vmatpush1.bf16.msra.mxu0 %v4473
        %4532 = vmatprep.subr.bf16.mxu0 0
        %4533 = vmatpush1.bf16.msra.mxu0 %v4474
        %4534 = vmatprep.mubr.bf16.mxu0 %v4342
        %4535 = vmatmul.mubr.bf16.gmra.mrb[0].mxu0 %v4341
        %v4536 = vpop.f32.mrb[0].mxu0
        %v4537 = vadd.f32 0.0, %v4536
        %v4538 = vpop.f32.mrb[0].mxu0
        %v4539 = vpop.f32.mrb[0].mxu0
        %v4540 = vadd.f32 0.0, %v4539
        %v4541 = vpop.f32.mrb[0].mxu0
        %4542 = vdwg.mxu0
        %4543 = vmatprep.subr.bf16.mxu0 0
        %4544 = vmatpush1.bf16.msra.mxu0 %v4475
        %4545 = vmatprep.subr.bf16.mxu0 0
        %4546 = vmatpush1.bf16.msra.mxu0 %v4476
        %4547 = vmatprep.subr.bf16.mxu0 0
        %4548 = vmatpush1.bf16.msra.mxu0 %v4500
        %4549 = vmatprep.subr.bf16.mxu0 0
        %4550 = vmatpush1.bf16.msra.mxu0 0
        %4551 = vmatprep.subr.bf16.mxu0 0
        %4552 = vmatpush1.bf16.msra.mxu0 0
        %4553 = vmatprep.subr.bf16.mxu0 0
        %4554 = vmatpush1.bf16.msra.mxu0 0
        %4555 = vmatprep.subr.bf16.mxu0 0
        %4556 = vmatpush1.bf16.msra.mxu0 0
        %4557 = vmatprep.subr.bf16.mxu0 0
        %4558 = vmatpush1.bf16.msra.mxu0 0
        %4559 = vmatprep.subr.bf16.mxu0 0
        %4560 = vmatpush1.bf16.msra.mxu0 0
        %4561 = vmatprep.subr.bf16.mxu0 0
        %4562 = vmatpush1.bf16.msra.mxu0 0
        %4563 = vmatprep.subr.bf16.mxu0 0
        %4564 = vmatpush1.bf16.msra.mxu0 0
        %4565 = vmatprep.subr.bf16.mxu0 0
        %4566 = vmatpush1.bf16.msra.mxu0 0
        %4567 = vmatprep.subr.bf16.mxu0 0
        %4568 = vmatpush1.bf16.msra.mxu0 0
        %4569 = vmatprep.subr.bf16.mxu0 0
        %4570 = vmatpush1.bf16.msra.mxu0 0
        %4571 = vmatprep.subr.bf16.mxu0 0
        %4572 = vmatpush1.bf16.msra.mxu0 0
        %4573 = vmatprep.subr.bf16.mxu0 0
        %4574 = vmatpush1.bf16.msra.mxu0 0
        %4575 = vmatprep.mubr.bf16.mxu0 0
        %4576 = vmatmul.mubr.bf16.gmra.mrb[0].mxu0 %v4497
        %v4577 = vpop.f32.mrb[0].mxu0
        %v4578 = vadd.f32 %v4537, %v4577
        %v4579 = vpop.f32.mrb[0].mxu0
        %v4580 = vpop.f32.mrb[0].mxu0
        %v4581 = vadd.f32 %v4540, %v4580
        %v4582 = vpop.f32.mrb[0].mxu0
        %4583 = vdwg.mxu0
        %v4622 = vunpack.c.l.b16 %v4256
        %v4623 = vunpack.c.l.b16 %v4257
        %v4624 = vunpack.c.l.b16 %v4258
        %v4625 = vunpack.c.l.b16 %v4259
        %v4626 = vunpack.c.l.b16 %v4260
        %v4627 = vunpack.c.l.b16 %v4261
        %v4628 = vunpack.c.l.b16 %v4262
        %v4629 = vunpack.c.l.b16 %v4263
        %v4630 = vunpack.c.l.b16 %v4264
        %v4631 = vunpack.c.l.b16 %v4265
        %v4632 = vunpack.c.l.b16 %v4266
        %v4633 = vunpack.c.l.b16 %v4267
        %v4634 = vunpack.c.l.b16 %v4268
        %v4635 = vunpack.c.l.b16 %v4269
        %v4636 = vunpack.c.l.b16 %v4270
        %v4637 = vunpack.c.l.b16 %v4271
        %v4638 = vunpack.c.l.b16 %v4272
        %v4639 = vunpack.c.l.b16 %v4273
        %v4640 = vunpack.c.l.b16 %v4274
        %v4641 = vunpack.c.l.b16 %v4275
        %v4642 = vunpack.c.l.b16 %v4276
        %v4643 = vunpack.c.l.b16 %v4277
        %v4644 = vunpack.c.l.b16 %v4278
        %v4645 = vunpack.c.l.b16 %v4279
        %v4646 = vunpack.c.l.b16 %v4280
        %v4647 = vunpack.c.l.b16 %v4281
        %v4648 = vunpack.c.l.b16 %v4282
        %v4649 = vunpack.c.l.b16 %v4283
        %v4650 = vunpack.c.l.b16 %v4284
        %v4651 = vunpack.c.l.b16 %v4285
        %v4652 = vunpack.c.l.b16 %v4286
        %v4653 = vunpack.c.l.b16 %v4287
        %v4654 = vunpack.c.l.b16 %v4288
        %v4655 = vunpack.c.l.b16 %v4289
        %v4656 = vunpack.c.l.b16 %v4290
        %v4657 = vunpack.c.l.b16 %v4291
        %v4658 = vunpack.c.l.b16 %v4292
        %v4659 = vunpack.c.l.b16 %v4293
        %v4660 = vpack.c.b16 %v4623, %v4622
        %v4661 = vpack.c.b16 %v4625, %v4624
        %v4662 = vpack.c.b16 %v4627, %v4626
        %v4663 = vpack.c.b16 %v4629, %v4628
        %v4664 = vpack.c.b16 %v4631, %v4630
        %v4665 = vpack.c.b16 %v4633, %v4632
        %v4666 = vpack.c.b16 %v4635, %v4634
        %v4667 = vpack.c.b16 %v4637, %v4636
        %v4668 = vpack.c.b16 %v4639, %v4638
        %v4669 = vpack.c.b16 %v4641, %v4640
        %v4670 = vpack.c.b16 %v4643, %v4642
        %v4671 = vpack.c.b16 %v4645, %v4644
        %v4672 = vpack.c.b16 %v4647, %v4646
        %v4673 = vpack.c.b16 %v4649, %v4648
        %v4674 = vpack.c.b16 %v4651, %v4650
        %v4675 = vpack.c.b16 %v4653, %v4652
        %v4676 = vpack.c.b16 %v4655, %v4654
        %v4677 = vpack.c.b16 %v4657, %v4656
        %v4678 = vpack.c.b16 %v4659, %v4658
        %v4698 = vsel %vm894, %v4254, 0
        %v4701 = vsel %vm901, %v4678, 0
        %4703 = vmatprep.subr.bf16.mxu0 0
        %4704 = vmatpush1.bf16.msra.mxu0 %v4660
        %4705 = vmatprep.subr.bf16.mxu0 0
        %4706 = vmatpush1.bf16.msra.mxu0 %v4661
        %4707 = vmatprep.subr.bf16.mxu0 0
        %4708 = vmatpush1.bf16.msra.mxu0 %v4662
        %4709 = vmatprep.subr.bf16.mxu0 0
        %4710 = vmatpush1.bf16.msra.mxu0 %v4663
        %4711 = vmatprep.subr.bf16.mxu0 0
        %4712 = vmatpush1.bf16.msra.mxu0 %v4664
        %4713 = vmatprep.subr.bf16.mxu0 0
        %4714 = vmatpush1.bf16.msra.mxu0 %v4665
        %4715 = vmatprep.subr.bf16.mxu0 0
        %4716 = vmatpush1.bf16.msra.mxu0 %v4666
        %4717 = vmatprep.subr.bf16.mxu0 0
        %4718 = vmatpush1.bf16.msra.mxu0 %v4667
        %4719 = vmatprep.subr.bf16.mxu0 0
        %4720 = vmatpush1.bf16.msra.mxu0 %v4668
        %4721 = vmatprep.subr.bf16.mxu0 0
        %4722 = vmatpush1.bf16.msra.mxu0 %v4669
        %4723 = vmatprep.subr.bf16.mxu0 0
        %4724 = vmatpush1.bf16.msra.mxu0 %v4670
        %4725 = vmatprep.subr.bf16.mxu0 0
        %4726 = vmatpush1.bf16.msra.mxu0 %v4671
        %4727 = vmatprep.subr.bf16.mxu0 0
        %4728 = vmatpush1.bf16.msra.mxu0 %v4672
        %4729 = vmatprep.subr.bf16.mxu0 0
        %4730 = vmatpush1.bf16.msra.mxu0 %v4673
        %4731 = vmatprep.subr.bf16.mxu0 0
        %4732 = vmatpush1.bf16.msra.mxu0 %v4674
        %4733 = vmatprep.subr.bf16.mxu0 0
        %4734 = vmatpush1.bf16.msra.mxu0 %v4675
        %4735 = vmatprep.mubr.bf16.mxu0 %v4253
        %4736 = vmatmul.mubr.bf16.gmra.mrb[0].mxu0 %v4252
        %v4737 = vpop.f32.mrb[0].mxu0
        %v4738 = vadd.f32 %v4578, %v4737
        %v4739 = vpop.f32.mrb[0].mxu0
        %v4740 = vpop.f32.mrb[0].mxu0
        %v4741 = vadd.f32 %v4581, %v4740
        %v4742 = vpop.f32.mrb[0].mxu0
        %4743 = vdwg.mxu0
        %4744 = vmatprep.subr.bf16.mxu0 0
        %4745 = vmatpush1.bf16.msra.mxu0 %v4676
        %4746 = vmatprep.subr.bf16.mxu0 0
        %4747 = vmatpush1.bf16.msra.mxu0 %v4677
        %4748 = vmatprep.subr.bf16.mxu0 0
        %4749 = vmatpush1.bf16.msra.mxu0 %v4701
        %4750 = vmatprep.subr.bf16.mxu0 0
        %4751 = vmatpush1.bf16.msra.mxu0 0
        %4752 = vmatprep.subr.bf16.mxu0 0
        %4753 = vmatpush1.bf16.msra.mxu0 0
        %4754 = vmatprep.subr.bf16.mxu0 0
        %4755 = vmatpush1.bf16.msra.mxu0 0
        %4756 = vmatprep.subr.bf16.mxu0 0
        %4757 = vmatpush1.bf16.msra.mxu0 0
        %4758 = vmatprep.subr.bf16.mxu0 0
        %4759 = vmatpush1.bf16.msra.mxu0 0
        %4760 = vmatprep.subr.bf16.mxu0 0
        %4761 = vmatpush1.bf16.msra.mxu0 0
        %4762 = vmatprep.subr.bf16.mxu0 0
        %4763 = vmatpush1.bf16.msra.mxu0 0
        %4764 = vmatprep.subr.bf16.mxu0 0
        %4765 = vmatpush1.bf16.msra.mxu0 0
        %4766 = vmatprep.subr.bf16.mxu0 0
        %4767 = vmatpush1.bf16.msra.mxu0 0
        %4768 = vmatprep.subr.bf16.mxu0 0
        %4769 = vmatpush1.bf16.msra.mxu0 0
        %4770 = vmatprep.subr.bf16.mxu0 0
        %4771 = vmatpush1.bf16.msra.mxu0 0
        %4772 = vmatprep.subr.bf16.mxu0 0
        %4773 = vmatpush1.bf16.msra.mxu0 0
        %4774 = vmatprep.subr.bf16.mxu0 0
        %4775 = vmatpush1.bf16.msra.mxu0 0
        %4776 = vmatprep.mubr.bf16.mxu0 0
        %4777 = vmatmul.mubr.bf16.gmra.mrb[0].mxu0 %v4698
        %v4778 = vpop.f32.mrb[0].mxu0
        %v4779 = vadd.f32 %v4738, %v4778
        %v4780 = vpop.f32.mrb[0].mxu0
        %v4781 = vpop.f32.mrb[0].mxu0
        %v4782 = vadd.f32 %v4741, %v4781
        %v4783 = vpop.f32.mrb[0].mxu0
        %4784 = vdwg.mxu0
        %vm4785 = vcmask 1041408
        %vm4786 = vcmask 1045508
        %vm4787 = vmor %vm4785, %vm4786
        %v4788 = vrot.slane %v277, 6
        %v4789 = vrot.slane %v4788, 4
        %v4790 = vrot.slane %v278, 6
        %v4791 = vsel %vm4787, %v4789, %v4790
        %v4792 = vrot.slane %v255, 6
        %v4793 = vrot.slane %v4792, 4
        %v4794 = vrot.slane %v279, 6
        %v4795 = vsel %vm4787, %v4793, %v4794
        %v4796 = vrot.slane %v311, 6
        %v4797 = vrot.slane %v4796, 4
        %v4798 = vrot.slane %v312, 6
        %v4799 = vsel %vm4787, %v4797, %v4798
        %v4800 = vrot.slane %v258, 6
        %v4801 = vrot.slane %v4800, 4
        %v4802 = vrot.slane %v313, 6
        %v4803 = vsel %vm4787, %v4801, %v4802
        %v4804 = vrot.slane %v345, 6
        %v4805 = vrot.slane %v4804, 4
        %v4806 = vrot.slane %v346, 6
        %v4807 = vsel %vm4787, %v4805, %v4806
        %v4808 = vrot.slane %v261, 6
        %v4809 = vrot.slane %v4808, 4
        %v4810 = vrot.slane %v347, 6
        %v4811 = vsel %vm4787, %v4809, %v4810
        %v4812 = vrot.slane %v379, 6
        %v4813 = vrot.slane %v4812, 4
        %v4814 = vrot.slane %v380, 6
        %v4815 = vsel %vm4787, %v4813, %v4814
        %v4816 = vrot.slane %v264, 6
        %v4817 = vrot.slane %v4816, 4
        %v4818 = vrot.slane %v381, 6
        %v4819 = vsel %vm4787, %v4817, %v4818
        %v4820 = vcombine.low %v4791, %v4799
        %v4821 = vcombine.high %v4791, %v4799
        %v4822 = vcombine.low %v4795, %v4803
        %v4823 = vcombine.low %v4807, %v4815
        %v4824 = vcombine.high %v4807, %v4815
        %v4825 = vcombine.low %v4811, %v4819
        %v4832 = vpack.c.bf16 %v4823, %v4820
        %v4833 = vpack.c.bf16 %v4824, %v4821
        %v4834 = vpack.c.bf16 %v4825, %v4822
        %s4835 = scalar_lea.vmem [#allocation2], 1368
        %v4836 = vld [vmem:[%s4835] sm:$0xf]
        %v4837 = vld [vmem:[%s4835 + $0x4] sm:$0xf]
        %v4838 = vld [vmem:[%s4835 + $0x8] sm:$0xf]
        %v4839 = vld [vmem:[%s4835 + $0xc] sm:$0xf]
        %v4840 = vld [vmem:[%s4835 + $0x10] sm:$0xf]
        %v4841 = vld [vmem:[%s4835 + $0x14] sm:$0xf]
        %v4842 = vld [vmem:[%s4835 + $0x18] sm:$0xf]
        %v4843 = vld [vmem:[%s4835 + $0x1c] sm:$0xf]
        %v4844 = vld [vmem:[%s4835 + $0x20] sm:$0xf]
        %v4845 = vld [vmem:[%s4835 + $0x24] sm:$0xf]
        %v4846 = vld [vmem:[%s4835 + $0x28] sm:$0xf]
        %v4847 = vld [vmem:[%s4835 + $0x2c] sm:$0xf]
        %v4848 = vld [vmem:[%s4835 + $0x30] sm:$0xf]
        %v4849 = vld [vmem:[%s4835 + $0x34] sm:$0xf]
        %v4850 = vld [vmem:[%s4835 + $0x38] sm:$0xf]
        %v4851 = vld [vmem:[%s4835 + $0x3c] sm:$0xf]
        %v4852 = vld [vmem:[%s4835 + $0x40] sm:$0xf]
        %v4853 = vld [vmem:[%s4835 + $0x44] sm:$0xf]
        %v4854 = vld [vmem:[%s4835 + $0x48] sm:$0xf]
        %v4855 = vld [vmem:[%s4835 + $0x4c] sm:$0xf]
        %v4856 = vld [vmem:[%s4835 + $0x50] sm:$0xf]
        %v4857 = vld [vmem:[%s4835 + $0x54] sm:$0xf]
        %v4858 = vld [vmem:[%s4835 + $0x58] sm:$0xf]
        %v4859 = vld [vmem:[%s4835 + $0x5c] sm:$0xf]
        %v4860 = vld [vmem:[%s4835 + $0x60] sm:$0xf]
        %v4861 = vld [vmem:[%s4835 + $0x64] sm:$0xf]
        %v4862 = vld [vmem:[%s4835 + $0x68] sm:$0xf]
        %v4863 = vld [vmem:[%s4835 + $0x6c] sm:$0xf]
        %v4864 = vld [vmem:[%s4835 + $0x70] sm:$0xf]
        %v4865 = vld [vmem:[%s4835 + $0x74] sm:$0xf]
        %v4866 = vld [vmem:[%s4835 + $0x78] sm:$0xf]
        %v4867 = vld [vmem:[%s4835 + $0x7c] sm:$0xf]
        %v4868 = vld [vmem:[%s4835 + $0x80] sm:$0xf]
        %v4869 = vld [vmem:[%s4835 + $0x84] sm:$0xf]
        %v4870 = vld [vmem:[%s4835 + $0x88] sm:$0xf]
        %v4871 = vld [vmem:[%s4835 + $0x8c] sm:$0xf]
        %v4872 = vld [vmem:[%s4835 + $0x90] sm:$0xf]
        %v4873 = vld [vmem:[%s4835 + $0x94] sm:$0x3]
        %v4912 = vunpack.c.l.b16 %v4836
        %v4913 = vunpack.c.l.b16 %v4837
        %v4914 = vunpack.c.l.b16 %v4838
        %v4915 = vunpack.c.l.b16 %v4839
        %v4916 = vunpack.c.l.b16 %v4840
        %v4917 = vunpack.c.l.b16 %v4841
        %v4918 = vunpack.c.l.b16 %v4842
        %v4919 = vunpack.c.l.b16 %v4843
        %v4920 = vunpack.c.l.b16 %v4844
        %v4921 = vunpack.c.l.b16 %v4845
        %v4922 = vunpack.c.l.b16 %v4846
        %v4923 = vunpack.c.l.b16 %v4847
        %v4924 = vunpack.c.l.b16 %v4848
        %v4925 = vunpack.c.l.b16 %v4849
        %v4926 = vunpack.c.l.b16 %v4850
        %v4927 = vunpack.c.l.b16 %v4851
        %v4928 = vunpack.c.l.b16 %v4852
        %v4929 = vunpack.c.l.b16 %v4853
        %v4930 = vunpack.c.l.b16 %v4854
        %v4931 = vunpack.c.l.b16 %v4855
        %v4932 = vunpack.c.l.b16 %v4856
        %v4933 = vunpack.c.l.b16 %v4857
        %v4934 = vunpack.c.l.b16 %v4858
        %v4935 = vunpack.c.l.b16 %v4859
        %v4936 = vunpack.c.l.b16 %v4860
        %v4937 = vunpack.c.l.b16 %v4861
        %v4938 = vunpack.c.l.b16 %v4862
        %v4939 = vunpack.c.l.b16 %v4863
        %v4940 = vunpack.c.l.b16 %v4864
        %v4941 = vunpack.c.l.b16 %v4865
        %v4942 = vunpack.c.l.b16 %v4866
        %v4943 = vunpack.c.l.b16 %v4867
        %v4944 = vunpack.c.l.b16 %v4868
        %v4945 = vunpack.c.l.b16 %v4869
        %v4946 = vunpack.c.l.b16 %v4870
        %v4947 = vunpack.c.l.b16 %v4871
        %v4948 = vunpack.c.l.b16 %v4872
        %v4949 = vunpack.c.l.b16 %v4873
        %v4950 = vpack.c.b16 %v4913, %v4912
        %v4951 = vpack.c.b16 %v4915, %v4914
        %v4952 = vpack.c.b16 %v4917, %v4916
        %v4953 = vpack.c.b16 %v4919, %v4918
        %v4954 = vpack.c.b16 %v4921, %v4920
        %v4955 = vpack.c.b16 %v4923, %v4922
        %v4956 = vpack.c.b16 %v4925, %v4924
        %v4957 = vpack.c.b16 %v4927, %v4926
        %v4958 = vpack.c.b16 %v4929, %v4928
        %v4959 = vpack.c.b16 %v4931, %v4930
        %v4960 = vpack.c.b16 %v4933, %v4932
        %v4961 = vpack.c.b16 %v4935, %v4934
        %v4962 = vpack.c.b16 %v4937, %v4936
        %v4963 = vpack.c.b16 %v4939, %v4938
        %v4964 = vpack.c.b16 %v4941, %v4940
        %v4965 = vpack.c.b16 %v4943, %v4942
        %v4966 = vpack.c.b16 %v4945, %v4944
        %v4967 = vpack.c.b16 %v4947, %v4946
        %v4968 = vpack.c.b16 %v4949, %v4948
        %v4988 = vsel %vm894, %v4834, 0
        %v4991 = vsel %vm901, %v4968, 0
        %4993 = vmatprep.subr.bf16.mxu0 0
        %4994 = vmatpush1.bf16.msra.mxu0 %v4950
        %4995 = vmatprep.subr.bf16.mxu0 0
        %4996 = vmatpush1.bf16.msra.mxu0 %v4951
        %4997 = vmatprep.subr.bf16.mxu0 0
        %4998 = vmatpush1.bf16.msra.mxu0 %v4952
        %4999 = vmatprep.subr.bf16.mxu0 0
        %5000 = vmatpush1.bf16.msra.mxu0 %v4953
        %5001 = vmatprep.subr.bf16.mxu0 0
        %5002 = vmatpush1.bf16.msra.mxu0 %v4954
        %5003 = vmatprep.subr.bf16.mxu0 0
        %5004 = vmatpush1.bf16.msra.mxu0 %v4955
        %5005 = vmatprep.subr.bf16.mxu0 0
        %5006 = vmatpush1.bf16.msra.mxu0 %v4956
        %5007 = vmatprep.subr.bf16.mxu0 0
        %5008 = vmatpush1.bf16.msra.mxu0 %v4957
        %5009 = vmatprep.subr.bf16.mxu0 0
        %5010 = vmatpush1.bf16.msra.mxu0 %v4958
        %5011 = vmatprep.subr.bf16.mxu0 0
        %5012 = vmatpush1.bf16.msra.mxu0 %v4959
        %5013 = vmatprep.subr.bf16.mxu0 0
        %5014 = vmatpush1.bf16.msra.mxu0 %v4960
        %5015 = vmatprep.subr.bf16.mxu0 0
        %5016 = vmatpush1.bf16.msra.mxu0 %v4961
        %5017 = vmatprep.subr.bf16.mxu0 0
        %5018 = vmatpush1.bf16.msra.mxu0 %v4962
        %5019 = vmatprep.subr.bf16.mxu0 0
        %5020 = vmatpush1.bf16.msra.mxu0 %v4963
        %5021 = vmatprep.subr.bf16.mxu0 0
        %5022 = vmatpush1.bf16.msra.mxu0 %v4964
        %5023 = vmatprep.subr.bf16.mxu0 0
        %5024 = vmatpush1.bf16.msra.mxu0 %v4965
        %5025 = vmatprep.mubr.bf16.mxu0 %v4833
        %5026 = vmatmul.mubr.bf16.gmra.mrb[0].mxu0 %v4832
        %v5027 = vpop.f32.mrb[0].mxu0
        %v5028 = vadd.f32 0.0, %v5027
        %v5029 = vpop.f32.mrb[0].mxu0
        %v5030 = vpop.f32.mrb[0].mxu0
        %v5031 = vadd.f32 0.0, %v5030
        %v5032 = vpop.f32.mrb[0].mxu0
        %5033 = vdwg.mxu0
        %5034 = vmatprep.subr.bf16.mxu0 0
        %5035 = vmatpush1.bf16.msra.mxu0 %v4966
        %5036 = vmatprep.subr.bf16.mxu0 0
        %5037 = vmatpush1.bf16.msra.mxu0 %v4967
        %5038 = vmatprep.subr.bf16.mxu0 0
        %5039 = vmatpush1.bf16.msra.mxu0 %v4991
        %5040 = vmatprep.subr.bf16.mxu0 0
        %5041 = vmatpush1.bf16.msra.mxu0 0
        %5042 = vmatprep.subr.bf16.mxu0 0
        %5043 = vmatpush1.bf16.msra.mxu0 0
        %5044 = vmatprep.subr.bf16.mxu0 0
        %5045 = vmatpush1.bf16.msra.mxu0 0
        %5046 = vmatprep.subr.bf16.mxu0 0
        %5047 = vmatpush1.bf16.msra.mxu0 0
        %5048 = vmatprep.subr.bf16.mxu0 0
        %5049 = vmatpush1.bf16.msra.mxu0 0
        %5050 = vmatprep.subr.bf16.mxu0 0
        %5051 = vmatpush1.bf16.msra.mxu0 0
        %5052 = vmatprep.subr.bf16.mxu0 0
        %5053 = vmatpush1.bf16.msra.mxu0 0
        %5054 = vmatprep.subr.bf16.mxu0 0
        %5055 = vmatpush1.bf16.msra.mxu0 0
        %5056 = vmatprep.subr.bf16.mxu0 0
        %5057 = vmatpush1.bf16.msra.mxu0 0
        %5058 = vmatprep.subr.bf16.mxu0 0
        %5059 = vmatpush1.bf16.msra.mxu0 0
        %5060 = vmatprep.subr.bf16.mxu0 0
        %5061 = vmatpush1.bf16.msra.mxu0 0
        %5062 = vmatprep.subr.bf16.mxu0 0
        %5063 = vmatpush1.bf16.msra.mxu0 0
        %5064 = vmatprep.subr.bf16.mxu0 0
        %5065 = vmatpush1.bf16.msra.mxu0 0
        %5066 = vmatprep.mubr.bf16.mxu0 0
        %5067 = vmatmul.mubr.bf16.gmra.mrb[0].mxu0 %v4988
        %v5068 = vpop.f32.mrb[0].mxu0
        %v5069 = vadd.f32 %v5028, %v5068
        %v5070 = vpop.f32.mrb[0].mxu0
        %v5071 = vpop.f32.mrb[0].mxu0
        %v5072 = vadd.f32 %v5031, %v5071
        %v5073 = vpop.f32.mrb[0].mxu0
        %5074 = vdwg.mxu0
        %v5075 = vadd.f32 %v4779, %v5069
        %v5076 = vadd.f32 %v4782, %v5072
        %vm5077 = vmor %vm575, %vm578
        %v5078 = vrot.slane %v277, 7
        %v5079 = vrot.slane %v5078, 4
        %v5080 = vrot.slane %v278, 7
        %v5081 = vsel %vm5077, %v5079, %v5080
        %v5082 = vrot.slane %v255, 7
        %v5083 = vrot.slane %v5082, 4
        %v5084 = vrot.slane %v279, 7
        %v5085 = vsel %vm5077, %v5083, %v5084
        %v5086 = vrot.slane %v311, 7
        %v5087 = vrot.slane %v5086, 4
        %v5088 = vrot.slane %v312, 7
        %v5089 = vsel %vm5077, %v5087, %v5088
        %v5090 = vrot.slane %v258, 7
        %v5091 = vrot.slane %v5090, 4
        %v5092 = vrot.slane %v313, 7
        %v5093 = vsel %vm5077, %v5091, %v5092
        %v5094 = vrot.slane %v345, 7
        %v5095 = vrot.slane %v5094, 4
        %v5096 = vrot.slane %v346, 7
        %v5097 = vsel %vm5077, %v5095, %v5096
        %v5098 = vrot.slane %v261, 7
        %v5099 = vrot.slane %v5098, 4
        %v5100 = vrot.slane %v347, 7
        %v5101 = vsel %vm5077, %v5099, %v5100
        %v5102 = vrot.slane %v379, 7
        %v5103 = vrot.slane %v5102, 4
        %v5104 = vrot.slane %v380, 7
        %v5105 = vsel %vm5077, %v5103, %v5104
        %v5106 = vrot.slane %v264, 7
        %v5107 = vrot.slane %v5106, 4
        %v5108 = vrot.slane %v381, 7
        %v5109 = vsel %vm5077, %v5107, %v5108
        %v5110 = vcombine.low %v5081, %v5089
        %v5111 = vcombine.high %v5081, %v5089
        %v5112 = vcombine.low %v5085, %v5093
        %v5113 = vcombine.low %v5097, %v5105
        %v5114 = vcombine.high %v5097, %v5105
        %v5115 = vcombine.low %v5101, %v5109
        %v5122 = vpack.c.bf16 %v5113, %v5110
        %v5123 = vpack.c.bf16 %v5114, %v5111
        %v5124 = vpack.c.bf16 %v5115, %v5112
        %s5125 = scalar_lea.vmem [#allocation2], 1520
        %v5126 = vld [vmem:[%s5125] sm:$0xf]
        %v5127 = vld [vmem:[%s5125 + $0x4] sm:$0xf]
        %v5128 = vld [vmem:[%s5125 + $0x8] sm:$0xf]
        %v5129 = vld [vmem:[%s5125 + $0xc] sm:$0xf]
        %v5130 = vld [vmem:[%s5125 + $0x10] sm:$0xf]
        %v5131 = vld [vmem:[%s5125 + $0x14] sm:$0xf]
        %v5132 = vld [vmem:[%s5125 + $0x18] sm:$0xf]
        %v5133 = vld [vmem:[%s5125 + $0x1c] sm:$0xf]
        %v5134 = vld [vmem:[%s5125 + $0x20] sm:$0xf]
        %v5135 = vld [vmem:[%s5125 + $0x24] sm:$0xf]
        %v5136 = vld [vmem:[%s5125 + $0x28] sm:$0xf]
        %v5137 = vld [vmem:[%s5125 + $0x2c] sm:$0xf]
        %v5138 = vld [vmem:[%s5125 + $0x30] sm:$0xf]
        %v5139 = vld [vmem:[%s5125 + $0x34] sm:$0xf]
        %v5140 = vld [vmem:[%s5125 + $0x38] sm:$0xf]
        %v5141 = vld [vmem:[%s5125 + $0x3c] sm:$0xf]
        %v5142 = vld [vmem:[%s5125 + $0x40] sm:$0xf]
        %v5143 = vld [vmem:[%s5125 + $0x44] sm:$0xf]
        %v5144 = vld [vmem:[%s5125 + $0x48] sm:$0xf]
        %v5145 = vld [vmem:[%s5125 + $0x4c] sm:$0xf]
        %v5146 = vld [vmem:[%s5125 + $0x50] sm:$0xf]
        %v5147 = vld [vmem:[%s5125 + $0x54] sm:$0xf]
        %v5148 = vld [vmem:[%s5125 + $0x58] sm:$0xf]
        %v5149 = vld [vmem:[%s5125 + $0x5c] sm:$0xf]
        %v5150 = vld [vmem:[%s5125 + $0x60] sm:$0xf]
        %v5151 = vld [vmem:[%s5125 + $0x64] sm:$0xf]
        %v5152 = vld [vmem:[%s5125 + $0x68] sm:$0xf]
        %v5153 = vld [vmem:[%s5125 + $0x6c] sm:$0xf]
        %v5154 = vld [vmem:[%s5125 + $0x70] sm:$0xf]
        %v5155 = vld [vmem:[%s5125 + $0x74] sm:$0xf]
        %v5156 = vld [vmem:[%s5125 + $0x78] sm:$0xf]
        %v5157 = vld [vmem:[%s5125 + $0x7c] sm:$0xf]
        %v5158 = vld [vmem:[%s5125 + $0x80] sm:$0xf]
        %v5159 = vld [vmem:[%s5125 + $0x84] sm:$0xf]
        %v5160 = vld [vmem:[%s5125 + $0x88] sm:$0xf]
        %v5161 = vld [vmem:[%s5125 + $0x8c] sm:$0xf]
        %v5162 = vld [vmem:[%s5125 + $0x90] sm:$0xf]
        %v5163 = vld [vmem:[%s5125 + $0x94] sm:$0x3]
        %v5202 = vunpack.c.l.b16 %v5126
        %v5203 = vunpack.c.l.b16 %v5127
        %v5204 = vunpack.c.l.b16 %v5128
        %v5205 = vunpack.c.l.b16 %v5129
        %v5206 = vunpack.c.l.b16 %v5130
        %v5207 = vunpack.c.l.b16 %v5131
        %v5208 = vunpack.c.l.b16 %v5132
        %v5209 = vunpack.c.l.b16 %v5133
        %v5210 = vunpack.c.l.b16 %v5134
        %v5211 = vunpack.c.l.b16 %v5135
        %v5212 = vunpack.c.l.b16 %v5136
        %v5213 = vunpack.c.l.b16 %v5137
        %v5214 = vunpack.c.l.b16 %v5138
        %v5215 = vunpack.c.l.b16 %v5139
        %v5216 = vunpack.c.l.b16 %v5140
        %v5217 = vunpack.c.l.b16 %v5141
        %v5218 = vunpack.c.l.b16 %v5142
        %v5219 = vunpack.c.l.b16 %v5143
        %v5220 = vunpack.c.l.b16 %v5144
        %v5221 = vunpack.c.l.b16 %v5145
        %v5222 = vunpack.c.l.b16 %v5146
        %v5223 = vunpack.c.l.b16 %v5147
        %v5224 = vunpack.c.l.b16 %v5148
        %v5225 = vunpack.c.l.b16 %v5149
        %v5226 = vunpack.c.l.b16 %v5150
        %v5227 = vunpack.c.l.b16 %v5151
        %v5228 = vunpack.c.l.b16 %v5152
        %v5229 = vunpack.c.l.b16 %v5153
        %v5230 = vunpack.c.l.b16 %v5154
        %v5231 = vunpack.c.l.b16 %v5155
        %v5232 = vunpack.c.l.b16 %v5156
        %v5233 = vunpack.c.l.b16 %v5157
        %v5234 = vunpack.c.l.b16 %v5158
        %v5235 = vunpack.c.l.b16 %v5159
        %v5236 = vunpack.c.l.b16 %v5160
        %v5237 = vunpack.c.l.b16 %v5161
        %v5238 = vunpack.c.l.b16 %v5162
        %v5239 = vunpack.c.l.b16 %v5163
        %v5240 = vpack.c.b16 %v5203, %v5202
        %v5241 = vpack.c.b16 %v5205, %v5204
        %v5242 = vpack.c.b16 %v5207, %v5206
        %v5243 = vpack.c.b16 %v5209, %v5208
        %v5244 = vpack.c.b16 %v5211, %v5210
        %v5245 = vpack.c.b16 %v5213, %v5212
        %v5246 = vpack.c.b16 %v5215, %v5214
        %v5247 = vpack.c.b16 %v5217, %v5216
        %v5248 = vpack.c.b16 %v5219, %v5218
        %v5249 = vpack.c.b16 %v5221, %v5220
        %v5250 = vpack.c.b16 %v5223, %v5222
        %v5251 = vpack.c.b16 %v5225, %v5224
        %v5252 = vpack.c.b16 %v5227, %v5226
        %v5253 = vpack.c.b16 %v5229, %v5228
        %v5254 = vpack.c.b16 %v5231, %v5230
        %v5255 = vpack.c.b16 %v5233, %v5232
        %v5256 = vpack.c.b16 %v5235, %v5234
        %v5257 = vpack.c.b16 %v5237, %v5236
        %v5258 = vpack.c.b16 %v5239, %v5238
        %v5278 = vsel %vm894, %v5124, 0
        %v5281 = vsel %vm901, %v5258, 0
        %5283 = vmatprep.subr.bf16.mxu0 0
        %5284 = vmatpush1.bf16.msra.mxu0 %v5240
        %5285 = vmatprep.subr.bf16.mxu0 0
        %5286 = vmatpush1.bf16.msra.mxu0 %v5241
        %5287 = vmatprep.subr.bf16.mxu0 0
        %5288 = vmatpush1.bf16.msra.mxu0 %v5242
        %5289 = vmatprep.subr.bf16.mxu0 0
        %5290 = vmatpush1.bf16.msra.mxu0 %v5243
        %5291 = vmatprep.subr.bf16.mxu0 0
        %5292 = vmatpush1.bf16.msra.mxu0 %v5244
        %5293 = vmatprep.subr.bf16.mxu0 0
        %5294 = vmatpush1.bf16.msra.mxu0 %v5245
        %5295 = vmatprep.subr.bf16.mxu0 0
        %5296 = vmatpush1.bf16.msra.mxu0 %v5246
        %5297 = vmatprep.subr.bf16.mxu0 0
        %5298 = vmatpush1.bf16.msra.mxu0 %v5247
        %5299 = vmatprep.subr.bf16.mxu0 0
        %5300 = vmatpush1.bf16.msra.mxu0 %v5248
        %5301 = vmatprep.subr.bf16.mxu0 0
        %5302 = vmatpush1.bf16.msra.mxu0 %v5249
        %5303 = vmatprep.subr.bf16.mxu0 0
        %5304 = vmatpush1.bf16.msra.mxu0 %v5250
        %5305 = vmatprep.subr.bf16.mxu0 0
        %5306 = vmatpush1.bf16.msra.mxu0 %v5251
        %5307 = vmatprep.subr.bf16.mxu0 0
        %5308 = vmatpush1.bf16.msra.mxu0 %v5252
        %5309 = vmatprep.subr.bf16.mxu0 0
        %5310 = vmatpush1.bf16.msra.mxu0 %v5253
        %5311 = vmatprep.subr.bf16.mxu0 0
        %5312 = vmatpush1.bf16.msra.mxu0 %v5254
        %5313 = vmatprep.subr.bf16.mxu0 0
        %5314 = vmatpush1.bf16.msra.mxu0 %v5255
        %5315 = vmatprep.mubr.bf16.mxu0 %v5123
        %5316 = vmatmul.mubr.bf16.gmra.mrb[0].mxu0 %v5122
        %v5317 = vpop.f32.mrb[0].mxu0
        %v5318 = vadd.f32 0.0, %v5317
        %v5319 = vpop.f32.mrb[0].mxu0
        %v5320 = vpop.f32.mrb[0].mxu0
        %v5321 = vadd.f32 0.0, %v5320
        %v5322 = vpop.f32.mrb[0].mxu0
        %5323 = vdwg.mxu0
        %5324 = vmatprep.subr.bf16.mxu0 0
        %5325 = vmatpush1.bf16.msra.mxu0 %v5256
        %5326 = vmatprep.subr.bf16.mxu0 0
        %5327 = vmatpush1.bf16.msra.mxu0 %v5257
        %5328 = vmatprep.subr.bf16.mxu0 0
        %5329 = vmatpush1.bf16.msra.mxu0 %v5281
        %5330 = vmatprep.subr.bf16.mxu0 0
        %5331 = vmatpush1.bf16.msra.mxu0 0
        %5332 = vmatprep.subr.bf16.mxu0 0
        %5333 = vmatpush1.bf16.msra.mxu0 0
        %5334 = vmatprep.subr.bf16.mxu0 0
        %5335 = vmatpush1.bf16.msra.mxu0 0
        %5336 = vmatprep.subr.bf16.mxu0 0
        %5337 = vmatpush1.bf16.msra.mxu0 0
        %5338 = vmatprep.subr.bf16.mxu0 0
        %5339 = vmatpush1.bf16.msra.mxu0 0
        %5340 = vmatprep.subr.bf16.mxu0 0
        %5341 = vmatpush1.bf16.msra.mxu0 0
        %5342 = vmatprep.subr.bf16.mxu0 0
        %5343 = vmatpush1.bf16.msra.mxu0 0
        %5344 = vmatprep.subr.bf16.mxu0 0
        %5345 = vmatpush1.bf16.msra.mxu0 0
        %5346 = vmatprep.subr.bf16.mxu0 0
        %5347 = vmatpush1.bf16.msra.mxu0 0
        %5348 = vmatprep.subr.bf16.mxu0 0
        %5349 = vmatpush1.bf16.msra.mxu0 0
        %5350 = vmatprep.subr.bf16.mxu0 0
        %5351 = vmatpush1.bf16.msra.mxu0 0
        %5352 = vmatprep.subr.bf16.mxu0 0
        %5353 = vmatpush1.bf16.msra.mxu0 0
        %5354 = vmatprep.subr.bf16.mxu0 0
        %5355 = vmatpush1.bf16.msra.mxu0 0
        %5356 = vmatprep.mubr.bf16.mxu0 0
        %5357 = vmatmul.mubr.bf16.gmra.mrb[0].mxu0 %v5278
        %v5358 = vpop.f32.mrb[0].mxu0
        %v5359 = vadd.f32 %v5318, %v5358
        %v5360 = vpop.f32.mrb[0].mxu0
        %v5361 = vpop.f32.mrb[0].mxu0
        %v5362 = vadd.f32 %v5321, %v5361
        %v5363 = vpop.f32.mrb[0].mxu0
        %5364 = vdwg.mxu0
        %v5365 = vadd.f32 %v5075, %v5359
        %v5366 = vadd.f32 %v5076, %v5362
        %v5367 = vcombine.low %v278, %v312
        %v5368 = vcombine.high %v278, %v312
        %v5369 = vcombine.low %v279, %v313
        %v5370 = vcombine.low %v346, %v380
        %v5371 = vcombine.high %v346, %v380
        %v5372 = vcombine.low %v347, %v381
        %v5379 = vpack.c.bf16 %v5370, %v5367
        %v5380 = vpack.c.bf16 %v5371, %v5368
        %v5381 = vpack.c.bf16 %v5372, %v5369
        %s5382 = scalar_lea.vmem [#allocation2], 1672
        %v5383 = vld [vmem:[%s5382] sm:$0xf]
        %v5384 = vld [vmem:[%s5382 + $0x4] sm:$0xf]
        %v5385 = vld [vmem:[%s5382 + $0x8] sm:$0xf]
        %v5386 = vld [vmem:[%s5382 + $0xc] sm:$0xf]
        %v5387 = vld [vmem:[%s5382 + $0x10] sm:$0xf]
        %v5388 = vld [vmem:[%s5382 + $0x14] sm:$0xf]
        %v5389 = vld [vmem:[%s5382 + $0x18] sm:$0xf]
        %v5390 = vld [vmem:[%s5382 + $0x1c] sm:$0xf]
        %v5391 = vld [vmem:[%s5382 + $0x20] sm:$0xf]
        %v5392 = vld [vmem:[%s5382 + $0x24] sm:$0xf]
        %v5393 = vld [vmem:[%s5382 + $0x28] sm:$0xf]
        %v5394 = vld [vmem:[%s5382 + $0x2c] sm:$0xf]
        %v5395 = vld [vmem:[%s5382 + $0x30] sm:$0xf]
        %v5396 = vld [vmem:[%s5382 + $0x34] sm:$0xf]
        %v5397 = vld [vmem:[%s5382 + $0x38] sm:$0xf]
        %v5398 = vld [vmem:[%s5382 + $0x3c] sm:$0xf]
        %v5399 = vld [vmem:[%s5382 + $0x40] sm:$0xf]
        %v5400 = vld [vmem:[%s5382 + $0x44] sm:$0xf]
        %v5401 = vld [vmem:[%s5382 + $0x48] sm:$0xf]
        %v5402 = vld [vmem:[%s5382 + $0x4c] sm:$0xf]
        %v5403 = vld [vmem:[%s5382 + $0x50] sm:$0xf]
        %v5404 = vld [vmem:[%s5382 + $0x54] sm:$0xf]
        %v5405 = vld [vmem:[%s5382 + $0x58] sm:$0xf]
        %v5406 = vld [vmem:[%s5382 + $0x5c] sm:$0xf]
        %v5407 = vld [vmem:[%s5382 + $0x60] sm:$0xf]
        %v5408 = vld [vmem:[%s5382 + $0x64] sm:$0xf]
        %v5409 = vld [vmem:[%s5382 + $0x68] sm:$0xf]
        %v5410 = vld [vmem:[%s5382 + $0x6c] sm:$0xf]
        %v5411 = vld [vmem:[%s5382 + $0x70] sm:$0xf]
        %v5412 = vld [vmem:[%s5382 + $0x74] sm:$0xf]
        %v5413 = vld [vmem:[%s5382 + $0x78] sm:$0xf]
        %v5414 = vld [vmem:[%s5382 + $0x7c] sm:$0xf]
        %v5415 = vld [vmem:[%s5382 + $0x80] sm:$0xf]
        %v5416 = vld [vmem:[%s5382 + $0x84] sm:$0xf]
        %v5417 = vld [vmem:[%s5382 + $0x88] sm:$0xf]
        %v5418 = vld [vmem:[%s5382 + $0x8c] sm:$0xf]
        %v5419 = vld [vmem:[%s5382 + $0x90] sm:$0xf]
        %v5420 = vld [vmem:[%s5382 + $0x94] sm:$0x3]
        %v5459 = vunpack.c.l.b16 %v5383
        %v5460 = vunpack.c.l.b16 %v5384
        %v5461 = vunpack.c.l.b16 %v5385
        %v5462 = vunpack.c.l.b16 %v5386
        %v5463 = vunpack.c.l.b16 %v5387
        %v5464 = vunpack.c.l.b16 %v5388
        %v5465 = vunpack.c.l.b16 %v5389
        %v5466 = vunpack.c.l.b16 %v5390
        %v5467 = vunpack.c.l.b16 %v5391
        %v5468 = vunpack.c.l.b16 %v5392
        %v5469 = vunpack.c.l.b16 %v5393
        %v5470 = vunpack.c.l.b16 %v5394
        %v5471 = vunpack.c.l.b16 %v5395
        %v5472 = vunpack.c.l.b16 %v5396
        %v5473 = vunpack.c.l.b16 %v5397
        %v5474 = vunpack.c.l.b16 %v5398
        %v5475 = vunpack.c.l.b16 %v5399
        %v5476 = vunpack.c.l.b16 %v5400
        %v5477 = vunpack.c.l.b16 %v5401
        %v5478 = vunpack.c.l.b16 %v5402
        %v5479 = vunpack.c.l.b16 %v5403
        %v5480 = vunpack.c.l.b16 %v5404
        %v5481 = vunpack.c.l.b16 %v5405
        %v5482 = vunpack.c.l.b16 %v5406
        %v5483 = vunpack.c.l.b16 %v5407
        %v5484 = vunpack.c.l.b16 %v5408
        %v5485 = vunpack.c.l.b16 %v5409
        %v5486 = vunpack.c.l.b16 %v5410
        %v5487 = vunpack.c.l.b16 %v5411
        %v5488 = vunpack.c.l.b16 %v5412
        %v5489 = vunpack.c.l.b16 %v5413
        %v5490 = vunpack.c.l.b16 %v5414
        %v5491 = vunpack.c.l.b16 %v5415
        %v5492 = vunpack.c.l.b16 %v5416
        %v5493 = vunpack.c.l.b16 %v5417
        %v5494 = vunpack.c.l.b16 %v5418
        %v5495 = vunpack.c.l.b16 %v5419
        %v5496 = vunpack.c.l.b16 %v5420
        %v5497 = vpack.c.b16 %v5460, %v5459
        %v5498 = vpack.c.b16 %v5462, %v5461
        %v5499 = vpack.c.b16 %v5464, %v5463
        %v5500 = vpack.c.b16 %v5466, %v5465
        %v5501 = vpack.c.b16 %v5468, %v5467
        %v5502 = vpack.c.b16 %v5470, %v5469
        %v5503 = vpack.c.b16 %v5472, %v5471
        %v5504 = vpack.c.b16 %v5474, %v5473
        %v5505 = vpack.c.b16 %v5476, %v5475
        %v5506 = vpack.c.b16 %v5478, %v5477
        %v5507 = vpack.c.b16 %v5480, %v5479
        %v5508 = vpack.c.b16 %v5482, %v5481
        %v5509 = vpack.c.b16 %v5484, %v5483
        %v5510 = vpack.c.b16 %v5486, %v5485
        %v5511 = vpack.c.b16 %v5488, %v5487
        %v5512 = vpack.c.b16 %v5490, %v5489
        %v5513 = vpack.c.b16 %v5492, %v5491
        %v5514 = vpack.c.b16 %v5494, %v5493
        %v5515 = vpack.c.b16 %v5496, %v5495
        %v5535 = vsel %vm894, %v5381, 0
        %v5538 = vsel %vm901, %v5515, 0
        %5540 = vmatprep.subr.bf16.mxu0 0
        %5541 = vmatpush1.bf16.msra.mxu0 %v5497
        %5542 = vmatprep.subr.bf16.mxu0 0
        %5543 = vmatpush1.bf16.msra.mxu0 %v5498
        %5544 = vmatprep.subr.bf16.mxu0 0
        %5545 = vmatpush1.bf16.msra.mxu0 %v5499
        %5546 = vmatprep.subr.bf16.mxu0 0
        %5547 = vmatpush1.bf16.msra.mxu0 %v5500
        %5548 = vmatprep.subr.bf16.mxu0 0
        %5549 = vmatpush1.bf16.msra.mxu0 %v5501
        %5550 = vmatprep.subr.bf16.mxu0 0
        %5551 = vmatpush1.bf16.msra.mxu0 %v5502
        %5552 = vmatprep.subr.bf16.mxu0 0
        %5553 = vmatpush1.bf16.msra.mxu0 %v5503
        %5554 = vmatprep.subr.bf16.mxu0 0
        %5555 = vmatpush1.bf16.msra.mxu0 %v5504
        %5556 = vmatprep.subr.bf16.mxu0 0
        %5557 = vmatpush1.bf16.msra.mxu0 %v5505
        %5558 = vmatprep.subr.bf16.mxu0 0
        %5559 = vmatpush1.bf16.msra.mxu0 %v5506
        %5560 = vmatprep.subr.bf16.mxu0 0
        %5561 = vmatpush1.bf16.msra.mxu0 %v5507
        %5562 = vmatprep.subr.bf16.mxu0 0
        %5563 = vmatpush1.bf16.msra.mxu0 %v5508
        %5564 = vmatprep.subr.bf16.mxu0 0
        %5565 = vmatpush1.bf16.msra.mxu0 %v5509
        %5566 = vmatprep.subr.bf16.mxu0 0
        %5567 = vmatpush1.bf16.msra.mxu0 %v5510
        %5568 = vmatprep.subr.bf16.mxu0 0
        %5569 = vmatpush1.bf16.msra.mxu0 %v5511
        %5570 = vmatprep.subr.bf16.mxu0 0
        %5571 = vmatpush1.bf16.msra.mxu0 %v5512
        %5572 = vmatprep.mubr.bf16.mxu0 %v5380
        %5573 = vmatmul.mubr.bf16.gmra.mrb[0].mxu0 %v5379
        %v5574 = vpop.f32.mrb[0].mxu0
        %v5575 = vadd.f32 0.0, %v5574
        %v5576 = vpop.f32.mrb[0].mxu0
        %v5577 = vpop.f32.mrb[0].mxu0
        %v5578 = vadd.f32 0.0, %v5577
        %v5579 = vpop.f32.mrb[0].mxu0
        %5580 = vdwg.mxu0
        %5581 = vmatprep.subr.bf16.mxu0 0
        %5582 = vmatpush1.bf16.msra.mxu0 %v5513
        %5583 = vmatprep.subr.bf16.mxu0 0
        %5584 = vmatpush1.bf16.msra.mxu0 %v5514
        %5585 = vmatprep.subr.bf16.mxu0 0
        %5586 = vmatpush1.bf16.msra.mxu0 %v5538
        %5587 = vmatprep.subr.bf16.mxu0 0
        %5588 = vmatpush1.bf16.msra.mxu0 0
        %5589 = vmatprep.subr.bf16.mxu0 0
        %5590 = vmatpush1.bf16.msra.mxu0 0
        %5591 = vmatprep.subr.bf16.mxu0 0
        %5592 = vmatpush1.bf16.msra.mxu0 0
        %5593 = vmatprep.subr.bf16.mxu0 0
        %5594 = vmatpush1.bf16.msra.mxu0 0
        %5595 = vmatprep.subr.bf16.mxu0 0
        %5596 = vmatpush1.bf16.msra.mxu0 0
        %5597 = vmatprep.subr.bf16.mxu0 0
        %5598 = vmatpush1.bf16.msra.mxu0 0
        %5599 = vmatprep.subr.bf16.mxu0 0
        %5600 = vmatpush1.bf16.msra.mxu0 0
        %5601 = vmatprep.subr.bf16.mxu0 0
        %5602 = vmatpush1.bf16.msra.mxu0 0
        %5603 = vmatprep.subr.bf16.mxu0 0
        %5604 = vmatpush1.bf16.msra.mxu0 0
        %5605 = vmatprep.subr.bf16.mxu0 0
        %5606 = vmatpush1.bf16.msra.mxu0 0
        %5607 = vmatprep.subr.bf16.mxu0 0
        %5608 = vmatpush1.bf16.msra.mxu0 0
        %5609 = vmatprep.subr.bf16.mxu0 0
        %5610 = vmatpush1.bf16.msra.mxu0 0
        %5611 = vmatprep.subr.bf16.mxu0 0
        %5612 = vmatpush1.bf16.msra.mxu0 0
        %5613 = vmatprep.mubr.bf16.mxu0 0
        %5614 = vmatmul.mubr.bf16.gmra.mrb[0].mxu0 %v5535
        %v5615 = vpop.f32.mrb[0].mxu0
        %v5616 = vadd.f32 %v5575, %v5615
        %v5617 = vpop.f32.mrb[0].mxu0
        %v5618 = vpop.f32.mrb[0].mxu0
        %v5619 = vadd.f32 %v5578, %v5618
        %v5620 = vpop.f32.mrb[0].mxu0
        %5621 = vdwg.mxu0
        %v5622 = vadd.f32 %v5365, %v5616
        %v5623 = vadd.f32 %v5366, %v5619
        %s5624 = scalar_lea.vmem %s2, 2
        %v5625 = vld [vmem:[%s5624] sm:$0x1]
        %v5627 = vlaneseq
        %v5628 = vshrl.u32 %v5627, 7
        %v5629 = vsub.s32 0, %v5628
        %v5630 = vrot.slane %v5625, %v5629
        %v5632 = vadd.f32 %v5622, %v5630
        %v5633 = vadd.f32 %v5623, %v5630
        %v5634 = vmax.f32 %v5632, 0.0
        %v5635 = vmax.f32 %v5633, 0.0
        %v5638 = vcombine.high %v5634, %v5634
        %v5639 = vcombine.high %v5635, %v5635
        %vm5642 = vcmask 814080
        %v5643 = vsel %vm5642, %v5634, -inf
        %v5644 = vrot.slane %v5643, 4
        %v5645 = vmax.f32 %v5643, %v5644
        %v5646 = vrot.slane %v5645, 2
        %v5647 = vmax.f32 %v5645, %v5646
        %v5648 = vrot.slane %v5647, 1
        %v5649 = vmax.f32 %v5647, %v5648
        %v5650 = vsel %vm5642, %v5638, -inf
        %v5651 = vrot.slane %v5650, 4
        %v5652 = vmax.f32 %v5650, %v5651
        %v5653 = vrot.slane %v5652, 2
        %v5654 = vmax.f32 %v5652, %v5653
        %v5655 = vrot.slane %v5654, 1
        %v5656 = vmax.f32 %v5654, %v5655
        %v5657 = vsel %vm5642, %v5635, -inf
        %v5658 = vrot.slane %v5657, 4
        %v5659 = vmax.f32 %v5657, %v5658
        %v5660 = vrot.slane %v5659, 2
        %v5661 = vmax.f32 %v5659, %v5660
        %v5662 = vrot.slane %v5661, 1
        %v5663 = vmax.f32 %v5661, %v5662
        %v5664 = vsel %vm5642, %v5639, -inf
        %v5665 = vrot.slane %v5664, 4
        %v5666 = vmax.f32 %v5664, %v5665
        %v5667 = vrot.slane %v5666, 2
        %v5668 = vmax.f32 %v5666, %v5667
        %v5669 = vrot.slane %v5668, 1
        %v5670 = vmax.f32 %v5668, %v5669
        %s5671 = scalar_lea.vmem %s3, 208
        %v5672 = vld [vmem:[%s5671] sm:$0xff]
        %v5673 = vld [vmem:[%s5671 + $0x8] sm:$0xff]
        %v5674 = vld [vmem:[%s5671 + $0x10] sm:$0xff]
        %v5675 = vld [vmem:[%s5671 + $0x18] sm:$0xff]
        %v5676 = vld [vmem:[%s5671 + $0x20] sm:$0xff]
        %v5677 = vld [vmem:[%s5671 + $0x28] sm:$0xff]
        %v5678 = vld [vmem:[%s5671 + $0x30] sm:$0xff]
        %v5679 = vld [vmem:[%s5671 + $0x38] sm:$0xff]
        %v5680 = vld [vmem:[%s5671 + $0x40] sm:$0xff]
        %v5681 = vld [vmem:[%s5671 + $0x48] sm:$0xff]
        %v5682 = vld [vmem:[%s5671 + $0x50] sm:$0xff]
        %v5683 = vld [vmem:[%s5671 + $0x58] sm:$0xff]
        %v5684 = vld [vmem:[%s5671 + $0x60] sm:$0xf]
        %v5689 = vsel %vm4076, %v5656, %v5649
        %v5690 = vsel %vm576, %v5663, %v5689
        %v5691 = vsel %vm4079, %v5670, %v5690
        %v5692 = vsel %vm4081, %v5691, 0
        %v5695 = vsel %vm4084, %v5684, 0
        %5697 = vmatprep.subr.mxu0 0.0
        %5698 = vmatpush1.msra.mxu0 %v5672
        %5699 = vmatprep.subr.mxu0 0.0
        %5700 = vmatpush1.msra.mxu0 %v5673
        %5701 = vmatprep.subr.mxu0 0.0
        %5702 = vmatpush1.msra.mxu0 %v5674
        %5703 = vmatprep.subr.mxu0 0.0
        %5704 = vmatpush1.msra.mxu0 %v5675
        %5705 = vmatprep.subr.mxu0 0.0
        %5706 = vmatpush1.msra.mxu0 %v5676
        %5707 = vmatprep.subr.mxu0 0.0
        %5708 = vmatpush1.msra.mxu0 %v5677
        %5709 = vmatprep.subr.mxu0 0.0
        %5710 = vmatpush1.msra.mxu0 %v5678
        %5711 = vmatprep.subr.mxu0 0.0
        %5712 = vmatpush1.msra.mxu0 %v5679
        %5713 = vmatprep.subr.mxu0 0.0
        %5714 = vmatpush1.msra.mxu0 %v5680
        %5715 = vmatprep.subr.mxu0 0.0
        %5716 = vmatpush1.msra.mxu0 %v5681
        %5717 = vmatprep.subr.mxu0 0.0
        %5718 = vmatpush1.msra.mxu0 %v5682
        %5719 = vmatprep.subr.mxu0 0.0
        %5720 = vmatpush1.msra.mxu0 %v5683
        %5721 = vmatprep.subr.mxu0 0.0
        %5722 = vmatpush1.msra.mxu0 %v5695
        %5723 = vmatprep.subr.mxu0 0.0
        %5724 = vmatpush1.msra.mxu0 0.0
        %5725 = vmatprep.subr.mxu0 0.0
        %5726 = vmatpush1.msra.mxu0 0.0
        %5727 = vmatprep.subr.mxu0 0.0
        %5728 = vmatpush1.msra.mxu0 0.0
        %5729 = vmatprep.subr.mxu0 0.0
        %5730 = vmatpush1.msra.mxu0 0.0
        %5731 = vmatprep.subr.mxu0 0.0
        %5732 = vmatpush1.msra.mxu0 0.0
        %5733 = vmatprep.subr.mxu0 0.0
        %5734 = vmatpush1.msra.mxu0 0.0
        %5735 = vmatprep.subr.mxu0 0.0
        %5736 = vmatpush1.msra.mxu0 0.0
        %5737 = vmatprep.subr.mxu0 0.0
        %5738 = vmatpush1.msra.mxu0 0.0
        %5739 = vmatprep.subr.mxu0 0.0
        %5740 = vmatpush1.msra.mxu0 0.0
        %5741 = vmatprep.subr.mxu0 0.0
        %5742 = vmatpush1.msra.mxu0 0.0
        %5743 = vmatprep.subr.mxu0 0.0
        %5744 = vmatpush1.msra.mxu0 0.0
        %5745 = vmatprep.subr.mxu0 0.0
        %5746 = vmatpush1.msra.mxu0 0.0
        %5747 = vmatprep.subr.mxu0 0.0
        %5748 = vmatpush1.msra.mxu0 0.0
        %5749 = vmatprep.subr.mxu0 0.0
        %5750 = vmatpush1.msra.mxu0 0.0
        %5751 = vmatprep.subr.mxu0 0.0
        %5752 = vmatpush1.msra.mxu0 0.0
        %5753 = vmatprep.subr.mxu0 0.0
        %5754 = vmatpush1.msra.mxu0 0.0
        %5755 = vmatprep.subr.mxu0 0.0
        %5756 = vmatpush1.msra.mxu0 0.0
        %5757 = vmatprep.subr.mxu0 0.0
        %5758 = vmatpush1.msra.mxu0 0.0
        %5759 = vmatprep.subr.mxu0 0.0
        %5760 = vmatpush1.msra.mxu0 0.0
        %5761 = vmatprep.mubr.f32.mxu0 0.0
        %5762 = vmatmul.mubr.f32.gmra.mrb[0].mxu0 %v5692
        %v5763 = vpop.f32.mrb[0].mxu0
        %v5764 = vadd.f32 0.0, %v5763
        %v5765 = vpop.f32.mrb[0].mxu0
        %5766 = vdwg.mxu0
        %v5767 = vadd.f32 %v4237, %v5764
        %v5768 = vld [vmem:[%s4] sm:$0x1]
        %v5770 = vlaneseq
        %v5771 = vshrl.u32 %v5770, 7
        %v5772 = vsub.s32 0, %v5771
        %v5773 = vrot.slane %v5768, %v5772
        %v5775 = vadd.f32 %v5767, %v5773
        %v5778 = vunpack.c.l.s4 1983009808
        %v5779 = vunpack.c.0.s8 %v5778
        %v5780 = vlaneseq
        %v5781 = vshrl.u32 %v5780, 7
        %v5782 = vsub.s32 %v5779, %v5781
        %v5783 = vrot.slane %v5775, %v5782
        %v5784 = vcombine.high %v5783, %v5783
        %vm5787 = vcmask 33792
        %5788 = vst.msk [vmem:[%s235] sm:$0x3] %vm5787, %v5783
        %5789 = vst.msk [vmem:[%s235 + $0x2] sm:$0x3] %vm5787, %v5784
        %s5790 = sand.u32 %s138, 1
        %s5791 = scalar_lea.sflag [#allocation4], %s5790
        %s5792 = sand.u32 %s138, 1
        %s5793 = smul.addr %s5792, 4
        %s5794 = scalar_lea.vmem [#allocation5], %s5793
        // Predicated region
        $region45: #{tpu_custom_call.1} parent=39 // pred_check
          %p5795 = pneg %p148
        $region46: #{tpu_custom_call.1} parent=39 // pred_check_branch
          %5797 = sbr.rel (%p5795) target = $region48
        $region47: #{tpu_custom_call.1} parent=39 // pred_region
          %s5798 = smul.u32 2, %s20
          %s5800 = ssub.s32 64, 64
          %5801 = vsyncadd %s5791, %s5800
          %s5802 = smul.addr %s5798, 32
          %s5803 = scalar_lea.hbm %s5, %s5802
          %s5804 = sshll.u32 %s5794, 4
          %s5805 = int_to_ptr.vmem [resolvable:$true] %s5804
          %5810 = dma.vmem_to_hbm [thread:$0]  %s5805, 64, %s5803, %s5791, 32, 32, 2
        $region48: #{tpu_custom_call.1} parent=39 // pred_fallthru
          _
      $region40: #{tpu_custom_call.1} parent=5 // pred_fallthru
        _
      %p5811 = scmp.le.s32.totalorder 2, %s15
      // Predicated region
      $region49: #{tpu_custom_call.1} parent=5 // pred_check
        %p5812 = pneg %p5811
      $region50: #{tpu_custom_call.1} parent=5 // pred_check_branch
        %5814 = sbr.rel (%p5812) target = $region52
      $region51: #{tpu_custom_call.1} parent=5 // pred_region
        %s5815 = ssub.s32 %s15, 2
        // Predicated region
        $region53: #{tpu_custom_call.1} parent=51 // pred_check
          %p5816 = pneg %p154
        $region54: #{tpu_custom_call.1} parent=51 // pred_check_branch
          %5818 = sbr.rel (%p5816) target = $region56
        $region55: #{tpu_custom_call.1} parent=51 // pred_region
          %s5819 = sand.u32 %s139, 1
          %s5820 = scalar_lea.sflag [#allocation4], %s5819
          %s5821 = sand.u32 %s139, 1
          %s5822 = smul.addr %s5821, 4
          %s5823 = scalar_lea.vmem [#allocation5], %s5822
          %5824 = dma.done %s5820, 64
        $region56: #{tpu_custom_call.1} parent=51 // pred_fallthru
          _
      $region52: #{tpu_custom_call.1} parent=5 // pred_fallthru
        _
    $region6: #{tpu_custom_call.1} parent=1 // loop_footer
      %s19 = sadd.s32 1, %s15
    $region7: #{tpu_custom_call.1} parent=1 // loop_footer_branch
      %14 = sbr.rel target = $region3
    $region8: #{tpu_custom_call.1} parent=1 // loop_exit
      _
    %5825 = vsyncpa [#allocation3], 1
    %s5826 = scalar_lea.sflag [#allocation3], 1
    %5827 = vsyncpa %s5826, 1
    %5828 = vsyncpa [#allocation4], 1
    %s5829 = scalar_lea.sflag [#allocation4], 1
    %5830 = vsyncpa %s5829, 1

</llo_original>
